<compile_context>
chip_gen: v7x
topology: tpu7x:2x2x1
jax: 0.10.0
libtpu: 0.0.40
codegen_flags: <defaults>
</compile_context>

<pallas_src>
import functools

import jax
import jax.numpy as jnp
from jax.experimental import pallas as pl
from jax.experimental.pallas import tpu as pltpu


# ----------------------------- fused Pallas kernel ----------------------------- #

def _primary_caps_kernel(x_ref, w_ref, b_ref, p_ref, g_ref, gt_ref, o_ref,
                         *, W, K, HoW):
    """Fused depthwise conv ('valid', stride 1) + NCHW flatten + squash.

    x_ref  : (Bb, C, Lpad)   per-channel flattened image, lane = h*W + w
                             (zero-padded tail; padding only feeds lanes that
                              the selection matmul discards)
    w_ref  : (K*K, C, HoW)   weight planes, pre-broadcast along lanes
    b_ref  : (Bb*C, HoWo)    bias, pre-broadcast to the compacted layout
    p_ref  : (HoW, HoWo)     0/1 selection matrix: drops j >= Wo lanes, compacts
    g_ref  : (HoWo, NG)      0/1 capsule-group indicator matrix
    gt_ref : (NG, HoWo)      its transpose (per-capsule coef re-broadcast)
    o_ref  : (Bb*C, HoWo)    squashed capsules, PyTorch NCHW .view() flat order
    """
    eps = 1e-20
    Bb, C, _ = x_ref.shape

    x = x_ref[...]                                    # (Bb, C, Lpad) — a few vregs

    # ---- depthwise conv ---------------------------------------------------
    # acc[b, c, i*W + j] = sum_t x[b, c, (i+ky)*W + (j+kx)] * w[c, ky, kx]
    # One static lane slice per tap + one plain weight-plane load + one
    # full-width VPU FMA; the leading batch-dim broadcast is free vreg reuse.
    acc = x[:, :, 0:HoW] * w_ref[0]
    for t in range(1, K * K):
        ky, kx = divmod(t, K)
        off = ky * W + kx
        acc = acc + x[:, :, off:off + HoW] * w_ref[t]

    acc2 = acc.reshape(Bb * C, HoW)                   # leading-dim merge (tile-aligned)

    # ---- compact junk lanes + bias (MXU 0/1 selection matmul) --------------
    conv = jnp.dot(acc2, p_ref[...],
                   preferred_element_type=jnp.float32) + b_ref[...]    # (rows, HoWo)

    # ---- squash -------------------------------------------------------------
    # Per-capsule sum-of-squares and per-capsule coef lane re-broadcast as tiny
    # 0/1 indicator matmuls on the otherwise idle MXU (no lane slice/concat).
    ssq = jnp.dot(conv * conv, g_ref[...],
                  preferred_element_type=jnp.float32)                  # (rows, NG)
    norm = jnp.sqrt(ssq)
    # exp(norm) >= 1, so the reference's "+eps" inside the reciprocal is a
    # no-op in f32 and is dropped here.
    coef = (1.0 - 1.0 / jnp.exp(norm)) / (norm + eps)                  # (rows, NG)
    o_ref[...] = conv * jnp.dot(coef, gt_ref[...],
                                preferred_element_type=jnp.float32)


# --------------------------------- JAX wrapper --------------------------------- #

def primary_caps_forward(x_nchw, weight_oikk, bias_c, num_capsules, dim_capsules):
    """Equivalent of PrimaryCapsLayer.forward (stride=1, padding='valid').

    x_nchw      : (B, C, H, W)  float32   -- PyTorch NCHW input
    weight_oikk : (C, 1, K, K)  float32   -- depthwise Conv2d weight (groups=C)
    bias_c      : (C,)          float32
    returns     : (B, num_capsules, dim_capsules) float32
    """
    B, C, H, W = x_nchw.shape
    K = weight_oikk.shape[-1]
    Ho, Wo = H - K + 1, W - K + 1
    D = dim_capsules
    HoW, HoWo = Ho * W, Ho * Wo
    NG = HoWo // D                                   # capsules per channel row
    assert C * HoWo == num_capsules * dim_capsules
    assert HoWo % D == 0, "dim_capsules must divide Ho*Wo for the fused epilogue"
    # TODO(synk): support capsules spanning several channels (e.g. Ho*Wo == 1)
    # with a cross-channel (sublane) reduction epilogue.

    # ---- generation-aware batch blocking ------------------------------------
    # One grid step for small batches: per-step overhead dominates on 1-TC chips
    # (v5e/v6e) and at B=2 the per-core work is too small for v7x core-splitting
    # to pay.  Block rows only for large batches; VMEM is never the limiter here.
    S = B * C
    B_blk = B
    if S > 256 and C % 8 == 0:
        per = max(256 // C, 1)
        while per > 1 and B % per:
            per -= 1
        B_blk = per
    rows = B_blk * C
    grid = (B // B_blk,)

    # ---- layout prep in plain JAX (parameter-sized, traced once) ------------
    HW = H * W
    need = (K - 1) * (W + 1) + HoW                   # largest tap offset + window
    Lpad = ((max(HW, need) + 127) // 128) * 128
    x_pad = jnp.pad(x_nchw.reshape(B, C, HW), ((0, 0), (0, 0), (0, Lpad - HW)))

    w_ck = weight_oikk.reshape(C, K * K)             # tap index t = ky*K + kx
    w_planes = jnp.broadcast_to(jnp.transpose(w_ck)[:, :, None], (K * K, C, HoW))
    bias_rows = jnp.broadcast_to(jnp.tile(bias_c, (B_blk,))[:, None], (rows, HoWo))

    # 0/1 indicator matrices (exact in f32).
    lane = jnp.arange(HoW)
    ii, jj = lane // W, lane % W
    flat = ii * Wo + jj                              # compacted flat index
    valid = jj < Wo
    p_mat = (valid[:, None] &
             (flat[:, None] == jnp.arange(HoWo)[None, :])).astype(jnp.float32)
    g_mat = (jnp.arange(HoWo)[:, None] // D ==
             jnp.arange(NG)[None, :]).astype(jnp.float32)
    gt_mat = jnp.transpose(g_mat)

    kernel = functools.partial(_primary_caps_kernel, W=W, K=K, HoW=HoW)

    out = pl.pallas_call(
        kernel,
        out_shape=jax.ShapeDtypeStruct((S, HoWo), jnp.float32),
        grid=grid,
        in_specs=[
            pl.BlockSpec((B_blk, C, Lpad), lambda i: (i, 0, 0)),
            pl.BlockSpec((K * K, C, HoW), lambda i: (0, 0, 0)),
            pl.BlockSpec((rows, HoWo), lambda i: (0, 0)),
            pl.BlockSpec((HoW, HoWo), lambda i: (0, 0)),
            pl.BlockSpec((HoWo, NG), lambda i: (0, 0)),
            pl.BlockSpec((NG, HoWo), lambda i: (0, 0)),
        ],
        out_specs=pl.BlockSpec((rows, HoWo), lambda i: (i, 0)),
        compiler_params=pltpu.CompilerParams(
            dimension_semantics=("arbitrary",) if grid[0] == 1 else ("parallel",)),
    )(x_pad, w_planes, bias_rows, p_mat, g_mat, gt_mat)

    # (B*C, HoWo) row-major == PyTorch's NCHW .view order -> metadata-only reshape.
    return out.reshape(B, num_capsules, dim_capsules)


# ---------------------------------- reference ---------------------------------- #

def _reference(x_nchw, weight_oikk, bias_c, num_capsules, dim_capsules, eps=1e-20):
    B, C, H, W = x_nchw.shape
    conv = jax.lax.conv_general_dilated(
        x_nchw, weight_oikk, window_strides=(1, 1), padding="VALID",
        dimension_numbers=("NCHW", "OIHW", "NCHW"), feature_group_count=C,
    ) + bias_c.reshape(1, C, 1, 1)
    caps = conv.reshape(B, num_capsules, dim_capsules)
    n = jnp.linalg.norm(caps, axis=-1, keepdims=True)
    return (1.0 - 1.0 / (jnp.exp(n) + eps)) * (caps / (n + eps))


# ------------------------------------- main ------------------------------------ #

if __name__ == "__main__":
    # Module hyperparameters (small, consistent with PrimaryCapsLayer).
    B, C, H, W = 2, 8, 16, 16
    K = 9                                # kernel_size, stride=1, 'valid' -> Ho=Wo=8
    num_capsules, dim_capsules = 64, 8   # C*Ho*Wo = 8*8*8 = 512 = 64*8

    key = jax.random.PRNGKey(0)
    kx, kw, kb = jax.random.split(key, 3)
    x = jax.random.normal(kx, (B, C, H, W), dtype=jnp.float32)
    weight = 0.1 * jax.random.normal(kw, (C, 1, K, K), dtype=jnp.float32)
    bias = 0.1 * jax.random.normal(kb, (C,), dtype=jnp.float32)

    out = primary_caps_forward(x, weight, bias, num_capsules, dim_capsules)
    out = jax.block_until_ready(out)

    ref = _reference(x, weight, bias, num_capsules, dim_capsules)
    assert out.shape == (B, num_capsules, dim_capsules)
    assert jnp.allclose(out, ref, atol=1e-5, rtol=1e-5), "mismatch vs reference"

    print("KERNEL_OK")
</pallas_src>

<mosaic_0001>
module attributes {stable_mosaic.version = 11 : i64} {
  func.func @_primary_caps_kernel(%arg0: i32, %arg1: memref<2x8x384xf32, #tpu.memory_space<vmem>>, %arg2: memref<81x8x128xf32, #tpu.memory_space<vmem>>, %arg3: memref<16x64xf32, #tpu.memory_space<vmem>>, %arg4: memref<128x64xf32, #tpu.memory_space<vmem>>, %arg5: memref<64x8xf32, #tpu.memory_space<vmem>>, %arg6: memref<8x64xf32, #tpu.memory_space<vmem>>, %arg7: memref<16x64xf32, #tpu.memory_space<vmem>>) attributes {dimension_semantics = [#tpu.dimension_semantics<arbitrary>], iteration_bounds = array<i64: 1>, scalar_prefetch = 0 : i64, scratch_operands = 0 : i64, tpu.core_type = #tpu.core_type<tc>, window_params = [{transform_indices = @transform_0, window_bounds = array<i64: 2, 8, 384>}, {pipeline_mode = #tpu.pipeline_mode<synchronous>, transform_indices = @transform_1, window_bounds = array<i64: 81, 8, 128>}, {pipeline_mode = #tpu.pipeline_mode<synchronous>, transform_indices = @transform_2, window_bounds = array<i64: 16, 64>}, {pipeline_mode = #tpu.pipeline_mode<synchronous>, transform_indices = @transform_3, window_bounds = array<i64: 128, 64>}, {pipeline_mode = #tpu.pipeline_mode<synchronous>, transform_indices = @transform_4, window_bounds = array<i64: 64, 8>}, {pipeline_mode = #tpu.pipeline_mode<synchronous>, transform_indices = @transform_5, window_bounds = array<i64: 8, 64>}, {transform_indices = @transform_6, window_bounds = array<i64: 16, 64>}]} {
    %c0 = arith.constant 0 : index
    %c0_0 = arith.constant 0 : index
    %c0_1 = arith.constant 0 : index
    %0 = vector.load %arg1[%c0, %c0_0, %c0_1] : memref<2x8x384xf32, #tpu.memory_space<vmem>>, vector<2x8x384xf32>
    %1 = vector.extract_strided_slice %0 {offsets = [0, 0, 0], sizes = [2, 8, 128], strides = [1, 1, 1]} : vector<2x8x384xf32> to vector<2x8x128xf32>
    %c0_2 = arith.constant 0 : index
    %c0_3 = arith.constant 0 : index
    %c0_4 = arith.constant 0 : index
    %2 = vector.load %arg2[%c0_2, %c0_3, %c0_4] : memref<81x8x128xf32, #tpu.memory_space<vmem>>, vector<1x8x128xf32>
    %3 = vector.shape_cast %2 : vector<1x8x128xf32> to vector<8x128xf32>
    %4 = vector.shape_cast %3 : vector<8x128xf32> to vector<1x8x128xf32>
    %5 = vector.broadcast %4 : vector<1x8x128xf32> to vector<2x8x128xf32>
    %6 = arith.mulf %1, %5 : vector<2x8x128xf32>
    %7 = vector.extract_strided_slice %0 {offsets = [0, 0, 1], sizes = [2, 8, 128], strides = [1, 1, 1]} : vector<2x8x384xf32> to vector<2x8x128xf32>
    %c1 = arith.constant 1 : index
    %c0_5 = arith.constant 0 : index
    %c0_6 = arith.constant 0 : index
    %8 = vector.load %arg2[%c1, %c0_5, %c0_6] : memref<81x8x128xf32, #tpu.memory_space<vmem>>, vector<1x8x128xf32>
    %9 = vector.shape_cast %8 : vector<1x8x128xf32> to vector<8x128xf32>
    %10 = vector.shape_cast %9 : vector<8x128xf32> to vector<1x8x128xf32>
    %11 = vector.broadcast %10 : vector<1x8x128xf32> to vector<2x8x128xf32>
    %12 = arith.mulf %7, %11 : vector<2x8x128xf32>
    %13 = arith.addf %6, %12 : vector<2x8x128xf32>
    %14 = vector.extract_strided_slice %0 {offsets = [0, 0, 2], sizes = [2, 8, 128], strides = [1, 1, 1]} : vector<2x8x384xf32> to vector<2x8x128xf32>
    %c2 = arith.constant 2 : index
    %c0_7 = arith.constant 0 : index
    %c0_8 = arith.constant 0 : index
    %15 = vector.load %arg2[%c2, %c0_7, %c0_8] : memref<81x8x128xf32, #tpu.memory_space<vmem>>, vector<1x8x128xf32>
    %16 = vector.shape_cast %15 : vector<1x8x128xf32> to vector<8x128xf32>
    %17 = vector.shape_cast %16 : vector<8x128xf32> to vector<1x8x128xf32>
    %18 = vector.broadcast %17 : vector<1x8x128xf32> to vector<2x8x128xf32>
    %19 = arith.mulf %14, %18 : vector<2x8x128xf32>
    %20 = arith.addf %13, %19 : vector<2x8x128xf32>
    %21 = vector.extract_strided_slice %0 {offsets = [0, 0, 3], sizes = [2, 8, 128], strides = [1, 1, 1]} : vector<2x8x384xf32> to vector<2x8x128xf32>
    %c3 = arith.constant 3 : index
    %c0_9 = arith.constant 0 : index
    %c0_10 = arith.constant 0 : index
    %22 = vector.load %arg2[%c3, %c0_9, %c0_10] : memref<81x8x128xf32, #tpu.memory_space<vmem>>, vector<1x8x128xf32>
    %23 = vector.shape_cast %22 : vector<1x8x128xf32> to vector<8x128xf32>
    %24 = vector.shape_cast %23 : vector<8x128xf32> to vector<1x8x128xf32>
    %25 = vector.broadcast %24 : vector<1x8x128xf32> to vector<2x8x128xf32>
    %26 = arith.mulf %21, %25 : vector<2x8x128xf32>
    %27 = arith.addf %20, %26 : vector<2x8x128xf32>
    %28 = vector.extract_strided_slice %0 {offsets = [0, 0, 4], sizes = [2, 8, 128], strides = [1, 1, 1]} : vector<2x8x384xf32> to vector<2x8x128xf32>
    %c4 = arith.constant 4 : index
    %c0_11 = arith.constant 0 : index
    %c0_12 = arith.constant 0 : index
    %29 = vector.load %arg2[%c4, %c0_11, %c0_12] : memref<81x8x128xf32, #tpu.memory_space<vmem>>, vector<1x8x128xf32>
    %30 = vector.shape_cast %29 : vector<1x8x128xf32> to vector<8x128xf32>
    %31 = vector.shape_cast %30 : vector<8x128xf32> to vector<1x8x128xf32>
    %32 = vector.broadcast %31 : vector<1x8x128xf32> to vector<2x8x128xf32>
    %33 = arith.mulf %28, %32 : vector<2x8x128xf32>
    %34 = arith.addf %27, %33 : vector<2x8x128xf32>
    %35 = vector.extract_strided_slice %0 {offsets = [0, 0, 5], sizes = [2, 8, 128], strides = [1, 1, 1]} : vector<2x8x384xf32> to vector<2x8x128xf32>
    %c5 = arith.constant 5 : index
    %c0_13 = arith.constant 0 : index
    %c0_14 = arith.constant 0 : index
    %36 = vector.load %arg2[%c5, %c0_13, %c0_14] : memref<81x8x128xf32, #tpu.memory_space<vmem>>, vector<1x8x128xf32>
    %37 = vector.shape_cast %36 : vector<1x8x128xf32> to vector<8x128xf32>
    %38 = vector.shape_cast %37 : vector<8x128xf32> to vector<1x8x128xf32>
    %39 = vector.broadcast %38 : vector<1x8x128xf32> to vector<2x8x128xf32>
    %40 = arith.mulf %35, %39 : vector<2x8x128xf32>
    %41 = arith.addf %34, %40 : vector<2x8x128xf32>
    %42 = vector.extract_strided_slice %0 {offsets = [0, 0, 6], sizes = [2, 8, 128], strides = [1, 1, 1]} : vector<2x8x384xf32> to vector<2x8x128xf32>
    %c6 = arith.constant 6 : index
    %c0_15 = arith.constant 0 : index
    %c0_16 = arith.constant 0 : index
    %43 = vector.load %arg2[%c6, %c0_15, %c0_16] : memref<81x8x128xf32, #tpu.memory_space<vmem>>, vector<1x8x128xf32>
    %44 = vector.shape_cast %43 : vector<1x8x128xf32> to vector<8x128xf32>
    %45 = vector.shape_cast %44 : vector<8x128xf32> to vector<1x8x128xf32>
    %46 = vector.broadcast %45 : vector<1x8x128xf32> to vector<2x8x128xf32>
    %47 = arith.mulf %42, %46 : vector<2x8x128xf32>
    %48 = arith.addf %41, %47 : vector<2x8x128xf32>
    %49 = vector.extract_strided_slice %0 {offsets = [0, 0, 7], sizes = [2, 8, 128], strides = [1, 1, 1]} : vector<2x8x384xf32> to vector<2x8x128xf32>
    %c7 = arith.constant 7 : index
    %c0_17 = arith.constant 0 : index
    %c0_18 = arith.constant 0 : index
    %50 = vector.load %arg2[%c7, %c0_17, %c0_18] : memref<81x8x128xf32, #tpu.memory_space<vmem>>, vector<1x8x128xf32>
    %51 = vector.shape_cast %50 : vector<1x8x128xf32> to vector<8x128xf32>
    %52 = vector.shape_cast %51 : vector<8x128xf32> to vector<1x8x128xf32>
    %53 = vector.broadcast %52 : vector<1x8x128xf32> to vector<2x8x128xf32>
    %54 = arith.mulf %49, %53 : vector<2x8x128xf32>
    %55 = arith.addf %48, %54 : vector<2x8x128xf32>
    %56 = vector.extract_strided_slice %0 {offsets = [0, 0, 8], sizes = [2, 8, 128], strides = [1, 1, 1]} : vector<2x8x384xf32> to vector<2x8x128xf32>
    %c8 = arith.constant 8 : index
    %c0_19 = arith.constant 0 : index
    %c0_20 = arith.constant 0 : index
    %57 = vector.load %arg2[%c8, %c0_19, %c0_20] : memref<81x8x128xf32, #tpu.memory_space<vmem>>, vector<1x8x128xf32>
    %58 = vector.shape_cast %57 : vector<1x8x128xf32> to vector<8x128xf32>
    %59 = vector.shape_cast %58 : vector<8x128xf32> to vector<1x8x128xf32>
    %60 = vector.broadcast %59 : vector<1x8x128xf32> to vector<2x8x128xf32>
    %61 = arith.mulf %56, %60 : vector<2x8x128xf32>
    %62 = arith.addf %55, %61 : vector<2x8x128xf32>
    %63 = vector.extract_strided_slice %0 {offsets = [0, 0, 16], sizes = [2, 8, 128], strides = [1, 1, 1]} : vector<2x8x384xf32> to vector<2x8x128xf32>
    %c9 = arith.constant 9 : index
    %c0_21 = arith.constant 0 : index
    %c0_22 = arith.constant 0 : index
    %64 = vector.load %arg2[%c9, %c0_21, %c0_22] : memref<81x8x128xf32, #tpu.memory_space<vmem>>, vector<1x8x128xf32>
    %65 = vector.shape_cast %64 : vector<1x8x128xf32> to vector<8x128xf32>
    %66 = vector.shape_cast %65 : vector<8x128xf32> to vector<1x8x128xf32>
    %67 = vector.broadcast %66 : vector<1x8x128xf32> to vector<2x8x128xf32>
    %68 = arith.mulf %63, %67 : vector<2x8x128xf32>
    %69 = arith.addf %62, %68 : vector<2x8x128xf32>
    %70 = vector.extract_strided_slice %0 {offsets = [0, 0, 17], sizes = [2, 8, 128], strides = [1, 1, 1]} : vector<2x8x384xf32> to vector<2x8x128xf32>
    %c10 = arith.constant 10 : index
    %c0_23 = arith.constant 0 : index
    %c0_24 = arith.constant 0 : index
    %71 = vector.load %arg2[%c10, %c0_23, %c0_24] : memref<81x8x128xf32, #tpu.memory_space<vmem>>, vector<1x8x128xf32>
    %72 = vector.shape_cast %71 : vector<1x8x128xf32> to vector<8x128xf32>
    %73 = vector.shape_cast %72 : vector<8x128xf32> to vector<1x8x128xf32>
    %74 = vector.broadcast %73 : vector<1x8x128xf32> to vector<2x8x128xf32>
    %75 = arith.mulf %70, %74 : vector<2x8x128xf32>
    %76 = arith.addf %69, %75 : vector<2x8x128xf32>
    %77 = vector.extract_strided_slice %0 {offsets = [0, 0, 18], sizes = [2, 8, 128], strides = [1, 1, 1]} : vector<2x8x384xf32> to vector<2x8x128xf32>
    %c11 = arith.constant 11 : index
    %c0_25 = arith.constant 0 : index
    %c0_26 = arith.constant 0 : index
    %78 = vector.load %arg2[%c11, %c0_25, %c0_26] : memref<81x8x128xf32, #tpu.memory_space<vmem>>, vector<1x8x128xf32>
    %79 = vector.shape_cast %78 : vector<1x8x128xf32> to vector<8x128xf32>
    %80 = vector.shape_cast %79 : vector<8x128xf32> to vector<1x8x128xf32>
    %81 = vector.broadcast %80 : vector<1x8x128xf32> to vector<2x8x128xf32>
    %82 = arith.mulf %77, %81 : vector<2x8x128xf32>
    %83 = arith.addf %76, %82 : vector<2x8x128xf32>
    %84 = vector.extract_strided_slice %0 {offsets = [0, 0, 19], sizes = [2, 8, 128], strides = [1, 1, 1]} : vector<2x8x384xf32> to vector<2x8x128xf32>
    %c12 = arith.constant 12 : index
    %c0_27 = arith.constant 0 : index
    %c0_28 = arith.constant 0 : index
    %85 = vector.load %arg2[%c12, %c0_27, %c0_28] : memref<81x8x128xf32, #tpu.memory_space<vmem>>, vector<1x8x128xf32>
    %86 = vector.shape_cast %85 : vector<1x8x128xf32> to vector<8x128xf32>
    %87 = vector.shape_cast %86 : vector<8x128xf32> to vector<1x8x128xf32>
    %88 = vector.broadcast %87 : vector<1x8x128xf32> to vector<2x8x128xf32>
    %89 = arith.mulf %84, %88 : vector<2x8x128xf32>
    %90 = arith.addf %83, %89 : vector<2x8x128xf32>
    %91 = vector.extract_strided_slice %0 {offsets = [0, 0, 20], sizes = [2, 8, 128], strides = [1, 1, 1]} : vector<2x8x384xf32> to vector<2x8x128xf32>
    %c13 = arith.constant 13 : index
    %c0_29 = arith.constant 0 : index
    %c0_30 = arith.constant 0 : index
    %92 = vector.load %arg2[%c13, %c0_29, %c0_30] : memref<81x8x128xf32, #tpu.memory_space<vmem>>, vector<1x8x128xf32>
    %93 = vector.shape_cast %92 : vector<1x8x128xf32> to vector<8x128xf32>
    %94 = vector.shape_cast %93 : vector<8x128xf32> to vector<1x8x128xf32>
    %95 = vector.broadcast %94 : vector<1x8x128xf32> to vector<2x8x128xf32>
    %96 = arith.mulf %91, %95 : vector<2x8x128xf32>
    %97 = arith.addf %90, %96 : vector<2x8x128xf32>
    %98 = vector.extract_strided_slice %0 {offsets = [0, 0, 21], sizes = [2, 8, 128], strides = [1, 1, 1]} : vector<2x8x384xf32> to vector<2x8x128xf32>
    %c14 = arith.constant 14 : index
    %c0_31 = arith.constant 0 : index
    %c0_32 = arith.constant 0 : index
    %99 = vector.load %arg2[%c14, %c0_31, %c0_32] : memref<81x8x128xf32, #tpu.memory_space<vmem>>, vector<1x8x128xf32>
    %100 = vector.shape_cast %99 : vector<1x8x128xf32> to vector<8x128xf32>
    %101 = vector.shape_cast %100 : vector<8x128xf32> to vector<1x8x128xf32>
    %102 = vector.broadcast %101 : vector<1x8x128xf32> to vector<2x8x128xf32>
    %103 = arith.mulf %98, %102 : vector<2x8x128xf32>
    %104 = arith.addf %97, %103 : vector<2x8x128xf32>
    %105 = vector.extract_strided_slice %0 {offsets = [0, 0, 22], sizes = [2, 8, 128], strides = [1, 1, 1]} : vector<2x8x384xf32> to vector<2x8x128xf32>
    %c15 = arith.constant 15 : index
    %c0_33 = arith.constant 0 : index
    %c0_34 = arith.constant 0 : index
    %106 = vector.load %arg2[%c15, %c0_33, %c0_34] : memref<81x8x128xf32, #tpu.memory_space<vmem>>, vector<1x8x128xf32>
    %107 = vector.shape_cast %106 : vector<1x8x128xf32> to vector<8x128xf32>
    %108 = vector.shape_cast %107 : vector<8x128xf32> to vector<1x8x128xf32>
    %109 = vector.broadcast %108 : vector<1x8x128xf32> to vector<2x8x128xf32>
    %110 = arith.mulf %105, %109 : vector<2x8x128xf32>
    %111 = arith.addf %104, %110 : vector<2x8x128xf32>
    %112 = vector.extract_strided_slice %0 {offsets = [0, 0, 23], sizes = [2, 8, 128], strides = [1, 1, 1]} : vector<2x8x384xf32> to vector<2x8x128xf32>
    %c16 = arith.constant 16 : index
    %c0_35 = arith.constant 0 : index
    %c0_36 = arith.constant 0 : index
    %113 = vector.load %arg2[%c16, %c0_35, %c0_36] : memref<81x8x128xf32, #tpu.memory_space<vmem>>, vector<1x8x128xf32>
    %114 = vector.shape_cast %113 : vector<1x8x128xf32> to vector<8x128xf32>
    %115 = vector.shape_cast %114 : vector<8x128xf32> to vector<1x8x128xf32>
    %116 = vector.broadcast %115 : vector<1x8x128xf32> to vector<2x8x128xf32>
    %117 = arith.mulf %112, %116 : vector<2x8x128xf32>
    %118 = arith.addf %111, %117 : vector<2x8x128xf32>
    %119 = vector.extract_strided_slice %0 {offsets = [0, 0, 24], sizes = [2, 8, 128], strides = [1, 1, 1]} : vector<2x8x384xf32> to vector<2x8x128xf32>
    %c17 = arith.constant 17 : index
    %c0_37 = arith.constant 0 : index
    %c0_38 = arith.constant 0 : index
    %120 = vector.load %arg2[%c17, %c0_37, %c0_38] : memref<81x8x128xf32, #tpu.memory_space<vmem>>, vector<1x8x128xf32>
    %121 = vector.shape_cast %120 : vector<1x8x128xf32> to vector<8x128xf32>
    %122 = vector.shape_cast %121 : vector<8x128xf32> to vector<1x8x128xf32>
    %123 = vector.broadcast %122 : vector<1x8x128xf32> to vector<2x8x128xf32>
    %124 = arith.mulf %119, %123 : vector<2x8x128xf32>
    %125 = arith.addf %118, %124 : vector<2x8x128xf32>
    %126 = vector.extract_strided_slice %0 {offsets = [0, 0, 32], sizes = [2, 8, 128], strides = [1, 1, 1]} : vector<2x8x384xf32> to vector<2x8x128xf32>
    %c18 = arith.constant 18 : index
    %c0_39 = arith.constant 0 : index
    %c0_40 = arith.constant 0 : index
    %127 = vector.load %arg2[%c18, %c0_39, %c0_40] : memref<81x8x128xf32, #tpu.memory_space<vmem>>, vector<1x8x128xf32>
    %128 = vector.shape_cast %127 : vector<1x8x128xf32> to vector<8x128xf32>
    %129 = vector.shape_cast %128 : vector<8x128xf32> to vector<1x8x128xf32>
    %130 = vector.broadcast %129 : vector<1x8x128xf32> to vector<2x8x128xf32>
    %131 = arith.mulf %126, %130 : vector<2x8x128xf32>
    %132 = arith.addf %125, %131 : vector<2x8x128xf32>
    %133 = vector.extract_strided_slice %0 {offsets = [0, 0, 33], sizes = [2, 8, 128], strides = [1, 1, 1]} : vector<2x8x384xf32> to vector<2x8x128xf32>
    %c19 = arith.constant 19 : index
    %c0_41 = arith.constant 0 : index
    %c0_42 = arith.constant 0 : index
    %134 = vector.load %arg2[%c19, %c0_41, %c0_42] : memref<81x8x128xf32, #tpu.memory_space<vmem>>, vector<1x8x128xf32>
    %135 = vector.shape_cast %134 : vector<1x8x128xf32> to vector<8x128xf32>
    %136 = vector.shape_cast %135 : vector<8x128xf32> to vector<1x8x128xf32>
    %137 = vector.broadcast %136 : vector<1x8x128xf32> to vector<2x8x128xf32>
    %138 = arith.mulf %133, %137 : vector<2x8x128xf32>
    %139 = arith.addf %132, %138 : vector<2x8x128xf32>
    %140 = vector.extract_strided_slice %0 {offsets = [0, 0, 34], sizes = [2, 8, 128], strides = [1, 1, 1]} : vector<2x8x384xf32> to vector<2x8x128xf32>
    %c20 = arith.constant 20 : index
    %c0_43 = arith.constant 0 : index
    %c0_44 = arith.constant 0 : index
    %141 = vector.load %arg2[%c20, %c0_43, %c0_44] : memref<81x8x128xf32, #tpu.memory_space<vmem>>, vector<1x8x128xf32>
    %142 = vector.shape_cast %141 : vector<1x8x128xf32> to vector<8x128xf32>
    %143 = vector.shape_cast %142 : vector<8x128xf32> to vector<1x8x128xf32>
    %144 = vector.broadcast %143 : vector<1x8x128xf32> to vector<2x8x128xf32>
    %145 = arith.mulf %140, %144 : vector<2x8x128xf32>
    %146 = arith.addf %139, %145 : vector<2x8x128xf32>
    %147 = vector.extract_strided_slice %0 {offsets = [0, 0, 35], sizes = [2, 8, 128], strides = [1, 1, 1]} : vector<2x8x384xf32> to vector<2x8x128xf32>
    %c21 = arith.constant 21 : index
    %c0_45 = arith.constant 0 : index
    %c0_46 = arith.constant 0 : index
    %148 = vector.load %arg2[%c21, %c0_45, %c0_46] : memref<81x8x128xf32, #tpu.memory_space<vmem>>, vector<1x8x128xf32>
    %149 = vector.shape_cast %148 : vector<1x8x128xf32> to vector<8x128xf32>
    %150 = vector.shape_cast %149 : vector<8x128xf32> to vector<1x8x128xf32>
    %151 = vector.broadcast %150 : vector<1x8x128xf32> to vector<2x8x128xf32>
    %152 = arith.mulf %147, %151 : vector<2x8x128xf32>
    %153 = arith.addf %146, %152 : vector<2x8x128xf32>
    %154 = vector.extract_strided_slice %0 {offsets = [0, 0, 36], sizes = [2, 8, 128], strides = [1, 1, 1]} : vector<2x8x384xf32> to vector<2x8x128xf32>
    %c22 = arith.constant 22 : index
    %c0_47 = arith.constant 0 : index
    %c0_48 = arith.constant 0 : index
    %155 = vector.load %arg2[%c22, %c0_47, %c0_48] : memref<81x8x128xf32, #tpu.memory_space<vmem>>, vector<1x8x128xf32>
    %156 = vector.shape_cast %155 : vector<1x8x128xf32> to vector<8x128xf32>
    %157 = vector.shape_cast %156 : vector<8x128xf32> to vector<1x8x128xf32>
    %158 = vector.broadcast %157 : vector<1x8x128xf32> to vector<2x8x128xf32>
    %159 = arith.mulf %154, %158 : vector<2x8x128xf32>
    %160 = arith.addf %153, %159 : vector<2x8x128xf32>
    %161 = vector.extract_strided_slice %0 {offsets = [0, 0, 37], sizes = [2, 8, 128], strides = [1, 1, 1]} : vector<2x8x384xf32> to vector<2x8x128xf32>
    %c23 = arith.constant 23 : index
    %c0_49 = arith.constant 0 : index
    %c0_50 = arith.constant 0 : index
    %162 = vector.load %arg2[%c23, %c0_49, %c0_50] : memref<81x8x128xf32, #tpu.memory_space<vmem>>, vector<1x8x128xf32>
    %163 = vector.shape_cast %162 : vector<1x8x128xf32> to vector<8x128xf32>
    %164 = vector.shape_cast %163 : vector<8x128xf32> to vector<1x8x128xf32>
    %165 = vector.broadcast %164 : vector<1x8x128xf32> to vector<2x8x128xf32>
    %166 = arith.mulf %161, %165 : vector<2x8x128xf32>
    %167 = arith.addf %160, %166 : vector<2x8x128xf32>
    %168 = vector.extract_strided_slice %0 {offsets = [0, 0, 38], sizes = [2, 8, 128], strides = [1, 1, 1]} : vector<2x8x384xf32> to vector<2x8x128xf32>
    %c24 = arith.constant 24 : index
    %c0_51 = arith.constant 0 : index
    %c0_52 = arith.constant 0 : index
    %169 = vector.load %arg2[%c24, %c0_51, %c0_52] : memref<81x8x128xf32, #tpu.memory_space<vmem>>, vector<1x8x128xf32>
    %170 = vector.shape_cast %169 : vector<1x8x128xf32> to vector<8x128xf32>
    %171 = vector.shape_cast %170 : vector<8x128xf32> to vector<1x8x128xf32>
    %172 = vector.broadcast %171 : vector<1x8x128xf32> to vector<2x8x128xf32>
    %173 = arith.mulf %168, %172 : vector<2x8x128xf32>
    %174 = arith.addf %167, %173 : vector<2x8x128xf32>
    %175 = vector.extract_strided_slice %0 {offsets = [0, 0, 39], sizes = [2, 8, 128], strides = [1, 1, 1]} : vector<2x8x384xf32> to vector<2x8x128xf32>
    %c25 = arith.constant 25 : index
    %c0_53 = arith.constant 0 : index
    %c0_54 = arith.constant 0 : index
    %176 = vector.load %arg2[%c25, %c0_53, %c0_54] : memref<81x8x128xf32, #tpu.memory_space<vmem>>, vector<1x8x128xf32>
    %177 = vector.shape_cast %176 : vector<1x8x128xf32> to vector<8x128xf32>
    %178 = vector.shape_cast %177 : vector<8x128xf32> to vector<1x8x128xf32>
    %179 = vector.broadcast %178 : vector<1x8x128xf32> to vector<2x8x128xf32>
    %180 = arith.mulf %175, %179 : vector<2x8x128xf32>
    %181 = arith.addf %174, %180 : vector<2x8x128xf32>
    %182 = vector.extract_strided_slice %0 {offsets = [0, 0, 40], sizes = [2, 8, 128], strides = [1, 1, 1]} : vector<2x8x384xf32> to vector<2x8x128xf32>
    %c26 = arith.constant 26 : index
    %c0_55 = arith.constant 0 : index
    %c0_56 = arith.constant 0 : index
    %183 = vector.load %arg2[%c26, %c0_55, %c0_56] : memref<81x8x128xf32, #tpu.memory_space<vmem>>, vector<1x8x128xf32>
    %184 = vector.shape_cast %183 : vector<1x8x128xf32> to vector<8x128xf32>
    %185 = vector.shape_cast %184 : vector<8x128xf32> to vector<1x8x128xf32>
    %186 = vector.broadcast %185 : vector<1x8x128xf32> to vector<2x8x128xf32>
    %187 = arith.mulf %182, %186 : vector<2x8x128xf32>
    %188 = arith.addf %181, %187 : vector<2x8x128xf32>
    %189 = vector.extract_strided_slice %0 {offsets = [0, 0, 48], sizes = [2, 8, 128], strides = [1, 1, 1]} : vector<2x8x384xf32> to vector<2x8x128xf32>
    %c27 = arith.constant 27 : index
    %c0_57 = arith.constant 0 : index
    %c0_58 = arith.constant 0 : index
    %190 = vector.load %arg2[%c27, %c0_57, %c0_58] : memref<81x8x128xf32, #tpu.memory_space<vmem>>, vector<1x8x128xf32>
    %191 = vector.shape_cast %190 : vector<1x8x128xf32> to vector<8x128xf32>
    %192 = vector.shape_cast %191 : vector<8x128xf32> to vector<1x8x128xf32>
    %193 = vector.broadcast %192 : vector<1x8x128xf32> to vector<2x8x128xf32>
    %194 = arith.mulf %189, %193 : vector<2x8x128xf32>
    %195 = arith.addf %188, %194 : vector<2x8x128xf32>
    %196 = vector.extract_strided_slice %0 {offsets = [0, 0, 49], sizes = [2, 8, 128], strides = [1, 1, 1]} : vector<2x8x384xf32> to vector<2x8x128xf32>
    %c28 = arith.constant 28 : index
    %c0_59 = arith.constant 0 : index
    %c0_60 = arith.constant 0 : index
    %197 = vector.load %arg2[%c28, %c0_59, %c0_60] : memref<81x8x128xf32, #tpu.memory_space<vmem>>, vector<1x8x128xf32>
    %198 = vector.shape_cast %197 : vector<1x8x128xf32> to vector<8x128xf32>
    %199 = vector.shape_cast %198 : vector<8x128xf32> to vector<1x8x128xf32>
    %200 = vector.broadcast %199 : vector<1x8x128xf32> to vector<2x8x128xf32>
    %201 = arith.mulf %196, %200 : vector<2x8x128xf32>
    %202 = arith.addf %195, %201 : vector<2x8x128xf32>
    %203 = vector.extract_strided_slice %0 {offsets = [0, 0, 50], sizes = [2, 8, 128], strides = [1, 1, 1]} : vector<2x8x384xf32> to vector<2x8x128xf32>
    %c29 = arith.constant 29 : index
    %c0_61 = arith.constant 0 : index
    %c0_62 = arith.constant 0 : index
    %204 = vector.load %arg2[%c29, %c0_61, %c0_62] : memref<81x8x128xf32, #tpu.memory_space<vmem>>, vector<1x8x128xf32>
    %205 = vector.shape_cast %204 : vector<1x8x128xf32> to vector<8x128xf32>
    %206 = vector.shape_cast %205 : vector<8x128xf32> to vector<1x8x128xf32>
    %207 = vector.broadcast %206 : vector<1x8x128xf32> to vector<2x8x128xf32>
    %208 = arith.mulf %203, %207 : vector<2x8x128xf32>
    %209 = arith.addf %202, %208 : vector<2x8x128xf32>
    %210 = vector.extract_strided_slice %0 {offsets = [0, 0, 51], sizes = [2, 8, 128], strides = [1, 1, 1]} : vector<2x8x384xf32> to vector<2x8x128xf32>
    %c30 = arith.constant 30 : index
    %c0_63 = arith.constant 0 : index
    %c0_64 = arith.constant 0 : index
    %211 = vector.load %arg2[%c30, %c0_63, %c0_64] : memref<81x8x128xf32, #tpu.memory_space<vmem>>, vector<1x8x128xf32>
    %212 = vector.shape_cast %211 : vector<1x8x128xf32> to vector<8x128xf32>
    %213 = vector.shape_cast %212 : vector<8x128xf32> to vector<1x8x128xf32>
    %214 = vector.broadcast %213 : vector<1x8x128xf32> to vector<2x8x128xf32>
    %215 = arith.mulf %210, %214 : vector<2x8x128xf32>
    %216 = arith.addf %209, %215 : vector<2x8x128xf32>
    %217 = vector.extract_strided_slice %0 {offsets = [0, 0, 52], sizes = [2, 8, 128], strides = [1, 1, 1]} : vector<2x8x384xf32> to vector<2x8x128xf32>
    %c31 = arith.constant 31 : index
    %c0_65 = arith.constant 0 : index
    %c0_66 = arith.constant 0 : index
    %218 = vector.load %arg2[%c31, %c0_65, %c0_66] : memref<81x8x128xf32, #tpu.memory_space<vmem>>, vector<1x8x128xf32>
    %219 = vector.shape_cast %218 : vector<1x8x128xf32> to vector<8x128xf32>
    %220 = vector.shape_cast %219 : vector<8x128xf32> to vector<1x8x128xf32>
    %221 = vector.broadcast %220 : vector<1x8x128xf32> to vector<2x8x128xf32>
    %222 = arith.mulf %217, %221 : vector<2x8x128xf32>
    %223 = arith.addf %216, %222 : vector<2x8x128xf32>
    %224 = vector.extract_strided_slice %0 {offsets = [0, 0, 53], sizes = [2, 8, 128], strides = [1, 1, 1]} : vector<2x8x384xf32> to vector<2x8x128xf32>
    %c32 = arith.constant 32 : index
    %c0_67 = arith.constant 0 : index
    %c0_68 = arith.constant 0 : index
    %225 = vector.load %arg2[%c32, %c0_67, %c0_68] : memref<81x8x128xf32, #tpu.memory_space<vmem>>, vector<1x8x128xf32>
    %226 = vector.shape_cast %225 : vector<1x8x128xf32> to vector<8x128xf32>
    %227 = vector.shape_cast %226 : vector<8x128xf32> to vector<1x8x128xf32>
    %228 = vector.broadcast %227 : vector<1x8x128xf32> to vector<2x8x128xf32>
    %229 = arith.mulf %224, %228 : vector<2x8x128xf32>
    %230 = arith.addf %223, %229 : vector<2x8x128xf32>
    %231 = vector.extract_strided_slice %0 {offsets = [0, 0, 54], sizes = [2, 8, 128], strides = [1, 1, 1]} : vector<2x8x384xf32> to vector<2x8x128xf32>
    %c33 = arith.constant 33 : index
    %c0_69 = arith.constant 0 : index
    %c0_70 = arith.constant 0 : index
    %232 = vector.load %arg2[%c33, %c0_69, %c0_70] : memref<81x8x128xf32, #tpu.memory_space<vmem>>, vector<1x8x128xf32>
    %233 = vector.shape_cast %232 : vector<1x8x128xf32> to vector<8x128xf32>
    %234 = vector.shape_cast %233 : vector<8x128xf32> to vector<1x8x128xf32>
    %235 = vector.broadcast %234 : vector<1x8x128xf32> to vector<2x8x128xf32>
    %236 = arith.mulf %231, %235 : vector<2x8x128xf32>
    %237 = arith.addf %230, %236 : vector<2x8x128xf32>
    %238 = vector.extract_strided_slice %0 {offsets = [0, 0, 55], sizes = [2, 8, 128], strides = [1, 1, 1]} : vector<2x8x384xf32> to vector<2x8x128xf32>
    %c34 = arith.constant 34 : index
    %c0_71 = arith.constant 0 : index
    %c0_72 = arith.constant 0 : index
    %239 = vector.load %arg2[%c34, %c0_71, %c0_72] : memref<81x8x128xf32, #tpu.memory_space<vmem>>, vector<1x8x128xf32>
    %240 = vector.shape_cast %239 : vector<1x8x128xf32> to vector<8x128xf32>
    %241 = vector.shape_cast %240 : vector<8x128xf32> to vector<1x8x128xf32>
    %242 = vector.broadcast %241 : vector<1x8x128xf32> to vector<2x8x128xf32>
    %243 = arith.mulf %238, %242 : vector<2x8x128xf32>
    %244 = arith.addf %237, %243 : vector<2x8x128xf32>
    %245 = vector.extract_strided_slice %0 {offsets = [0, 0, 56], sizes = [2, 8, 128], strides = [1, 1, 1]} : vector<2x8x384xf32> to vector<2x8x128xf32>
    %c35 = arith.constant 35 : index
    %c0_73 = arith.constant 0 : index
    %c0_74 = arith.constant 0 : index
    %246 = vector.load %arg2[%c35, %c0_73, %c0_74] : memref<81x8x128xf32, #tpu.memory_space<vmem>>, vector<1x8x128xf32>
    %247 = vector.shape_cast %246 : vector<1x8x128xf32> to vector<8x128xf32>
    %248 = vector.shape_cast %247 : vector<8x128xf32> to vector<1x8x128xf32>
    %249 = vector.broadcast %248 : vector<1x8x128xf32> to vector<2x8x128xf32>
    %250 = arith.mulf %245, %249 : vector<2x8x128xf32>
    %251 = arith.addf %244, %250 : vector<2x8x128xf32>
    %252 = vector.extract_strided_slice %0 {offsets = [0, 0, 64], sizes = [2, 8, 128], strides = [1, 1, 1]} : vector<2x8x384xf32> to vector<2x8x128xf32>
    %c36 = arith.constant 36 : index
    %c0_75 = arith.constant 0 : index
    %c0_76 = arith.constant 0 : index
    %253 = vector.load %arg2[%c36, %c0_75, %c0_76] : memref<81x8x128xf32, #tpu.memory_space<vmem>>, vector<1x8x128xf32>
    %254 = vector.shape_cast %253 : vector<1x8x128xf32> to vector<8x128xf32>
    %255 = vector.shape_cast %254 : vector<8x128xf32> to vector<1x8x128xf32>
    %256 = vector.broadcast %255 : vector<1x8x128xf32> to vector<2x8x128xf32>
    %257 = arith.mulf %252, %256 : vector<2x8x128xf32>
    %258 = arith.addf %251, %257 : vector<2x8x128xf32>
    %259 = vector.extract_strided_slice %0 {offsets = [0, 0, 65], sizes = [2, 8, 128], strides = [1, 1, 1]} : vector<2x8x384xf32> to vector<2x8x128xf32>
    %c37 = arith.constant 37 : index
    %c0_77 = arith.constant 0 : index
    %c0_78 = arith.constant 0 : index
    %260 = vector.load %arg2[%c37, %c0_77, %c0_78] : memref<81x8x128xf32, #tpu.memory_space<vmem>>, vector<1x8x128xf32>
    %261 = vector.shape_cast %260 : vector<1x8x128xf32> to vector<8x128xf32>
    %262 = vector.shape_cast %261 : vector<8x128xf32> to vector<1x8x128xf32>
    %263 = vector.broadcast %262 : vector<1x8x128xf32> to vector<2x8x128xf32>
    %264 = arith.mulf %259, %263 : vector<2x8x128xf32>
    %265 = arith.addf %258, %264 : vector<2x8x128xf32>
    %266 = vector.extract_strided_slice %0 {offsets = [0, 0, 66], sizes = [2, 8, 128], strides = [1, 1, 1]} : vector<2x8x384xf32> to vector<2x8x128xf32>
    %c38 = arith.constant 38 : index
    %c0_79 = arith.constant 0 : index
    %c0_80 = arith.constant 0 : index
    %267 = vector.load %arg2[%c38, %c0_79, %c0_80] : memref<81x8x128xf32, #tpu.memory_space<vmem>>, vector<1x8x128xf32>
    %268 = vector.shape_cast %267 : vector<1x8x128xf32> to vector<8x128xf32>
    %269 = vector.shape_cast %268 : vector<8x128xf32> to vector<1x8x128xf32>
    %270 = vector.broadcast %269 : vector<1x8x128xf32> to vector<2x8x128xf32>
    %271 = arith.mulf %266, %270 : vector<2x8x128xf32>
    %272 = arith.addf %265, %271 : vector<2x8x128xf32>
    %273 = vector.extract_strided_slice %0 {offsets = [0, 0, 67], sizes = [2, 8, 128], strides = [1, 1, 1]} : vector<2x8x384xf32> to vector<2x8x128xf32>
    %c39 = arith.constant 39 : index
    %c0_81 = arith.constant 0 : index
    %c0_82 = arith.constant 0 : index
    %274 = vector.load %arg2[%c39, %c0_81, %c0_82] : memref<81x8x128xf32, #tpu.memory_space<vmem>>, vector<1x8x128xf32>
    %275 = vector.shape_cast %274 : vector<1x8x128xf32> to vector<8x128xf32>
    %276 = vector.shape_cast %275 : vector<8x128xf32> to vector<1x8x128xf32>
    %277 = vector.broadcast %276 : vector<1x8x128xf32> to vector<2x8x128xf32>
    %278 = arith.mulf %273, %277 : vector<2x8x128xf32>
    %279 = arith.addf %272, %278 : vector<2x8x128xf32>
    %280 = vector.extract_strided_slice %0 {offsets = [0, 0, 68], sizes = [2, 8, 128], strides = [1, 1, 1]} : vector<2x8x384xf32> to vector<2x8x128xf32>
    %c40 = arith.constant 40 : index
    %c0_83 = arith.constant 0 : index
    %c0_84 = arith.constant 0 : index
    %281 = vector.load %arg2[%c40, %c0_83, %c0_84] : memref<81x8x128xf32, #tpu.memory_space<vmem>>, vector<1x8x128xf32>
    %282 = vector.shape_cast %281 : vector<1x8x128xf32> to vector<8x128xf32>
    %283 = vector.shape_cast %282 : vector<8x128xf32> to vector<1x8x128xf32>
    %284 = vector.broadcast %283 : vector<1x8x128xf32> to vector<2x8x128xf32>
    %285 = arith.mulf %280, %284 : vector<2x8x128xf32>
    %286 = arith.addf %279, %285 : vector<2x8x128xf32>
    %287 = vector.extract_strided_slice %0 {offsets = [0, 0, 69], sizes = [2, 8, 128], strides = [1, 1, 1]} : vector<2x8x384xf32> to vector<2x8x128xf32>
    %c41 = arith.constant 41 : index
    %c0_85 = arith.constant 0 : index
    %c0_86 = arith.constant 0 : index
    %288 = vector.load %arg2[%c41, %c0_85, %c0_86] : memref<81x8x128xf32, #tpu.memory_space<vmem>>, vector<1x8x128xf32>
    %289 = vector.shape_cast %288 : vector<1x8x128xf32> to vector<8x128xf32>
    %290 = vector.shape_cast %289 : vector<8x128xf32> to vector<1x8x128xf32>
    %291 = vector.broadcast %290 : vector<1x8x128xf32> to vector<2x8x128xf32>
    %292 = arith.mulf %287, %291 : vector<2x8x128xf32>
    %293 = arith.addf %286, %292 : vector<2x8x128xf32>
    %294 = vector.extract_strided_slice %0 {offsets = [0, 0, 70], sizes = [2, 8, 128], strides = [1, 1, 1]} : vector<2x8x384xf32> to vector<2x8x128xf32>
    %c42 = arith.constant 42 : index
    %c0_87 = arith.constant 0 : index
    %c0_88 = arith.constant 0 : index
    %295 = vector.load %arg2[%c42, %c0_87, %c0_88] : memref<81x8x128xf32, #tpu.memory_space<vmem>>, vector<1x8x128xf32>
    %296 = vector.shape_cast %295 : vector<1x8x128xf32> to vector<8x128xf32>
    %297 = vector.shape_cast %296 : vector<8x128xf32> to vector<1x8x128xf32>
    %298 = vector.broadcast %297 : vector<1x8x128xf32> to vector<2x8x128xf32>
    %299 = arith.mulf %294, %298 : vector<2x8x128xf32>
    %300 = arith.addf %293, %299 : vector<2x8x128xf32>
    %301 = vector.extract_strided_slice %0 {offsets = [0, 0, 71], sizes = [2, 8, 128], strides = [1, 1, 1]} : vector<2x8x384xf32> to vector<2x8x128xf32>
    %c43 = arith.constant 43 : index
    %c0_89 = arith.constant 0 : index
    %c0_90 = arith.constant 0 : index
    %302 = vector.load %arg2[%c43, %c0_89, %c0_90] : memref<81x8x128xf32, #tpu.memory_space<vmem>>, vector<1x8x128xf32>
    %303 = vector.shape_cast %302 : vector<1x8x128xf32> to vector<8x128xf32>
    %304 = vector.shape_cast %303 : vector<8x128xf32> to vector<1x8x128xf32>
    %305 = vector.broadcast %304 : vector<1x8x128xf32> to vector<2x8x128xf32>
    %306 = arith.mulf %301, %305 : vector<2x8x128xf32>
    %307 = arith.addf %300, %306 : vector<2x8x128xf32>
    %308 = vector.extract_strided_slice %0 {offsets = [0, 0, 72], sizes = [2, 8, 128], strides = [1, 1, 1]} : vector<2x8x384xf32> to vector<2x8x128xf32>
    %c44 = arith.constant 44 : index
    %c0_91 = arith.constant 0 : index
    %c0_92 = arith.constant 0 : index
    %309 = vector.load %arg2[%c44, %c0_91, %c0_92] : memref<81x8x128xf32, #tpu.memory_space<vmem>>, vector<1x8x128xf32>
    %310 = vector.shape_cast %309 : vector<1x8x128xf32> to vector<8x128xf32>
    %311 = vector.shape_cast %310 : vector<8x128xf32> to vector<1x8x128xf32>
    %312 = vector.broadcast %311 : vector<1x8x128xf32> to vector<2x8x128xf32>
    %313 = arith.mulf %308, %312 : vector<2x8x128xf32>
    %314 = arith.addf %307, %313 : vector<2x8x128xf32>
    %315 = vector.extract_strided_slice %0 {offsets = [0, 0, 80], sizes = [2, 8, 128], strides = [1, 1, 1]} : vector<2x8x384xf32> to vector<2x8x128xf32>
    %c45 = arith.constant 45 : index
    %c0_93 = arith.constant 0 : index
    %c0_94 = arith.constant 0 : index
    %316 = vector.load %arg2[%c45, %c0_93, %c0_94] : memref<81x8x128xf32, #tpu.memory_space<vmem>>, vector<1x8x128xf32>
    %317 = vector.shape_cast %316 : vector<1x8x128xf32> to vector<8x128xf32>
    %318 = vector.shape_cast %317 : vector<8x128xf32> to vector<1x8x128xf32>
    %319 = vector.broadcast %318 : vector<1x8x128xf32> to vector<2x8x128xf32>
    %320 = arith.mulf %315, %319 : vector<2x8x128xf32>
    %321 = arith.addf %314, %320 : vector<2x8x128xf32>
    %322 = vector.extract_strided_slice %0 {offsets = [0, 0, 81], sizes = [2, 8, 128], strides = [1, 1, 1]} : vector<2x8x384xf32> to vector<2x8x128xf32>
    %c46 = arith.constant 46 : index
    %c0_95 = arith.constant 0 : index
    %c0_96 = arith.constant 0 : index
    %323 = vector.load %arg2[%c46, %c0_95, %c0_96] : memref<81x8x128xf32, #tpu.memory_space<vmem>>, vector<1x8x128xf32>
    %324 = vector.shape_cast %323 : vector<1x8x128xf32> to vector<8x128xf32>
    %325 = vector.shape_cast %324 : vector<8x128xf32> to vector<1x8x128xf32>
    %326 = vector.broadcast %325 : vector<1x8x128xf32> to vector<2x8x128xf32>
    %327 = arith.mulf %322, %326 : vector<2x8x128xf32>
    %328 = arith.addf %321, %327 : vector<2x8x128xf32>
    %329 = vector.extract_strided_slice %0 {offsets = [0, 0, 82], sizes = [2, 8, 128], strides = [1, 1, 1]} : vector<2x8x384xf32> to vector<2x8x128xf32>
    %c47 = arith.constant 47 : index
    %c0_97 = arith.constant 0 : index
    %c0_98 = arith.constant 0 : index
    %330 = vector.load %arg2[%c47, %c0_97, %c0_98] : memref<81x8x128xf32, #tpu.memory_space<vmem>>, vector<1x8x128xf32>
    %331 = vector.shape_cast %330 : vector<1x8x128xf32> to vector<8x128xf32>
    %332 = vector.shape_cast %331 : vector<8x128xf32> to vector<1x8x128xf32>
    %333 = vector.broadcast %332 : vector<1x8x128xf32> to vector<2x8x128xf32>
    %334 = arith.mulf %329, %333 : vector<2x8x128xf32>
    %335 = arith.addf %328, %334 : vector<2x8x128xf32>
    %336 = vector.extract_strided_slice %0 {offsets = [0, 0, 83], sizes = [2, 8, 128], strides = [1, 1, 1]} : vector<2x8x384xf32> to vector<2x8x128xf32>
    %c48 = arith.constant 48 : index
    %c0_99 = arith.constant 0 : index
    %c0_100 = arith.constant 0 : index
    %337 = vector.load %arg2[%c48, %c0_99, %c0_100] : memref<81x8x128xf32, #tpu.memory_space<vmem>>, vector<1x8x128xf32>
    %338 = vector.shape_cast %337 : vector<1x8x128xf32> to vector<8x128xf32>
    %339 = vector.shape_cast %338 : vector<8x128xf32> to vector<1x8x128xf32>
    %340 = vector.broadcast %339 : vector<1x8x128xf32> to vector<2x8x128xf32>
    %341 = arith.mulf %336, %340 : vector<2x8x128xf32>
    %342 = arith.addf %335, %341 : vector<2x8x128xf32>
    %343 = vector.extract_strided_slice %0 {offsets = [0, 0, 84], sizes = [2, 8, 128], strides = [1, 1, 1]} : vector<2x8x384xf32> to vector<2x8x128xf32>
    %c49 = arith.constant 49 : index
    %c0_101 = arith.constant 0 : index
    %c0_102 = arith.constant 0 : index
    %344 = vector.load %arg2[%c49, %c0_101, %c0_102] : memref<81x8x128xf32, #tpu.memory_space<vmem>>, vector<1x8x128xf32>
    %345 = vector.shape_cast %344 : vector<1x8x128xf32> to vector<8x128xf32>
    %346 = vector.shape_cast %345 : vector<8x128xf32> to vector<1x8x128xf32>
    %347 = vector.broadcast %346 : vector<1x8x128xf32> to vector<2x8x128xf32>
    %348 = arith.mulf %343, %347 : vector<2x8x128xf32>
    %349 = arith.addf %342, %348 : vector<2x8x128xf32>
    %350 = vector.extract_strided_slice %0 {offsets = [0, 0, 85], sizes = [2, 8, 128], strides = [1, 1, 1]} : vector<2x8x384xf32> to vector<2x8x128xf32>
    %c50 = arith.constant 50 : index
    %c0_103 = arith.constant 0 : index
    %c0_104 = arith.constant 0 : index
    %351 = vector.load %arg2[%c50, %c0_103, %c0_104] : memref<81x8x128xf32, #tpu.memory_space<vmem>>, vector<1x8x128xf32>
    %352 = vector.shape_cast %351 : vector<1x8x128xf32> to vector<8x128xf32>
    %353 = vector.shape_cast %352 : vector<8x128xf32> to vector<1x8x128xf32>
    %354 = vector.broadcast %353 : vector<1x8x128xf32> to vector<2x8x128xf32>
    %355 = arith.mulf %350, %354 : vector<2x8x128xf32>
    %356 = arith.addf %349, %355 : vector<2x8x128xf32>
    %357 = vector.extract_strided_slice %0 {offsets = [0, 0, 86], sizes = [2, 8, 128], strides = [1, 1, 1]} : vector<2x8x384xf32> to vector<2x8x128xf32>
    %c51 = arith.constant 51 : index
    %c0_105 = arith.constant 0 : index
    %c0_106 = arith.constant 0 : index
    %358 = vector.load %arg2[%c51, %c0_105, %c0_106] : memref<81x8x128xf32, #tpu.memory_space<vmem>>, vector<1x8x128xf32>
    %359 = vector.shape_cast %358 : vector<1x8x128xf32> to vector<8x128xf32>
    %360 = vector.shape_cast %359 : vector<8x128xf32> to vector<1x8x128xf32>
    %361 = vector.broadcast %360 : vector<1x8x128xf32> to vector<2x8x128xf32>
    %362 = arith.mulf %357, %361 : vector<2x8x128xf32>
    %363 = arith.addf %356, %362 : vector<2x8x128xf32>
    %364 = vector.extract_strided_slice %0 {offsets = [0, 0, 87], sizes = [2, 8, 128], strides = [1, 1, 1]} : vector<2x8x384xf32> to vector<2x8x128xf32>
    %c52 = arith.constant 52 : index
    %c0_107 = arith.constant 0 : index
    %c0_108 = arith.constant 0 : index
    %365 = vector.load %arg2[%c52, %c0_107, %c0_108] : memref<81x8x128xf32, #tpu.memory_space<vmem>>, vector<1x8x128xf32>
    %366 = vector.shape_cast %365 : vector<1x8x128xf32> to vector<8x128xf32>
    %367 = vector.shape_cast %366 : vector<8x128xf32> to vector<1x8x128xf32>
    %368 = vector.broadcast %367 : vector<1x8x128xf32> to vector<2x8x128xf32>
    %369 = arith.mulf %364, %368 : vector<2x8x128xf32>
    %370 = arith.addf %363, %369 : vector<2x8x128xf32>
    %371 = vector.extract_strided_slice %0 {offsets = [0, 0, 88], sizes = [2, 8, 128], strides = [1, 1, 1]} : vector<2x8x384xf32> to vector<2x8x128xf32>
    %c53 = arith.constant 53 : index
    %c0_109 = arith.constant 0 : index
    %c0_110 = arith.constant 0 : index
    %372 = vector.load %arg2[%c53, %c0_109, %c0_110] : memref<81x8x128xf32, #tpu.memory_space<vmem>>, vector<1x8x128xf32>
    %373 = vector.shape_cast %372 : vector<1x8x128xf32> to vector<8x128xf32>
    %374 = vector.shape_cast %373 : vector<8x128xf32> to vector<1x8x128xf32>
    %375 = vector.broadcast %374 : vector<1x8x128xf32> to vector<2x8x128xf32>
    %376 = arith.mulf %371, %375 : vector<2x8x128xf32>
    %377 = arith.addf %370, %376 : vector<2x8x128xf32>
    %378 = vector.extract_strided_slice %0 {offsets = [0, 0, 96], sizes = [2, 8, 128], strides = [1, 1, 1]} : vector<2x8x384xf32> to vector<2x8x128xf32>
    %c54 = arith.constant 54 : index
    %c0_111 = arith.constant 0 : index
    %c0_112 = arith.constant 0 : index
    %379 = vector.load %arg2[%c54, %c0_111, %c0_112] : memref<81x8x128xf32, #tpu.memory_space<vmem>>, vector<1x8x128xf32>
    %380 = vector.shape_cast %379 : vector<1x8x128xf32> to vector<8x128xf32>
    %381 = vector.shape_cast %380 : vector<8x128xf32> to vector<1x8x128xf32>
    %382 = vector.broadcast %381 : vector<1x8x128xf32> to vector<2x8x128xf32>
    %383 = arith.mulf %378, %382 : vector<2x8x128xf32>
    %384 = arith.addf %377, %383 : vector<2x8x128xf32>
    %385 = vector.extract_strided_slice %0 {offsets = [0, 0, 97], sizes = [2, 8, 128], strides = [1, 1, 1]} : vector<2x8x384xf32> to vector<2x8x128xf32>
    %c55 = arith.constant 55 : index
    %c0_113 = arith.constant 0 : index
    %c0_114 = arith.constant 0 : index
    %386 = vector.load %arg2[%c55, %c0_113, %c0_114] : memref<81x8x128xf32, #tpu.memory_space<vmem>>, vector<1x8x128xf32>
    %387 = vector.shape_cast %386 : vector<1x8x128xf32> to vector<8x128xf32>
    %388 = vector.shape_cast %387 : vector<8x128xf32> to vector<1x8x128xf32>
    %389 = vector.broadcast %388 : vector<1x8x128xf32> to vector<2x8x128xf32>
    %390 = arith.mulf %385, %389 : vector<2x8x128xf32>
    %391 = arith.addf %384, %390 : vector<2x8x128xf32>
    %392 = vector.extract_strided_slice %0 {offsets = [0, 0, 98], sizes = [2, 8, 128], strides = [1, 1, 1]} : vector<2x8x384xf32> to vector<2x8x128xf32>
    %c56 = arith.constant 56 : index
    %c0_115 = arith.constant 0 : index
    %c0_116 = arith.constant 0 : index
    %393 = vector.load %arg2[%c56, %c0_115, %c0_116] : memref<81x8x128xf32, #tpu.memory_space<vmem>>, vector<1x8x128xf32>
    %394 = vector.shape_cast %393 : vector<1x8x128xf32> to vector<8x128xf32>
    %395 = vector.shape_cast %394 : vector<8x128xf32> to vector<1x8x128xf32>
    %396 = vector.broadcast %395 : vector<1x8x128xf32> to vector<2x8x128xf32>
    %397 = arith.mulf %392, %396 : vector<2x8x128xf32>
    %398 = arith.addf %391, %397 : vector<2x8x128xf32>
    %399 = vector.extract_strided_slice %0 {offsets = [0, 0, 99], sizes = [2, 8, 128], strides = [1, 1, 1]} : vector<2x8x384xf32> to vector<2x8x128xf32>
    %c57 = arith.constant 57 : index
    %c0_117 = arith.constant 0 : index
    %c0_118 = arith.constant 0 : index
    %400 = vector.load %arg2[%c57, %c0_117, %c0_118] : memref<81x8x128xf32, #tpu.memory_space<vmem>>, vector<1x8x128xf32>
    %401 = vector.shape_cast %400 : vector<1x8x128xf32> to vector<8x128xf32>
    %402 = vector.shape_cast %401 : vector<8x128xf32> to vector<1x8x128xf32>
    %403 = vector.broadcast %402 : vector<1x8x128xf32> to vector<2x8x128xf32>
    %404 = arith.mulf %399, %403 : vector<2x8x128xf32>
    %405 = arith.addf %398, %404 : vector<2x8x128xf32>
    %406 = vector.extract_strided_slice %0 {offsets = [0, 0, 100], sizes = [2, 8, 128], strides = [1, 1, 1]} : vector<2x8x384xf32> to vector<2x8x128xf32>
    %c58 = arith.constant 58 : index
    %c0_119 = arith.constant 0 : index
    %c0_120 = arith.constant 0 : index
    %407 = vector.load %arg2[%c58, %c0_119, %c0_120] : memref<81x8x128xf32, #tpu.memory_space<vmem>>, vector<1x8x128xf32>
    %408 = vector.shape_cast %407 : vector<1x8x128xf32> to vector<8x128xf32>
    %409 = vector.shape_cast %408 : vector<8x128xf32> to vector<1x8x128xf32>
    %410 = vector.broadcast %409 : vector<1x8x128xf32> to vector<2x8x128xf32>
    %411 = arith.mulf %406, %410 : vector<2x8x128xf32>
    %412 = arith.addf %405, %411 : vector<2x8x128xf32>
    %413 = vector.extract_strided_slice %0 {offsets = [0, 0, 101], sizes = [2, 8, 128], strides = [1, 1, 1]} : vector<2x8x384xf32> to vector<2x8x128xf32>
    %c59 = arith.constant 59 : index
    %c0_121 = arith.constant 0 : index
    %c0_122 = arith.constant 0 : index
    %414 = vector.load %arg2[%c59, %c0_121, %c0_122] : memref<81x8x128xf32, #tpu.memory_space<vmem>>, vector<1x8x128xf32>
    %415 = vector.shape_cast %414 : vector<1x8x128xf32> to vector<8x128xf32>
    %416 = vector.shape_cast %415 : vector<8x128xf32> to vector<1x8x128xf32>
    %417 = vector.broadcast %416 : vector<1x8x128xf32> to vector<2x8x128xf32>
    %418 = arith.mulf %413, %417 : vector<2x8x128xf32>
    %419 = arith.addf %412, %418 : vector<2x8x128xf32>
    %420 = vector.extract_strided_slice %0 {offsets = [0, 0, 102], sizes = [2, 8, 128], strides = [1, 1, 1]} : vector<2x8x384xf32> to vector<2x8x128xf32>
    %c60 = arith.constant 60 : index
    %c0_123 = arith.constant 0 : index
    %c0_124 = arith.constant 0 : index
    %421 = vector.load %arg2[%c60, %c0_123, %c0_124] : memref<81x8x128xf32, #tpu.memory_space<vmem>>, vector<1x8x128xf32>
    %422 = vector.shape_cast %421 : vector<1x8x128xf32> to vector<8x128xf32>
    %423 = vector.shape_cast %422 : vector<8x128xf32> to vector<1x8x128xf32>
    %424 = vector.broadcast %423 : vector<1x8x128xf32> to vector<2x8x128xf32>
    %425 = arith.mulf %420, %424 : vector<2x8x128xf32>
    %426 = arith.addf %419, %425 : vector<2x8x128xf32>
    %427 = vector.extract_strided_slice %0 {offsets = [0, 0, 103], sizes = [2, 8, 128], strides = [1, 1, 1]} : vector<2x8x384xf32> to vector<2x8x128xf32>
    %c61 = arith.constant 61 : index
    %c0_125 = arith.constant 0 : index
    %c0_126 = arith.constant 0 : index
    %428 = vector.load %arg2[%c61, %c0_125, %c0_126] : memref<81x8x128xf32, #tpu.memory_space<vmem>>, vector<1x8x128xf32>
    %429 = vector.shape_cast %428 : vector<1x8x128xf32> to vector<8x128xf32>
    %430 = vector.shape_cast %429 : vector<8x128xf32> to vector<1x8x128xf32>
    %431 = vector.broadcast %430 : vector<1x8x128xf32> to vector<2x8x128xf32>
    %432 = arith.mulf %427, %431 : vector<2x8x128xf32>
    %433 = arith.addf %426, %432 : vector<2x8x128xf32>
    %434 = vector.extract_strided_slice %0 {offsets = [0, 0, 104], sizes = [2, 8, 128], strides = [1, 1, 1]} : vector<2x8x384xf32> to vector<2x8x128xf32>
    %c62 = arith.constant 62 : index
    %c0_127 = arith.constant 0 : index
    %c0_128 = arith.constant 0 : index
    %435 = vector.load %arg2[%c62, %c0_127, %c0_128] : memref<81x8x128xf32, #tpu.memory_space<vmem>>, vector<1x8x128xf32>
    %436 = vector.shape_cast %435 : vector<1x8x128xf32> to vector<8x128xf32>
    %437 = vector.shape_cast %436 : vector<8x128xf32> to vector<1x8x128xf32>
    %438 = vector.broadcast %437 : vector<1x8x128xf32> to vector<2x8x128xf32>
    %439 = arith.mulf %434, %438 : vector<2x8x128xf32>
    %440 = arith.addf %433, %439 : vector<2x8x128xf32>
    %441 = vector.extract_strided_slice %0 {offsets = [0, 0, 112], sizes = [2, 8, 128], strides = [1, 1, 1]} : vector<2x8x384xf32> to vector<2x8x128xf32>
    %c63 = arith.constant 63 : index
    %c0_129 = arith.constant 0 : index
    %c0_130 = arith.constant 0 : index
    %442 = vector.load %arg2[%c63, %c0_129, %c0_130] : memref<81x8x128xf32, #tpu.memory_space<vmem>>, vector<1x8x128xf32>
    %443 = vector.shape_cast %442 : vector<1x8x128xf32> to vector<8x128xf32>
    %444 = vector.shape_cast %443 : vector<8x128xf32> to vector<1x8x128xf32>
    %445 = vector.broadcast %444 : vector<1x8x128xf32> to vector<2x8x128xf32>
    %446 = arith.mulf %441, %445 : vector<2x8x128xf32>
    %447 = arith.addf %440, %446 : vector<2x8x128xf32>
    %448 = vector.extract_strided_slice %0 {offsets = [0, 0, 113], sizes = [2, 8, 128], strides = [1, 1, 1]} : vector<2x8x384xf32> to vector<2x8x128xf32>
    %c64 = arith.constant 64 : index
    %c0_131 = arith.constant 0 : index
    %c0_132 = arith.constant 0 : index
    %449 = vector.load %arg2[%c64, %c0_131, %c0_132] : memref<81x8x128xf32, #tpu.memory_space<vmem>>, vector<1x8x128xf32>
    %450 = vector.shape_cast %449 : vector<1x8x128xf32> to vector<8x128xf32>
    %451 = vector.shape_cast %450 : vector<8x128xf32> to vector<1x8x128xf32>
    %452 = vector.broadcast %451 : vector<1x8x128xf32> to vector<2x8x128xf32>
    %453 = arith.mulf %448, %452 : vector<2x8x128xf32>
    %454 = arith.addf %447, %453 : vector<2x8x128xf32>
    %455 = vector.extract_strided_slice %0 {offsets = [0, 0, 114], sizes = [2, 8, 128], strides = [1, 1, 1]} : vector<2x8x384xf32> to vector<2x8x128xf32>
    %c65 = arith.constant 65 : index
    %c0_133 = arith.constant 0 : index
    %c0_134 = arith.constant 0 : index
    %456 = vector.load %arg2[%c65, %c0_133, %c0_134] : memref<81x8x128xf32, #tpu.memory_space<vmem>>, vector<1x8x128xf32>
    %457 = vector.shape_cast %456 : vector<1x8x128xf32> to vector<8x128xf32>
    %458 = vector.shape_cast %457 : vector<8x128xf32> to vector<1x8x128xf32>
    %459 = vector.broadcast %458 : vector<1x8x128xf32> to vector<2x8x128xf32>
    %460 = arith.mulf %455, %459 : vector<2x8x128xf32>
    %461 = arith.addf %454, %460 : vector<2x8x128xf32>
    %462 = vector.extract_strided_slice %0 {offsets = [0, 0, 115], sizes = [2, 8, 128], strides = [1, 1, 1]} : vector<2x8x384xf32> to vector<2x8x128xf32>
    %c66 = arith.constant 66 : index
    %c0_135 = arith.constant 0 : index
    %c0_136 = arith.constant 0 : index
    %463 = vector.load %arg2[%c66, %c0_135, %c0_136] : memref<81x8x128xf32, #tpu.memory_space<vmem>>, vector<1x8x128xf32>
    %464 = vector.shape_cast %463 : vector<1x8x128xf32> to vector<8x128xf32>
    %465 = vector.shape_cast %464 : vector<8x128xf32> to vector<1x8x128xf32>
    %466 = vector.broadcast %465 : vector<1x8x128xf32> to vector<2x8x128xf32>
    %467 = arith.mulf %462, %466 : vector<2x8x128xf32>
    %468 = arith.addf %461, %467 : vector<2x8x128xf32>
    %469 = vector.extract_strided_slice %0 {offsets = [0, 0, 116], sizes = [2, 8, 128], strides = [1, 1, 1]} : vector<2x8x384xf32> to vector<2x8x128xf32>
    %c67 = arith.constant 67 : index
    %c0_137 = arith.constant 0 : index
    %c0_138 = arith.constant 0 : index
    %470 = vector.load %arg2[%c67, %c0_137, %c0_138] : memref<81x8x128xf32, #tpu.memory_space<vmem>>, vector<1x8x128xf32>
    %471 = vector.shape_cast %470 : vector<1x8x128xf32> to vector<8x128xf32>
    %472 = vector.shape_cast %471 : vector<8x128xf32> to vector<1x8x128xf32>
    %473 = vector.broadcast %472 : vector<1x8x128xf32> to vector<2x8x128xf32>
    %474 = arith.mulf %469, %473 : vector<2x8x128xf32>
    %475 = arith.addf %468, %474 : vector<2x8x128xf32>
    %476 = vector.extract_strided_slice %0 {offsets = [0, 0, 117], sizes = [2, 8, 128], strides = [1, 1, 1]} : vector<2x8x384xf32> to vector<2x8x128xf32>
    %c68 = arith.constant 68 : index
    %c0_139 = arith.constant 0 : index
    %c0_140 = arith.constant 0 : index
    %477 = vector.load %arg2[%c68, %c0_139, %c0_140] : memref<81x8x128xf32, #tpu.memory_space<vmem>>, vector<1x8x128xf32>
    %478 = vector.shape_cast %477 : vector<1x8x128xf32> to vector<8x128xf32>
    %479 = vector.shape_cast %478 : vector<8x128xf32> to vector<1x8x128xf32>
    %480 = vector.broadcast %479 : vector<1x8x128xf32> to vector<2x8x128xf32>
    %481 = arith.mulf %476, %480 : vector<2x8x128xf32>
    %482 = arith.addf %475, %481 : vector<2x8x128xf32>
    %483 = vector.extract_strided_slice %0 {offsets = [0, 0, 118], sizes = [2, 8, 128], strides = [1, 1, 1]} : vector<2x8x384xf32> to vector<2x8x128xf32>
    %c69 = arith.constant 69 : index
    %c0_141 = arith.constant 0 : index
    %c0_142 = arith.constant 0 : index
    %484 = vector.load %arg2[%c69, %c0_141, %c0_142] : memref<81x8x128xf32, #tpu.memory_space<vmem>>, vector<1x8x128xf32>
    %485 = vector.shape_cast %484 : vector<1x8x128xf32> to vector<8x128xf32>
    %486 = vector.shape_cast %485 : vector<8x128xf32> to vector<1x8x128xf32>
    %487 = vector.broadcast %486 : vector<1x8x128xf32> to vector<2x8x128xf32>
    %488 = arith.mulf %483, %487 : vector<2x8x128xf32>
    %489 = arith.addf %482, %488 : vector<2x8x128xf32>
    %490 = vector.extract_strided_slice %0 {offsets = [0, 0, 119], sizes = [2, 8, 128], strides = [1, 1, 1]} : vector<2x8x384xf32> to vector<2x8x128xf32>
    %c70 = arith.constant 70 : index
    %c0_143 = arith.constant 0 : index
    %c0_144 = arith.constant 0 : index
    %491 = vector.load %arg2[%c70, %c0_143, %c0_144] : memref<81x8x128xf32, #tpu.memory_space<vmem>>, vector<1x8x128xf32>
    %492 = vector.shape_cast %491 : vector<1x8x128xf32> to vector<8x128xf32>
    %493 = vector.shape_cast %492 : vector<8x128xf32> to vector<1x8x128xf32>
    %494 = vector.broadcast %493 : vector<1x8x128xf32> to vector<2x8x128xf32>
    %495 = arith.mulf %490, %494 : vector<2x8x128xf32>
    %496 = arith.addf %489, %495 : vector<2x8x128xf32>
    %497 = vector.extract_strided_slice %0 {offsets = [0, 0, 120], sizes = [2, 8, 128], strides = [1, 1, 1]} : vector<2x8x384xf32> to vector<2x8x128xf32>
    %c71 = arith.constant 71 : index
    %c0_145 = arith.constant 0 : index
    %c0_146 = arith.constant 0 : index
    %498 = vector.load %arg2[%c71, %c0_145, %c0_146] : memref<81x8x128xf32, #tpu.memory_space<vmem>>, vector<1x8x128xf32>
    %499 = vector.shape_cast %498 : vector<1x8x128xf32> to vector<8x128xf32>
    %500 = vector.shape_cast %499 : vector<8x128xf32> to vector<1x8x128xf32>
    %501 = vector.broadcast %500 : vector<1x8x128xf32> to vector<2x8x128xf32>
    %502 = arith.mulf %497, %501 : vector<2x8x128xf32>
    %503 = arith.addf %496, %502 : vector<2x8x128xf32>
    %504 = vector.extract_strided_slice %0 {offsets = [0, 0, 128], sizes = [2, 8, 128], strides = [1, 1, 1]} : vector<2x8x384xf32> to vector<2x8x128xf32>
    %c72 = arith.constant 72 : index
    %c0_147 = arith.constant 0 : index
    %c0_148 = arith.constant 0 : index
    %505 = vector.load %arg2[%c72, %c0_147, %c0_148] : memref<81x8x128xf32, #tpu.memory_space<vmem>>, vector<1x8x128xf32>
    %506 = vector.shape_cast %505 : vector<1x8x128xf32> to vector<8x128xf32>
    %507 = vector.shape_cast %506 : vector<8x128xf32> to vector<1x8x128xf32>
    %508 = vector.broadcast %507 : vector<1x8x128xf32> to vector<2x8x128xf32>
    %509 = arith.mulf %504, %508 : vector<2x8x128xf32>
    %510 = arith.addf %503, %509 : vector<2x8x128xf32>
    %511 = vector.extract_strided_slice %0 {offsets = [0, 0, 129], sizes = [2, 8, 128], strides = [1, 1, 1]} : vector<2x8x384xf32> to vector<2x8x128xf32>
    %c73 = arith.constant 73 : index
    %c0_149 = arith.constant 0 : index
    %c0_150 = arith.constant 0 : index
    %512 = vector.load %arg2[%c73, %c0_149, %c0_150] : memref<81x8x128xf32, #tpu.memory_space<vmem>>, vector<1x8x128xf32>
    %513 = vector.shape_cast %512 : vector<1x8x128xf32> to vector<8x128xf32>
    %514 = vector.shape_cast %513 : vector<8x128xf32> to vector<1x8x128xf32>
    %515 = vector.broadcast %514 : vector<1x8x128xf32> to vector<2x8x128xf32>
    %516 = arith.mulf %511, %515 : vector<2x8x128xf32>
    %517 = arith.addf %510, %516 : vector<2x8x128xf32>
    %518 = vector.extract_strided_slice %0 {offsets = [0, 0, 130], sizes = [2, 8, 128], strides = [1, 1, 1]} : vector<2x8x384xf32> to vector<2x8x128xf32>
    %c74 = arith.constant 74 : index
    %c0_151 = arith.constant 0 : index
    %c0_152 = arith.constant 0 : index
    %519 = vector.load %arg2[%c74, %c0_151, %c0_152] : memref<81x8x128xf32, #tpu.memory_space<vmem>>, vector<1x8x128xf32>
    %520 = vector.shape_cast %519 : vector<1x8x128xf32> to vector<8x128xf32>
    %521 = vector.shape_cast %520 : vector<8x128xf32> to vector<1x8x128xf32>
    %522 = vector.broadcast %521 : vector<1x8x128xf32> to vector<2x8x128xf32>
    %523 = arith.mulf %518, %522 : vector<2x8x128xf32>
    %524 = arith.addf %517, %523 : vector<2x8x128xf32>
    %525 = vector.extract_strided_slice %0 {offsets = [0, 0, 131], sizes = [2, 8, 128], strides = [1, 1, 1]} : vector<2x8x384xf32> to vector<2x8x128xf32>
    %c75 = arith.constant 75 : index
    %c0_153 = arith.constant 0 : index
    %c0_154 = arith.constant 0 : index
    %526 = vector.load %arg2[%c75, %c0_153, %c0_154] : memref<81x8x128xf32, #tpu.memory_space<vmem>>, vector<1x8x128xf32>
    %527 = vector.shape_cast %526 : vector<1x8x128xf32> to vector<8x128xf32>
    %528 = vector.shape_cast %527 : vector<8x128xf32> to vector<1x8x128xf32>
    %529 = vector.broadcast %528 : vector<1x8x128xf32> to vector<2x8x128xf32>
    %530 = arith.mulf %525, %529 : vector<2x8x128xf32>
    %531 = arith.addf %524, %530 : vector<2x8x128xf32>
    %532 = vector.extract_strided_slice %0 {offsets = [0, 0, 132], sizes = [2, 8, 128], strides = [1, 1, 1]} : vector<2x8x384xf32> to vector<2x8x128xf32>
    %c76 = arith.constant 76 : index
    %c0_155 = arith.constant 0 : index
    %c0_156 = arith.constant 0 : index
    %533 = vector.load %arg2[%c76, %c0_155, %c0_156] : memref<81x8x128xf32, #tpu.memory_space<vmem>>, vector<1x8x128xf32>
    %534 = vector.shape_cast %533 : vector<1x8x128xf32> to vector<8x128xf32>
    %535 = vector.shape_cast %534 : vector<8x128xf32> to vector<1x8x128xf32>
    %536 = vector.broadcast %535 : vector<1x8x128xf32> to vector<2x8x128xf32>
    %537 = arith.mulf %532, %536 : vector<2x8x128xf32>
    %538 = arith.addf %531, %537 : vector<2x8x128xf32>
    %539 = vector.extract_strided_slice %0 {offsets = [0, 0, 133], sizes = [2, 8, 128], strides = [1, 1, 1]} : vector<2x8x384xf32> to vector<2x8x128xf32>
    %c77 = arith.constant 77 : index
    %c0_157 = arith.constant 0 : index
    %c0_158 = arith.constant 0 : index
    %540 = vector.load %arg2[%c77, %c0_157, %c0_158] : memref<81x8x128xf32, #tpu.memory_space<vmem>>, vector<1x8x128xf32>
    %541 = vector.shape_cast %540 : vector<1x8x128xf32> to vector<8x128xf32>
    %542 = vector.shape_cast %541 : vector<8x128xf32> to vector<1x8x128xf32>
    %543 = vector.broadcast %542 : vector<1x8x128xf32> to vector<2x8x128xf32>
    %544 = arith.mulf %539, %543 : vector<2x8x128xf32>
    %545 = arith.addf %538, %544 : vector<2x8x128xf32>
    %546 = vector.extract_strided_slice %0 {offsets = [0, 0, 134], sizes = [2, 8, 128], strides = [1, 1, 1]} : vector<2x8x384xf32> to vector<2x8x128xf32>
    %c78 = arith.constant 78 : index
    %c0_159 = arith.constant 0 : index
    %c0_160 = arith.constant 0 : index
    %547 = vector.load %arg2[%c78, %c0_159, %c0_160] : memref<81x8x128xf32, #tpu.memory_space<vmem>>, vector<1x8x128xf32>
    %548 = vector.shape_cast %547 : vector<1x8x128xf32> to vector<8x128xf32>
    %549 = vector.shape_cast %548 : vector<8x128xf32> to vector<1x8x128xf32>
    %550 = vector.broadcast %549 : vector<1x8x128xf32> to vector<2x8x128xf32>
    %551 = arith.mulf %546, %550 : vector<2x8x128xf32>
    %552 = arith.addf %545, %551 : vector<2x8x128xf32>
    %553 = vector.extract_strided_slice %0 {offsets = [0, 0, 135], sizes = [2, 8, 128], strides = [1, 1, 1]} : vector<2x8x384xf32> to vector<2x8x128xf32>
    %c79 = arith.constant 79 : index
    %c0_161 = arith.constant 0 : index
    %c0_162 = arith.constant 0 : index
    %554 = vector.load %arg2[%c79, %c0_161, %c0_162] : memref<81x8x128xf32, #tpu.memory_space<vmem>>, vector<1x8x128xf32>
    %555 = vector.shape_cast %554 : vector<1x8x128xf32> to vector<8x128xf32>
    %556 = vector.shape_cast %555 : vector<8x128xf32> to vector<1x8x128xf32>
    %557 = vector.broadcast %556 : vector<1x8x128xf32> to vector<2x8x128xf32>
    %558 = arith.mulf %553, %557 : vector<2x8x128xf32>
    %559 = arith.addf %552, %558 : vector<2x8x128xf32>
    %560 = vector.extract_strided_slice %0 {offsets = [0, 0, 136], sizes = [2, 8, 128], strides = [1, 1, 1]} : vector<2x8x384xf32> to vector<2x8x128xf32>
    %c80 = arith.constant 80 : index
    %c0_163 = arith.constant 0 : index
    %c0_164 = arith.constant 0 : index
    %561 = vector.load %arg2[%c80, %c0_163, %c0_164] : memref<81x8x128xf32, #tpu.memory_space<vmem>>, vector<1x8x128xf32>
    %562 = vector.shape_cast %561 : vector<1x8x128xf32> to vector<8x128xf32>
    %563 = vector.shape_cast %562 : vector<8x128xf32> to vector<1x8x128xf32>
    %564 = vector.broadcast %563 : vector<1x8x128xf32> to vector<2x8x128xf32>
    %565 = arith.mulf %560, %564 : vector<2x8x128xf32>
    %566 = arith.addf %559, %565 : vector<2x8x128xf32>
    %567 = vector.shape_cast %566 : vector<2x8x128xf32> to vector<16x128xf32>
    %c0_165 = arith.constant 0 : index
    %c0_166 = arith.constant 0 : index
    %568 = vector.load %arg4[%c0_165, %c0_166] : memref<128x64xf32, #tpu.memory_space<vmem>>, vector<128x64xf32>
    %cst = arith.constant dense<0.000000e+00> : vector<16x64xf32>
    %569 = tpu.matmul %567, %568, %cst {dimension_numbers = #tpu.dot_dimension_numbers<[1], [0], [0], [1], [0, 0, 1, 1], [], []>} : vector<16x128xf32>, vector<128x64xf32>, vector<16x64xf32> -> vector<16x64xf32>
    %c0_167 = arith.constant 0 : index
    %c0_168 = arith.constant 0 : index
    %570 = vector.load %arg3[%c0_167, %c0_168] : memref<16x64xf32, #tpu.memory_space<vmem>>, vector<16x64xf32>
    %571 = arith.addf %569, %570 : vector<16x64xf32>
    %572 = arith.mulf %571, %571 : vector<16x64xf32>
    %c0_169 = arith.constant 0 : index
    %c0_170 = arith.constant 0 : index
    %573 = vector.load %arg5[%c0_169, %c0_170] : memref<64x8xf32, #tpu.memory_space<vmem>>, vector<64x8xf32>
    %cst_171 = arith.constant dense<0.000000e+00> : vector<16x8xf32>
    %574 = tpu.matmul %572, %573, %cst_171 {dimension_numbers = #tpu.dot_dimension_numbers<[1], [0], [0], [1], [0, 0, 1, 1], [], []>} : vector<16x64xf32>, vector<64x8xf32>, vector<16x8xf32> -> vector<16x8xf32>
    %575 = math.sqrt %574 : vector<16x8xf32>
    %576 = math.exp %575 : vector<16x8xf32>
    %cst_172 = arith.constant 1.000000e+00 : f32
    %577 = vector.broadcast %cst_172 : f32 to vector<16x8xf32>
    %578 = arith.divf %577, %576 : vector<16x8xf32>
    %cst_173 = arith.constant 1.000000e+00 : f32
    %579 = vector.broadcast %cst_173 : f32 to vector<16x8xf32>
    %580 = arith.subf %579, %578 : vector<16x8xf32>
    %cst_174 = arith.constant 9.99999968E-21 : f32
    %581 = vector.broadcast %cst_174 : f32 to vector<16x8xf32>
    %582 = arith.addf %575, %581 : vector<16x8xf32>
    %583 = arith.divf %580, %582 : vector<16x8xf32>
    %c0_175 = arith.constant 0 : index
    %c0_176 = arith.constant 0 : index
    %584 = vector.load %arg6[%c0_175, %c0_176] : memref<8x64xf32, #tpu.memory_space<vmem>>, vector<8x64xf32>
    %cst_177 = arith.constant dense<0.000000e+00> : vector<16x64xf32>
    %585 = tpu.matmul %583, %584, %cst_177 {dimension_numbers = #tpu.dot_dimension_numbers<[1], [0], [0], [1], [0, 0, 1, 1], [], []>} : vector<16x8xf32>, vector<8x64xf32>, vector<16x64xf32> -> vector<16x64xf32>
    %586 = arith.mulf %571, %585 : vector<16x64xf32>
    %c0_178 = arith.constant 0 : index
    %c0_179 = arith.constant 0 : index
    %587 = vector.load %arg7[%c0_178, %c0_179] : memref<16x64xf32, #tpu.memory_space<vmem>>, vector<16x64xf32>
    tpu.vector_store %arg7[%c0_178, %c0_179], %586 {strides = array<i32>} : memref<16x64xf32, #tpu.memory_space<vmem>>, vector<16x64xf32>,
    return
  }
  func.func @transform_0(%arg0: i32) -> (i32, i32, i32) {
    %c0_i32 = arith.constant 0 : i32
    %c0_i32_0 = arith.constant 0 : i32
    %c0_i32_1 = arith.constant 0 : i32
    return %arg0, %c0_i32, %c0_i32_0 : i32, i32, i32
  }
  func.func @transform_1(%arg0: i32) -> (i32, i32, i32) {
    %c0_i32 = arith.constant 0 : i32
    %c0_i32_0 = arith.constant 0 : i32
    %c0_i32_1 = arith.constant 0 : i32
    %c0_i32_2 = arith.constant 0 : i32
    return %c0_i32, %c0_i32_0, %c0_i32_1 : i32, i32, i32
  }
  func.func @transform_2(%arg0: i32) -> (i32, i32) {
    %c0_i32 = arith.constant 0 : i32
    %c0_i32_0 = arith.constant 0 : i32
    %c0_i32_1 = arith.constant 0 : i32
    return %c0_i32, %c0_i32_0 : i32, i32
  }
  func.func @transform_3(%arg0: i32) -> (i32, i32) {
    %c0_i32 = arith.constant 0 : i32
    %c0_i32_0 = arith.constant 0 : i32
    %c0_i32_1 = arith.constant 0 : i32
    return %c0_i32, %c0_i32_0 : i32, i32
  }
  func.func @transform_4(%arg0: i32) -> (i32, i32) {
    %c0_i32 = arith.constant 0 : i32
    %c0_i32_0 = arith.constant 0 : i32
    %c0_i32_1 = arith.constant 0 : i32
    return %c0_i32, %c0_i32_0 : i32, i32
  }
  func.func @transform_5(%arg0: i32) -> (i32, i32) {
    %c0_i32 = arith.constant 0 : i32
    %c0_i32_0 = arith.constant 0 : i32
    %c0_i32_1 = arith.constant 0 : i32
    return %c0_i32, %c0_i32_0 : i32, i32
  }
  func.func @transform_6(%arg0: i32) -> (i32, i32) {
    %c0_i32 = arith.constant 0 : i32
    %c0_i32_0 = arith.constant 0 : i32
    return %arg0, %c0_i32 : i32, i32
  }
}

</mosaic_0001>

<llo_original>
// kernel: tpu_custom_call.1
$region0: #{tpu_custom_call.1}
  #allocation0 [shape = 'u32[]', space=smem, size = 0x4, offset = 0x4, fixed_abs, tag = 'smem constant byte address 0x4 - core index']
  #allocation1 [shape = 'u32[144,128]{1,0:T(1,128)}', space=vmem, size = 0x12000, scoped, tag = 'internal scratch']
  %s0 = inlined_call_operand.vmem [shape: f32[2,8,384], index: 0, kind: input, shape index: {}]
  %s1 = inlined_call_operand.hbm [shape: f32[81,8,128], index: 1, kind: input, shape index: {}]
  %s2 = inlined_call_operand.vmem [shape: f32[16,64], index: 2, kind: input, shape index: {}]
  %s3 = inlined_call_operand.vmem [shape: f32[128,64], index: 3, kind: input, shape index: {}]
  %s4 = inlined_call_operand.vmem [shape: f32[64,8], index: 4, kind: input, shape index: {}]
  %s5 = inlined_call_operand.vmem [shape: f32[8,64], index: 5, kind: input, shape index: {}]
  %s6 = inlined_call_operand.hbm [shape: f32[16,64], index: 6, kind: output, shape index: {}]
  %s7 = sld [smem:[#allocation0]]
  $region38: #{tpu_custom_call.1} parent=0
    _
  %s9 = ssub.s32 1, %s7
  %s10 = scalar_select 0, %s9, %s7
  $region1: #{tpu_custom_call.1} parent=0
    #allocation2 [shape = 'u8[331776]{0}', space=vmem, size = 0x51000, scoped, tag = 'input window, operand 1, single buffered']
    #allocation3 [shape = 's32[1]{0}', space=sflag, size = 0x4, scoped, tag = 'scoped memory for tpu_custom_call.1']
    #allocation4 [shape = 's32[1]{0}', space=sflag, size = 0x4, scoped, tag = 'scoped memory for tpu_custom_call.1']
    #allocation5 [shape = 'u8[8192]{0}', space=vmem, size = 0x2000, scoped, tag = 'output window, operand 0, single buffered']
    %11 = vsyncpa [#allocation3], 0
    %12 = vsyncpa [#allocation4], 0
    // Predicated region
    $region2: #{tpu_custom_call.1} parent=1 // pred_check
      _
    $region3: #{tpu_custom_call.1} parent=1 // pred_check_branch
      %14 = sbr.rel (0) target = $region5
    $region4: #{tpu_custom_call.1} parent=1 // pred_region
      _
    $region5: #{tpu_custom_call.1} parent=1 // pred_fallthru
      _
    // Predicated region
    $region6: #{tpu_custom_call.1} parent=1 // pred_check
      _
    $region7: #{tpu_custom_call.1} parent=1 // pred_check_branch
      %16 = sbr.rel (0) target = $region9
    $region8: #{tpu_custom_call.1} parent=1 // pred_region
      %s18 = ssub.s32 10368, 10368
      %19 = vsyncadd [#allocation3], %s18
      %s20 = sshll.u32 [#allocation2], 4
      %s21 = int_to_ptr.vmem [resolvable:$true] %s20
      %26 = dma.hbm_to_vmem [thread:$0]  %s1, 10368, %s21, [#allocation3], 128, 128, 8
    $region9: #{tpu_custom_call.1} parent=1 // pred_fallthru
      _
    // Predicated region
    $region10: #{tpu_custom_call.1} parent=1 // pred_check
      _
    $region11: #{tpu_custom_call.1} parent=1 // pred_check_branch
      %28 = sbr.rel (0) target = $region13
    $region12: #{tpu_custom_call.1} parent=1 // pred_region
      _
    $region13: #{tpu_custom_call.1} parent=1 // pred_fallthru
      _
    // Predicated region
    $region14: #{tpu_custom_call.1} parent=1 // pred_check
      _
    $region15: #{tpu_custom_call.1} parent=1 // pred_check_branch
      %30 = sbr.rel (0) target = $region17
    $region16: #{tpu_custom_call.1} parent=1 // pred_region
      _
    $region17: #{tpu_custom_call.1} parent=1 // pred_fallthru
      _
    // Predicated region
    $region18: #{tpu_custom_call.1} parent=1 // pred_check
      _
    $region19: #{tpu_custom_call.1} parent=1 // pred_check_branch
      %32 = sbr.rel (0) target = $region21
    $region20: #{tpu_custom_call.1} parent=1 // pred_region
      _
    $region21: #{tpu_custom_call.1} parent=1 // pred_fallthru
      _
    // Predicated region
    $region22: #{tpu_custom_call.1} parent=1 // pred_check
      _
    $region23: #{tpu_custom_call.1} parent=1 // pred_check_branch
      %34 = sbr.rel (0) target = $region25
    $region24: #{tpu_custom_call.1} parent=1 // pred_region
      _
    $region25: #{tpu_custom_call.1} parent=1 // pred_fallthru
      _
    // Predicated region
    $region26: #{tpu_custom_call.1} parent=1 // pred_check
      _
    $region27: #{tpu_custom_call.1} parent=1 // pred_check_branch
      %36 = sbr.rel (0) target = $region29
    $region28: #{tpu_custom_call.1} parent=1 // pred_region
      %37 = dma.done [#allocation3], 10368
    $region29: #{tpu_custom_call.1} parent=1 // pred_fallthru
      _
    %v38 = vld [vmem:[%s0] sm:$0xff]
    %v39 = vld [vmem:[%s0 + $0x8] sm:$0xff]
    %v40 = vld [vmem:[%s0 + $0x10] sm:$0xff]
    %v41 = vld [vmem:[%s0 + $0x18] sm:$0xff]
    %v42 = vld [vmem:[%s0 + $0x20] sm:$0xff]
    %v43 = vld [vmem:[%s0 + $0x28] sm:$0xff]
    %v44 = vld [vmem:[#allocation2] sm:$0xff]
    %v45 = vmul.f32 %v38, %v44
    %v46 = vmul.f32 %v41, %v44
    %s47 = scalar_lea.vmem [#allocation2], 8
    %v48 = vld [vmem:[%s47] sm:$0xff]
    %50 = vrot.lane.b32.xlu0 %v48, 1
    %v51 = vpop.permute.xlu0 %50
    %v53 = vmul.f32 %v38, %v51
    %v54 = vmul.f32 %v39, %v51
    %v55 = vmul.f32 %v41, %v51
    %v56 = vmul.f32 %v42, %v51
    %61 = vrot.lane.b32.xlu0 %v53, 127
    %v62 = vpop.permute.xlu0 %61
    %63 = vrot.lane.b32.xlu0 %v54, 127
    %v64 = vpop.permute.xlu0 %63
    %65 = vrot.lane.b32.xlu0 %v55, 127
    %v66 = vpop.permute.xlu0 %65
    %67 = vrot.lane.b32.xlu0 %v56, 127
    %v68 = vpop.permute.xlu0 %67
    %vm69 = vcmask 1039360
    %v70 = vsel %vm69, %v62, %v64
    %v71 = vsel %vm69, %v66, %v68
    %v74 = vadd.f32 %v45, %v70
    %v75 = vadd.f32 %v46, %v71
    %s76 = scalar_lea.vmem [#allocation2], 16
    %v77 = vld [vmem:[%s76] sm:$0xff]
    %79 = vrot.lane.b32.xlu0 %v77, 2
    %v80 = vpop.permute.xlu0 %79
    %v82 = vmul.f32 %v38, %v80
    %v83 = vmul.f32 %v39, %v80
    %v84 = vmul.f32 %v41, %v80
    %v85 = vmul.f32 %v42, %v80
    %90 = vrot.lane.b32.xlu0 %v82, 126
    %v91 = vpop.permute.xlu0 %90
    %92 = vrot.lane.b32.xlu0 %v83, 126
    %v93 = vpop.permute.xlu0 %92
    %94 = vrot.lane.b32.xlu0 %v84, 126
    %v95 = vpop.permute.xlu0 %94
    %96 = vrot.lane.b32.xlu0 %v85, 126
    %v97 = vpop.permute.xlu0 %96
    %vm98 = vcmask 1031168
    %v99 = vsel %vm98, %v91, %v93
    %v100 = vsel %vm98, %v95, %v97
    %v103 = vadd.f32 %v74, %v99
    %v104 = vadd.f32 %v75, %v100
    %s105 = scalar_lea.vmem [#allocation2], 24
    %v106 = vld [vmem:[%s105] sm:$0xff]
    %108 = vrot.lane.b32.xlu0 %v106, 3
    %v109 = vpop.permute.xlu0 %108
    %v111 = vmul.f32 %v38, %v109
    %v112 = vmul.f32 %v39, %v109
    %v113 = vmul.f32 %v41, %v109
    %v114 = vmul.f32 %v42, %v109
    %119 = vrot.lane.b32.xlu0 %v111, 125
    %v120 = vpop.permute.xlu0 %119
    %121 = vrot.lane.b32.xlu0 %v112, 125
    %v122 = vpop.permute.xlu0 %121
    %123 = vrot.lane.b32.xlu0 %v113, 125
    %v124 = vpop.permute.xlu0 %123
    %125 = vrot.lane.b32.xlu0 %v114, 125
    %v126 = vpop.permute.xlu0 %125
    %vm127 = vcmask 1022976
    %v128 = vsel %vm127, %v120, %v122
    %v129 = vsel %vm127, %v124, %v126
    %v132 = vadd.f32 %v103, %v128
    %v133 = vadd.f32 %v104, %v129
    %s134 = scalar_lea.vmem [#allocation2], 32
    %v135 = vld [vmem:[%s134] sm:$0xff]
    %137 = vrot.lane.b32.xlu0 %v135, 4
    %v138 = vpop.permute.xlu0 %137
    %v140 = vmul.f32 %v38, %v138
    %v141 = vmul.f32 %v39, %v138
    %v142 = vmul.f32 %v41, %v138
    %v143 = vmul.f32 %v42, %v138
    %148 = vrot.lane.b32.xlu0 %v140, 124
    %v149 = vpop.permute.xlu0 %148
    %150 = vrot.lane.b32.xlu0 %v141, 124
    %v151 = vpop.permute.xlu0 %150
    %152 = vrot.lane.b32.xlu0 %v142, 124
    %v153 = vpop.permute.xlu0 %152
    %154 = vrot.lane.b32.xlu0 %v143, 124
    %v155 = vpop.permute.xlu0 %154
    %vm156 = vcmask 1014784
    %v157 = vsel %vm156, %v149, %v151
    %v158 = vsel %vm156, %v153, %v155
    %v161 = vadd.f32 %v132, %v157
    %v162 = vadd.f32 %v133, %v158
    %s163 = scalar_lea.vmem [#allocation2], 40
    %v164 = vld [vmem:[%s163] sm:$0xff]
    %166 = vrot.lane.b32.xlu0 %v164, 5
    %v167 = vpop.permute.xlu0 %166
    %v169 = vmul.f32 %v38, %v167
    %v170 = vmul.f32 %v39, %v167
    %v171 = vmul.f32 %v41, %v167
    %v172 = vmul.f32 %v42, %v167
    %177 = vrot.lane.b32.xlu0 %v169, 123
    %v178 = vpop.permute.xlu0 %177
    %179 = vrot.lane.b32.xlu0 %v170, 123
    %v180 = vpop.permute.xlu0 %179
    %181 = vrot.lane.b32.xlu0 %v171, 123
    %v182 = vpop.permute.xlu0 %181
    %183 = vrot.lane.b32.xlu0 %v172, 123
    %v184 = vpop.permute.xlu0 %183
    %vm185 = vcmask 1006592
    %v186 = vsel %vm185, %v178, %v180
    %v187 = vsel %vm185, %v182, %v184
    %v190 = vadd.f32 %v161, %v186
    %v191 = vadd.f32 %v162, %v187
    %s192 = scalar_lea.vmem [#allocation2], 48
    %v193 = vld [vmem:[%s192] sm:$0xff]
    %195 = vrot.lane.b32.xlu0 %v193, 6
    %v196 = vpop.permute.xlu0 %195
    %v198 = vmul.f32 %v38, %v196
    %v199 = vmul.f32 %v39, %v196
    %v200 = vmul.f32 %v41, %v196
    %v201 = vmul.f32 %v42, %v196
    %206 = vrot.lane.b32.xlu0 %v198, 122
    %v207 = vpop.permute.xlu0 %206
    %208 = vrot.lane.b32.xlu0 %v199, 122
    %v209 = vpop.permute.xlu0 %208
    %210 = vrot.lane.b32.xlu0 %v200, 122
    %v211 = vpop.permute.xlu0 %210
    %212 = vrot.lane.b32.xlu0 %v201, 122
    %v213 = vpop.permute.xlu0 %212
    %vm214 = vcmask 998400
    %v215 = vsel %vm214, %v207, %v209
    %v216 = vsel %vm214, %v211, %v213
    %v219 = vadd.f32 %v190, %v215
    %v220 = vadd.f32 %v191, %v216
    %s221 = scalar_lea.vmem [#allocation2], 56
    %v222 = vld [vmem:[%s221] sm:$0xff]
    %224 = vrot.lane.b32.xlu0 %v222, 7
    %v225 = vpop.permute.xlu0 %224
    %v227 = vmul.f32 %v38, %v225
    %v228 = vmul.f32 %v39, %v225
    %v229 = vmul.f32 %v41, %v225
    %v230 = vmul.f32 %v42, %v225
    %235 = vrot.lane.b32.xlu0 %v227, 121
    %v236 = vpop.permute.xlu0 %235
    %237 = vrot.lane.b32.xlu0 %v228, 121
    %v238 = vpop.permute.xlu0 %237
    %239 = vrot.lane.b32.xlu0 %v229, 121
    %v240 = vpop.permute.xlu0 %239
    %241 = vrot.lane.b32.xlu0 %v230, 121
    %v242 = vpop.permute.xlu0 %241
    %vm243 = vcmask 990208
    %v244 = vsel %vm243, %v236, %v238
    %v245 = vsel %vm243, %v240, %v242
    %v248 = vadd.f32 %v219, %v244
    %v249 = vadd.f32 %v220, %v245
    %s250 = scalar_lea.vmem [#allocation2], 64
    %v251 = vld [vmem:[%s250] sm:$0xff]
    %253 = vrot.lane.b32.xlu0 %v251, 8
    %v254 = vpop.permute.xlu0 %253
    %v256 = vmul.f32 %v38, %v254
    %v257 = vmul.f32 %v39, %v254
    %v258 = vmul.f32 %v41, %v254
    %v259 = vmul.f32 %v42, %v254
    %264 = vrot.lane.b32.xlu0 %v256, 120
    %v265 = vpop.permute.xlu0 %264
    %266 = vrot.lane.b32.xlu0 %v257, 120
    %v267 = vpop.permute.xlu0 %266
    %268 = vrot.lane.b32.xlu0 %v258, 120
    %v269 = vpop.permute.xlu0 %268
    %270 = vrot.lane.b32.xlu0 %v259, 120
    %v271 = vpop.permute.xlu0 %270
    %vm272 = vcmask 982016
    %v273 = vsel %vm272, %v265, %v267
    %v274 = vsel %vm272, %v269, %v271
    %v277 = vadd.f32 %v248, %v273
    %v278 = vadd.f32 %v249, %v274
    %s279 = scalar_lea.vmem [#allocation2], 72
    %v280 = vld [vmem:[%s279] sm:$0xff]
    %282 = vrot.lane.b32.xlu0 %v280, 16
    %v283 = vpop.permute.xlu0 %282
    %v285 = vmul.f32 %v38, %v283
    %v286 = vmul.f32 %v39, %v283
    %v287 = vmul.f32 %v41, %v283
    %v288 = vmul.f32 %v42, %v283
    %293 = vrot.lane.b32.xlu0 %v285, 112
    %v294 = vpop.permute.xlu0 %293
    %295 = vrot.lane.b32.xlu0 %v286, 112
    %v296 = vpop.permute.xlu0 %295
    %297 = vrot.lane.b32.xlu0 %v287, 112
    %v298 = vpop.permute.xlu0 %297
    %299 = vrot.lane.b32.xlu0 %v288, 112
    %v300 = vpop.permute.xlu0 %299
    %vm301 = vcmask 916480
    %v302 = vsel %vm301, %v294, %v296
    %v303 = vsel %vm301, %v298, %v300
    %v306 = vadd.f32 %v277, %v302
    %v307 = vadd.f32 %v278, %v303
    %s308 = scalar_lea.vmem [#allocation2], 80
    %v309 = vld [vmem:[%s308] sm:$0xff]
    %311 = vrot.lane.b32.xlu0 %v309, 17
    %v312 = vpop.permute.xlu0 %311
    %v314 = vmul.f32 %v38, %v312
    %v315 = vmul.f32 %v39, %v312
    %v316 = vmul.f32 %v41, %v312
    %v317 = vmul.f32 %v42, %v312
    %322 = vrot.lane.b32.xlu0 %v314, 111
    %v323 = vpop.permute.xlu0 %322
    %324 = vrot.lane.b32.xlu0 %v315, 111
    %v325 = vpop.permute.xlu0 %324
    %326 = vrot.lane.b32.xlu0 %v316, 111
    %v327 = vpop.permute.xlu0 %326
    %328 = vrot.lane.b32.xlu0 %v317, 111
    %v329 = vpop.permute.xlu0 %328
    %vm330 = vcmask 908288
    %v331 = vsel %vm330, %v323, %v325
    %v332 = vsel %vm330, %v327, %v329
    %v335 = vadd.f32 %v306, %v331
    %v336 = vadd.f32 %v307, %v332
    %s337 = scalar_lea.vmem [#allocation2], 88
    %v338 = vld [vmem:[%s337] sm:$0xff]
    %340 = vrot.lane.b32.xlu0 %v338, 18
    %v341 = vpop.permute.xlu0 %340
    %v343 = vmul.f32 %v38, %v341
    %v344 = vmul.f32 %v39, %v341
    %v345 = vmul.f32 %v41, %v341
    %v346 = vmul.f32 %v42, %v341
    %351 = vrot.lane.b32.xlu0 %v343, 110
    %v352 = vpop.permute.xlu0 %351
    %353 = vrot.lane.b32.xlu0 %v344, 110
    %v354 = vpop.permute.xlu0 %353
    %355 = vrot.lane.b32.xlu0 %v345, 110
    %v356 = vpop.permute.xlu0 %355
    %357 = vrot.lane.b32.xlu0 %v346, 110
    %v358 = vpop.permute.xlu0 %357
    %vm359 = vcmask 900096
    %v360 = vsel %vm359, %v352, %v354
    %v361 = vsel %vm359, %v356, %v358
    %v364 = vadd.f32 %v335, %v360
    %v365 = vadd.f32 %v336, %v361
    %s366 = scalar_lea.vmem [#allocation2], 96
    %v367 = vld [vmem:[%s366] sm:$0xff]
    %369 = vrot.lane.b32.xlu0 %v367, 19
    %v370 = vpop.permute.xlu0 %369
    %v372 = vmul.f32 %v38, %v370
    %v373 = vmul.f32 %v39, %v370
    %v374 = vmul.f32 %v41, %v370
    %v375 = vmul.f32 %v42, %v370
    %380 = vrot.lane.b32.xlu0 %v372, 109
    %v381 = vpop.permute.xlu0 %380
    %382 = vrot.lane.b32.xlu0 %v373, 109
    %v383 = vpop.permute.xlu0 %382
    %384 = vrot.lane.b32.xlu0 %v374, 109
    %v385 = vpop.permute.xlu0 %384
    %386 = vrot.lane.b32.xlu0 %v375, 109
    %v387 = vpop.permute.xlu0 %386
    %vm388 = vcmask 891904
    %v389 = vsel %vm388, %v381, %v383
    %v390 = vsel %vm388, %v385, %v387
    %v393 = vadd.f32 %v364, %v389
    %v394 = vadd.f32 %v365, %v390
    %s395 = scalar_lea.vmem [#allocation2], 104
    %v396 = vld [vmem:[%s395] sm:$0xff]
    %398 = vrot.lane.b32.xlu0 %v396, 20
    %v399 = vpop.permute.xlu0 %398
    %v401 = vmul.f32 %v38, %v399
    %v402 = vmul.f32 %v39, %v399
    %v403 = vmul.f32 %v41, %v399
    %v404 = vmul.f32 %v42, %v399
    %409 = vrot.lane.b32.xlu0 %v401, 108
    %v410 = vpop.permute.xlu0 %409
    %411 = vrot.lane.b32.xlu0 %v402, 108
    %v412 = vpop.permute.xlu0 %411
    %413 = vrot.lane.b32.xlu0 %v403, 108
    %v414 = vpop.permute.xlu0 %413
    %415 = vrot.lane.b32.xlu0 %v404, 108
    %v416 = vpop.permute.xlu0 %415
    %vm417 = vcmask 883712
    %v418 = vsel %vm417, %v410, %v412
    %v419 = vsel %vm417, %v414, %v416
    %v422 = vadd.f32 %v393, %v418
    %v423 = vadd.f32 %v394, %v419
    %s424 = scalar_lea.vmem [#allocation2], 112
    %v425 = vld [vmem:[%s424] sm:$0xff]
    %427 = vrot.lane.b32.xlu0 %v425, 21
    %v428 = vpop.permute.xlu0 %427
    %v430 = vmul.f32 %v38, %v428
    %v431 = vmul.f32 %v39, %v428
    %v432 = vmul.f32 %v41, %v428
    %v433 = vmul.f32 %v42, %v428
    %438 = vrot.lane.b32.xlu0 %v430, 107
    %v439 = vpop.permute.xlu0 %438
    %440 = vrot.lane.b32.xlu0 %v431, 107
    %v441 = vpop.permute.xlu0 %440
    %442 = vrot.lane.b32.xlu0 %v432, 107
    %v443 = vpop.permute.xlu0 %442
    %444 = vrot.lane.b32.xlu0 %v433, 107
    %v445 = vpop.permute.xlu0 %444
    %vm446 = vcmask 875520
    %v447 = vsel %vm446, %v439, %v441
    %v448 = vsel %vm446, %v443, %v445
    %v451 = vadd.f32 %v422, %v447
    %v452 = vadd.f32 %v423, %v448
    %s453 = scalar_lea.vmem [#allocation2], 120
    %v454 = vld [vmem:[%s453] sm:$0xff]
    %456 = vrot.lane.b32.xlu0 %v454, 22
    %v457 = vpop.permute.xlu0 %456
    %v459 = vmul.f32 %v38, %v457
    %v460 = vmul.f32 %v39, %v457
    %v461 = vmul.f32 %v41, %v457
    %v462 = vmul.f32 %v42, %v457
    %467 = vrot.lane.b32.xlu0 %v459, 106
    %v468 = vpop.permute.xlu0 %467
    %469 = vrot.lane.b32.xlu0 %v460, 106
    %v470 = vpop.permute.xlu0 %469
    %471 = vrot.lane.b32.xlu0 %v461, 106
    %v472 = vpop.permute.xlu0 %471
    %473 = vrot.lane.b32.xlu0 %v462, 106
    %v474 = vpop.permute.xlu0 %473
    %vm475 = vcmask 867328
    %v476 = vsel %vm475, %v468, %v470
    %v477 = vsel %vm475, %v472, %v474
    %v480 = vadd.f32 %v451, %v476
    %v481 = vadd.f32 %v452, %v477
    %s482 = scalar_lea.vmem [#allocation2], 128
    %v483 = vld [vmem:[%s482] sm:$0xff]
    %485 = vrot.lane.b32.xlu0 %v483, 23
    %v486 = vpop.permute.xlu0 %485
    %v488 = vmul.f32 %v38, %v486
    %v489 = vmul.f32 %v39, %v486
    %v490 = vmul.f32 %v41, %v486
    %v491 = vmul.f32 %v42, %v486
    %496 = vrot.lane.b32.xlu0 %v488, 105
    %v497 = vpop.permute.xlu0 %496
    %498 = vrot.lane.b32.xlu0 %v489, 105
    %v499 = vpop.permute.xlu0 %498
    %500 = vrot.lane.b32.xlu0 %v490, 105
    %v501 = vpop.permute.xlu0 %500
    %502 = vrot.lane.b32.xlu0 %v491, 105
    %v503 = vpop.permute.xlu0 %502
    %vm504 = vcmask 859136
    %v505 = vsel %vm504, %v497, %v499
    %v506 = vsel %vm504, %v501, %v503
    %v509 = vadd.f32 %v480, %v505
    %v510 = vadd.f32 %v481, %v506
    %s511 = scalar_lea.vmem [#allocation2], 136
    %v512 = vld [vmem:[%s511] sm:$0xff]
    %514 = vrot.lane.b32.xlu0 %v512, 24
    %v515 = vpop.permute.xlu0 %514
    %v517 = vmul.f32 %v38, %v515
    %v518 = vmul.f32 %v39, %v515
    %v519 = vmul.f32 %v41, %v515
    %v520 = vmul.f32 %v42, %v515
    %525 = vrot.lane.b32.xlu0 %v517, 104
    %v526 = vpop.permute.xlu0 %525
    %527 = vrot.lane.b32.xlu0 %v518, 104
    %v528 = vpop.permute.xlu0 %527
    %529 = vrot.lane.b32.xlu0 %v519, 104
    %v530 = vpop.permute.xlu0 %529
    %531 = vrot.lane.b32.xlu0 %v520, 104
    %v532 = vpop.permute.xlu0 %531
    %vm533 = vcmask 850944
    %v534 = vsel %vm533, %v526, %v528
    %v535 = vsel %vm533, %v530, %v532
    %v538 = vadd.f32 %v509, %v534
    %v539 = vadd.f32 %v510, %v535
    %s540 = scalar_lea.vmem [#allocation2], 144
    %v541 = vld [vmem:[%s540] sm:$0xff]
    %543 = vrot.lane.b32.xlu0 %v541, 32
    %v544 = vpop.permute.xlu0 %543
    %v546 = vmul.f32 %v38, %v544
    %v547 = vmul.f32 %v39, %v544
    %v548 = vmul.f32 %v41, %v544
    %v549 = vmul.f32 %v42, %v544
    %554 = vrot.lane.b32.xlu0 %v546, 96
    %v555 = vpop.permute.xlu0 %554
    %556 = vrot.lane.b32.xlu0 %v547, 96
    %v557 = vpop.permute.xlu0 %556
    %558 = vrot.lane.b32.xlu0 %v548, 96
    %v559 = vpop.permute.xlu0 %558
    %560 = vrot.lane.b32.xlu0 %v549, 96
    %v561 = vpop.permute.xlu0 %560
    %vm562 = vcmask 785408
    %v563 = vsel %vm562, %v555, %v557
    %v564 = vsel %vm562, %v559, %v561
    %v567 = vadd.f32 %v538, %v563
    %v568 = vadd.f32 %v539, %v564
    %s569 = scalar_lea.vmem [#allocation2], 152
    %v570 = vld [vmem:[%s569] sm:$0xff]
    %572 = vrot.lane.b32.xlu0 %v570, 33
    %v573 = vpop.permute.xlu0 %572
    %v575 = vmul.f32 %v38, %v573
    %v576 = vmul.f32 %v39, %v573
    %v577 = vmul.f32 %v41, %v573
    %v578 = vmul.f32 %v42, %v573
    %583 = vrot.lane.b32.xlu0 %v575, 95
    %v584 = vpop.permute.xlu0 %583
    %585 = vrot.lane.b32.xlu0 %v576, 95
    %v586 = vpop.permute.xlu0 %585
    %587 = vrot.lane.b32.xlu0 %v577, 95
    %v588 = vpop.permute.xlu0 %587
    %589 = vrot.lane.b32.xlu0 %v578, 95
    %v590 = vpop.permute.xlu0 %589
    %vm591 = vcmask 777216
    %v592 = vsel %vm591, %v584, %v586
    %v593 = vsel %vm591, %v588, %v590
    %v596 = vadd.f32 %v567, %v592
    %v597 = vadd.f32 %v568, %v593
    %s598 = scalar_lea.vmem [#allocation2], 160
    %v599 = vld [vmem:[%s598] sm:$0xff]
    %601 = vrot.lane.b32.xlu0 %v599, 34
    %v602 = vpop.permute.xlu0 %601
    %v604 = vmul.f32 %v38, %v602
    %v605 = vmul.f32 %v39, %v602
    %v606 = vmul.f32 %v41, %v602
    %v607 = vmul.f32 %v42, %v602
    %612 = vrot.lane.b32.xlu0 %v604, 94
    %v613 = vpop.permute.xlu0 %612
    %614 = vrot.lane.b32.xlu0 %v605, 94
    %v615 = vpop.permute.xlu0 %614
    %616 = vrot.lane.b32.xlu0 %v606, 94
    %v617 = vpop.permute.xlu0 %616
    %618 = vrot.lane.b32.xlu0 %v607, 94
    %v619 = vpop.permute.xlu0 %618
    %vm620 = vcmask 769024
    %v621 = vsel %vm620, %v613, %v615
    %v622 = vsel %vm620, %v617, %v619
    %v625 = vadd.f32 %v596, %v621
    %v626 = vadd.f32 %v597, %v622
    %s627 = scalar_lea.vmem [#allocation2], 168
    %v628 = vld [vmem:[%s627] sm:$0xff]
    %630 = vrot.lane.b32.xlu0 %v628, 35
    %v631 = vpop.permute.xlu0 %630
    %v633 = vmul.f32 %v38, %v631
    %v634 = vmul.f32 %v39, %v631
    %v635 = vmul.f32 %v41, %v631
    %v636 = vmul.f32 %v42, %v631
    %641 = vrot.lane.b32.xlu0 %v633, 93
    %v642 = vpop.permute.xlu0 %641
    %643 = vrot.lane.b32.xlu0 %v634, 93
    %v644 = vpop.permute.xlu0 %643
    %645 = vrot.lane.b32.xlu0 %v635, 93
    %v646 = vpop.permute.xlu0 %645
    %647 = vrot.lane.b32.xlu0 %v636, 93
    %v648 = vpop.permute.xlu0 %647
    %vm649 = vcmask 760832
    %v650 = vsel %vm649, %v642, %v644
    %v651 = vsel %vm649, %v646, %v648
    %v654 = vadd.f32 %v625, %v650
    %v655 = vadd.f32 %v626, %v651
    %s656 = scalar_lea.vmem [#allocation2], 176
    %v657 = vld [vmem:[%s656] sm:$0xff]
    %659 = vrot.lane.b32.xlu0 %v657, 36
    %v660 = vpop.permute.xlu0 %659
    %v662 = vmul.f32 %v38, %v660
    %v663 = vmul.f32 %v39, %v660
    %v664 = vmul.f32 %v41, %v660
    %v665 = vmul.f32 %v42, %v660
    %670 = vrot.lane.b32.xlu0 %v662, 92
    %v671 = vpop.permute.xlu0 %670
    %672 = vrot.lane.b32.xlu0 %v663, 92
    %v673 = vpop.permute.xlu0 %672
    %674 = vrot.lane.b32.xlu0 %v664, 92
    %v675 = vpop.permute.xlu0 %674
    %676 = vrot.lane.b32.xlu0 %v665, 92
    %v677 = vpop.permute.xlu0 %676
    %vm678 = vcmask 752640
    %v679 = vsel %vm678, %v671, %v673
    %v680 = vsel %vm678, %v675, %v677
    %v683 = vadd.f32 %v654, %v679
    %v684 = vadd.f32 %v655, %v680
    %s685 = scalar_lea.vmem [#allocation2], 184
    %v686 = vld [vmem:[%s685] sm:$0xff]
    %688 = vrot.lane.b32.xlu0 %v686, 37
    %v689 = vpop.permute.xlu0 %688
    %v691 = vmul.f32 %v38, %v689
    %v692 = vmul.f32 %v39, %v689
    %v693 = vmul.f32 %v41, %v689
    %v694 = vmul.f32 %v42, %v689
    %699 = vrot.lane.b32.xlu0 %v691, 91
    %v700 = vpop.permute.xlu0 %699
    %701 = vrot.lane.b32.xlu0 %v692, 91
    %v702 = vpop.permute.xlu0 %701
    %703 = vrot.lane.b32.xlu0 %v693, 91
    %v704 = vpop.permute.xlu0 %703
    %705 = vrot.lane.b32.xlu0 %v694, 91
    %v706 = vpop.permute.xlu0 %705
    %vm707 = vcmask 744448
    %v708 = vsel %vm707, %v700, %v702
    %v709 = vsel %vm707, %v704, %v706
    %v712 = vadd.f32 %v683, %v708
    %v713 = vadd.f32 %v684, %v709
    %s714 = scalar_lea.vmem [#allocation2], 192
    %v715 = vld [vmem:[%s714] sm:$0xff]
    %717 = vrot.lane.b32.xlu0 %v715, 38
    %v718 = vpop.permute.xlu0 %717
    %v720 = vmul.f32 %v38, %v718
    %v721 = vmul.f32 %v39, %v718
    %v722 = vmul.f32 %v41, %v718
    %v723 = vmul.f32 %v42, %v718
    %728 = vrot.lane.b32.xlu0 %v720, 90
    %v729 = vpop.permute.xlu0 %728
    %730 = vrot.lane.b32.xlu0 %v721, 90
    %v731 = vpop.permute.xlu0 %730
    %732 = vrot.lane.b32.xlu0 %v722, 90
    %v733 = vpop.permute.xlu0 %732
    %734 = vrot.lane.b32.xlu0 %v723, 90
    %v735 = vpop.permute.xlu0 %734
    %vm736 = vcmask 736256
    %v737 = vsel %vm736, %v729, %v731
    %v738 = vsel %vm736, %v733, %v735
    %v741 = vadd.f32 %v712, %v737
    %v742 = vadd.f32 %v713, %v738
    %s743 = scalar_lea.vmem [#allocation2], 200
    %v744 = vld [vmem:[%s743] sm:$0xff]
    %746 = vrot.lane.b32.xlu0 %v744, 39
    %v747 = vpop.permute.xlu0 %746
    %v749 = vmul.f32 %v38, %v747
    %v750 = vmul.f32 %v39, %v747
    %v751 = vmul.f32 %v41, %v747
    %v752 = vmul.f32 %v42, %v747
    %757 = vrot.lane.b32.xlu0 %v749, 89
    %v758 = vpop.permute.xlu0 %757
    %759 = vrot.lane.b32.xlu0 %v750, 89
    %v760 = vpop.permute.xlu0 %759
    %761 = vrot.lane.b32.xlu0 %v751, 89
    %v762 = vpop.permute.xlu0 %761
    %763 = vrot.lane.b32.xlu0 %v752, 89
    %v764 = vpop.permute.xlu0 %763
    %vm765 = vcmask 728064
    %v766 = vsel %vm765, %v758, %v760
    %v767 = vsel %vm765, %v762, %v764
    %v770 = vadd.f32 %v741, %v766
    %v771 = vadd.f32 %v742, %v767
    %s772 = scalar_lea.vmem [#allocation2], 208
    %v773 = vld [vmem:[%s772] sm:$0xff]
    %775 = vrot.lane.b32.xlu0 %v773, 40
    %v776 = vpop.permute.xlu0 %775
    %v778 = vmul.f32 %v38, %v776
    %v779 = vmul.f32 %v39, %v776
    %v780 = vmul.f32 %v41, %v776
    %v781 = vmul.f32 %v42, %v776
    %786 = vrot.lane.b32.xlu0 %v778, 88
    %v787 = vpop.permute.xlu0 %786
    %788 = vrot.lane.b32.xlu0 %v779, 88
    %v789 = vpop.permute.xlu0 %788
    %790 = vrot.lane.b32.xlu0 %v780, 88
    %v791 = vpop.permute.xlu0 %790
    %792 = vrot.lane.b32.xlu0 %v781, 88
    %v793 = vpop.permute.xlu0 %792
    %vm794 = vcmask 719872
    %v795 = vsel %vm794, %v787, %v789
    %v796 = vsel %vm794, %v791, %v793
    %v799 = vadd.f32 %v770, %v795
    %v800 = vadd.f32 %v771, %v796
    %s801 = scalar_lea.vmem [#allocation2], 216
    %v802 = vld [vmem:[%s801] sm:$0xff]
    %804 = vrot.lane.b32.xlu0 %v802, 48
    %v805 = vpop.permute.xlu0 %804
    %v807 = vmul.f32 %v38, %v805
    %v808 = vmul.f32 %v39, %v805
    %v809 = vmul.f32 %v41, %v805
    %v810 = vmul.f32 %v42, %v805
    %815 = vrot.lane.b32.xlu0 %v807, 80
    %v816 = vpop.permute.xlu0 %815
    %817 = vrot.lane.b32.xlu0 %v808, 80
    %v818 = vpop.permute.xlu0 %817
    %819 = vrot.lane.b32.xlu0 %v809, 80
    %v820 = vpop.permute.xlu0 %819
    %821 = vrot.lane.b32.xlu0 %v810, 80
    %v822 = vpop.permute.xlu0 %821
    %vm823 = vcmask 654336
    %v824 = vsel %vm823, %v816, %v818
    %v825 = vsel %vm823, %v820, %v822
    %v828 = vadd.f32 %v799, %v824
    %v829 = vadd.f32 %v800, %v825
    %s830 = scalar_lea.vmem [#allocation2], 224
    %v831 = vld [vmem:[%s830] sm:$0xff]
    %833 = vrot.lane.b32.xlu0 %v831, 49
    %v834 = vpop.permute.xlu0 %833
    %v836 = vmul.f32 %v38, %v834
    %v837 = vmul.f32 %v39, %v834
    %v838 = vmul.f32 %v41, %v834
    %v839 = vmul.f32 %v42, %v834
    %844 = vrot.lane.b32.xlu0 %v836, 79
    %v845 = vpop.permute.xlu0 %844
    %846 = vrot.lane.b32.xlu0 %v837, 79
    %v847 = vpop.permute.xlu0 %846
    %848 = vrot.lane.b32.xlu0 %v838, 79
    %v849 = vpop.permute.xlu0 %848
    %850 = vrot.lane.b32.xlu0 %v839, 79
    %v851 = vpop.permute.xlu0 %850
    %vm852 = vcmask 646144
    %v853 = vsel %vm852, %v845, %v847
    %v854 = vsel %vm852, %v849, %v851
    %v857 = vadd.f32 %v828, %v853
    %v858 = vadd.f32 %v829, %v854
    %s859 = scalar_lea.vmem [#allocation2], 232
    %v860 = vld [vmem:[%s859] sm:$0xff]
    %862 = vrot.lane.b32.xlu0 %v860, 50
    %v863 = vpop.permute.xlu0 %862
    %v865 = vmul.f32 %v38, %v863
    %v866 = vmul.f32 %v39, %v863
    %v867 = vmul.f32 %v41, %v863
    %v868 = vmul.f32 %v42, %v863
    %873 = vrot.lane.b32.xlu0 %v865, 78
    %v874 = vpop.permute.xlu0 %873
    %875 = vrot.lane.b32.xlu0 %v866, 78
    %v876 = vpop.permute.xlu0 %875
    %877 = vrot.lane.b32.xlu0 %v867, 78
    %v878 = vpop.permute.xlu0 %877
    %879 = vrot.lane.b32.xlu0 %v868, 78
    %v880 = vpop.permute.xlu0 %879
    %vm881 = vcmask 637952
    %v882 = vsel %vm881, %v874, %v876
    %v883 = vsel %vm881, %v878, %v880
    %v886 = vadd.f32 %v857, %v882
    %v887 = vadd.f32 %v858, %v883
    %s888 = scalar_lea.vmem [#allocation2], 240
    %v889 = vld [vmem:[%s888] sm:$0xff]
    %891 = vrot.lane.b32.xlu0 %v889, 51
    %v892 = vpop.permute.xlu0 %891
    %v894 = vmul.f32 %v38, %v892
    %v895 = vmul.f32 %v39, %v892
    %v896 = vmul.f32 %v41, %v892
    %v897 = vmul.f32 %v42, %v892
    %902 = vrot.lane.b32.xlu0 %v894, 77
    %v903 = vpop.permute.xlu0 %902
    %904 = vrot.lane.b32.xlu0 %v895, 77
    %v905 = vpop.permute.xlu0 %904
    %906 = vrot.lane.b32.xlu0 %v896, 77
    %v907 = vpop.permute.xlu0 %906
    %908 = vrot.lane.b32.xlu0 %v897, 77
    %v909 = vpop.permute.xlu0 %908
    %vm910 = vcmask 629760
    %v911 = vsel %vm910, %v903, %v905
    %v912 = vsel %vm910, %v907, %v909
    %v915 = vadd.f32 %v886, %v911
    %v916 = vadd.f32 %v887, %v912
    %s917 = scalar_lea.vmem [#allocation2], 248
    %v918 = vld [vmem:[%s917] sm:$0xff]
    %920 = vrot.lane.b32.xlu0 %v918, 52
    %v921 = vpop.permute.xlu0 %920
    %v923 = vmul.f32 %v38, %v921
    %v924 = vmul.f32 %v39, %v921
    %v925 = vmul.f32 %v41, %v921
    %v926 = vmul.f32 %v42, %v921
    %931 = vrot.lane.b32.xlu0 %v923, 76
    %v932 = vpop.permute.xlu0 %931
    %933 = vrot.lane.b32.xlu0 %v924, 76
    %v934 = vpop.permute.xlu0 %933
    %935 = vrot.lane.b32.xlu0 %v925, 76
    %v936 = vpop.permute.xlu0 %935
    %937 = vrot.lane.b32.xlu0 %v926, 76
    %v938 = vpop.permute.xlu0 %937
    %vm939 = vcmask 621568
    %v940 = vsel %vm939, %v932, %v934
    %v941 = vsel %vm939, %v936, %v938
    %v944 = vadd.f32 %v915, %v940
    %v945 = vadd.f32 %v916, %v941
    %s946 = scalar_lea.vmem [#allocation2], 256
    %v947 = vld [vmem:[%s946] sm:$0xff]
    %949 = vrot.lane.b32.xlu0 %v947, 53
    %v950 = vpop.permute.xlu0 %949
    %v952 = vmul.f32 %v38, %v950
    %v953 = vmul.f32 %v39, %v950
    %v954 = vmul.f32 %v41, %v950
    %v955 = vmul.f32 %v42, %v950
    %960 = vrot.lane.b32.xlu0 %v952, 75
    %v961 = vpop.permute.xlu0 %960
    %962 = vrot.lane.b32.xlu0 %v953, 75
    %v963 = vpop.permute.xlu0 %962
    %964 = vrot.lane.b32.xlu0 %v954, 75
    %v965 = vpop.permute.xlu0 %964
    %966 = vrot.lane.b32.xlu0 %v955, 75
    %v967 = vpop.permute.xlu0 %966
    %vm968 = vcmask 613376
    %v969 = vsel %vm968, %v961, %v963
    %v970 = vsel %vm968, %v965, %v967
    %v973 = vadd.f32 %v944, %v969
    %v974 = vadd.f32 %v945, %v970
    %s975 = scalar_lea.vmem [#allocation2], 264
    %v976 = vld [vmem:[%s975] sm:$0xff]
    %978 = vrot.lane.b32.xlu0 %v976, 54
    %v979 = vpop.permute.xlu0 %978
    %v981 = vmul.f32 %v38, %v979
    %v982 = vmul.f32 %v39, %v979
    %v983 = vmul.f32 %v41, %v979
    %v984 = vmul.f32 %v42, %v979
    %989 = vrot.lane.b32.xlu0 %v981, 74
    %v990 = vpop.permute.xlu0 %989
    %991 = vrot.lane.b32.xlu0 %v982, 74
    %v992 = vpop.permute.xlu0 %991
    %993 = vrot.lane.b32.xlu0 %v983, 74
    %v994 = vpop.permute.xlu0 %993
    %995 = vrot.lane.b32.xlu0 %v984, 74
    %v996 = vpop.permute.xlu0 %995
    %vm997 = vcmask 605184
    %v998 = vsel %vm997, %v990, %v992
    %v999 = vsel %vm997, %v994, %v996
    %v1002 = vadd.f32 %v973, %v998
    %v1003 = vadd.f32 %v974, %v999
    %s1004 = scalar_lea.vmem [#allocation2], 272
    %v1005 = vld [vmem:[%s1004] sm:$0xff]
    %1007 = vrot.lane.b32.xlu0 %v1005, 55
    %v1008 = vpop.permute.xlu0 %1007
    %v1010 = vmul.f32 %v38, %v1008
    %v1011 = vmul.f32 %v39, %v1008
    %v1012 = vmul.f32 %v41, %v1008
    %v1013 = vmul.f32 %v42, %v1008
    %1018 = vrot.lane.b32.xlu0 %v1010, 73
    %v1019 = vpop.permute.xlu0 %1018
    %1020 = vrot.lane.b32.xlu0 %v1011, 73
    %v1021 = vpop.permute.xlu0 %1020
    %1022 = vrot.lane.b32.xlu0 %v1012, 73
    %v1023 = vpop.permute.xlu0 %1022
    %1024 = vrot.lane.b32.xlu0 %v1013, 73
    %v1025 = vpop.permute.xlu0 %1024
    %vm1026 = vcmask 596992
    %v1027 = vsel %vm1026, %v1019, %v1021
    %v1028 = vsel %vm1026, %v1023, %v1025
    %v1031 = vadd.f32 %v1002, %v1027
    %v1032 = vadd.f32 %v1003, %v1028
    %s1033 = scalar_lea.vmem [#allocation2], 280
    %v1034 = vld [vmem:[%s1033] sm:$0xff]
    %1036 = vrot.lane.b32.xlu0 %v1034, 56
    %v1037 = vpop.permute.xlu0 %1036
    %v1039 = vmul.f32 %v38, %v1037
    %v1040 = vmul.f32 %v39, %v1037
    %v1041 = vmul.f32 %v41, %v1037
    %v1042 = vmul.f32 %v42, %v1037
    %1047 = vrot.lane.b32.xlu0 %v1039, 72
    %v1048 = vpop.permute.xlu0 %1047
    %1049 = vrot.lane.b32.xlu0 %v1040, 72
    %v1050 = vpop.permute.xlu0 %1049
    %1051 = vrot.lane.b32.xlu0 %v1041, 72
    %v1052 = vpop.permute.xlu0 %1051
    %1053 = vrot.lane.b32.xlu0 %v1042, 72
    %v1054 = vpop.permute.xlu0 %1053
    %vm1055 = vcmask 588800
    %v1056 = vsel %vm1055, %v1048, %v1050
    %v1057 = vsel %vm1055, %v1052, %v1054
    %v1060 = vadd.f32 %v1031, %v1056
    %v1061 = vadd.f32 %v1032, %v1057
    %s1062 = scalar_lea.vmem [#allocation2], 288
    %v1063 = vld [vmem:[%s1062] sm:$0xff]
    %1065 = vrot.lane.b32.xlu0 %v1063, 64
    %v1066 = vpop.permute.xlu0 %1065
    %v1068 = vmul.f32 %v38, %v1066
    %v1069 = vmul.f32 %v39, %v1066
    %v1070 = vmul.f32 %v41, %v1066
    %v1071 = vmul.f32 %v42, %v1066
    %1076 = vrot.lane.b32.xlu0 %v1068, 64
    %v1077 = vpop.permute.xlu0 %1076
    %1078 = vrot.lane.b32.xlu0 %v1069, 64
    %v1079 = vpop.permute.xlu0 %1078
    %1080 = vrot.lane.b32.xlu0 %v1070, 64
    %v1081 = vpop.permute.xlu0 %1080
    %1082 = vrot.lane.b32.xlu0 %v1071, 64
    %v1083 = vpop.permute.xlu0 %1082
    %vm1084 = vcmask 523264
    %v1085 = vsel %vm1084, %v1077, %v1079
    %v1086 = vsel %vm1084, %v1081, %v1083
    %v1089 = vadd.f32 %v1060, %v1085
    %v1090 = vadd.f32 %v1061, %v1086
    %s1091 = scalar_lea.vmem [#allocation2], 296
    %v1092 = vld [vmem:[%s1091] sm:$0xff]
    %1094 = vrot.lane.b32.xlu0 %v1092, 65
    %v1095 = vpop.permute.xlu0 %1094
    %v1097 = vmul.f32 %v38, %v1095
    %v1098 = vmul.f32 %v39, %v1095
    %v1099 = vmul.f32 %v41, %v1095
    %v1100 = vmul.f32 %v42, %v1095
    %1105 = vrot.lane.b32.xlu0 %v1097, 63
    %v1106 = vpop.permute.xlu0 %1105
    %1107 = vrot.lane.b32.xlu0 %v1098, 63
    %v1108 = vpop.permute.xlu0 %1107
    %1109 = vrot.lane.b32.xlu0 %v1099, 63
    %v1110 = vpop.permute.xlu0 %1109
    %1111 = vrot.lane.b32.xlu0 %v1100, 63
    %v1112 = vpop.permute.xlu0 %1111
    %vm1113 = vcmask 515072
    %v1114 = vsel %vm1113, %v1106, %v1108
    %v1115 = vsel %vm1113, %v1110, %v1112
    %v1118 = vadd.f32 %v1089, %v1114
    %v1119 = vadd.f32 %v1090, %v1115
    %s1120 = scalar_lea.vmem [#allocation2], 304
    %v1121 = vld [vmem:[%s1120] sm:$0xff]
    %1123 = vrot.lane.b32.xlu0 %v1121, 66
    %v1124 = vpop.permute.xlu0 %1123
    %v1126 = vmul.f32 %v38, %v1124
    %v1127 = vmul.f32 %v39, %v1124
    %v1128 = vmul.f32 %v41, %v1124
    %v1129 = vmul.f32 %v42, %v1124
    %1134 = vrot.lane.b32.xlu0 %v1126, 62
    %v1135 = vpop.permute.xlu0 %1134
    %1136 = vrot.lane.b32.xlu0 %v1127, 62
    %v1137 = vpop.permute.xlu0 %1136
    %1138 = vrot.lane.b32.xlu0 %v1128, 62
    %v1139 = vpop.permute.xlu0 %1138
    %1140 = vrot.lane.b32.xlu0 %v1129, 62
    %v1141 = vpop.permute.xlu0 %1140
    %vm1142 = vcmask 506880
    %v1143 = vsel %vm1142, %v1135, %v1137
    %v1144 = vsel %vm1142, %v1139, %v1141
    %v1147 = vadd.f32 %v1118, %v1143
    %v1148 = vadd.f32 %v1119, %v1144
    %s1149 = scalar_lea.vmem [#allocation2], 312
    %v1150 = vld [vmem:[%s1149] sm:$0xff]
    %1152 = vrot.lane.b32.xlu0 %v1150, 67
    %v1153 = vpop.permute.xlu0 %1152
    %v1155 = vmul.f32 %v38, %v1153
    %v1156 = vmul.f32 %v39, %v1153
    %v1157 = vmul.f32 %v41, %v1153
    %v1158 = vmul.f32 %v42, %v1153
    %1163 = vrot.lane.b32.xlu0 %v1155, 61
    %v1164 = vpop.permute.xlu0 %1163
    %1165 = vrot.lane.b32.xlu0 %v1156, 61
    %v1166 = vpop.permute.xlu0 %1165
    %1167 = vrot.lane.b32.xlu0 %v1157, 61
    %v1168 = vpop.permute.xlu0 %1167
    %1169 = vrot.lane.b32.xlu0 %v1158, 61
    %v1170 = vpop.permute.xlu0 %1169
    %vm1171 = vcmask 498688
    %v1172 = vsel %vm1171, %v1164, %v1166
    %v1173 = vsel %vm1171, %v1168, %v1170
    %v1176 = vadd.f32 %v1147, %v1172
    %v1177 = vadd.f32 %v1148, %v1173
    %s1178 = scalar_lea.vmem [#allocation2], 320
    %v1179 = vld [vmem:[%s1178] sm:$0xff]
    %1181 = vrot.lane.b32.xlu0 %v1179, 68
    %v1182 = vpop.permute.xlu0 %1181
    %v1184 = vmul.f32 %v38, %v1182
    %v1185 = vmul.f32 %v39, %v1182
    %v1186 = vmul.f32 %v41, %v1182
    %v1187 = vmul.f32 %v42, %v1182
    %1192 = vrot.lane.b32.xlu0 %v1184, 60
    %v1193 = vpop.permute.xlu0 %1192
    %1194 = vrot.lane.b32.xlu0 %v1185, 60
    %v1195 = vpop.permute.xlu0 %1194
    %1196 = vrot.lane.b32.xlu0 %v1186, 60
    %v1197 = vpop.permute.xlu0 %1196
    %1198 = vrot.lane.b32.xlu0 %v1187, 60
    %v1199 = vpop.permute.xlu0 %1198
    %vm1200 = vcmask 490496
    %v1201 = vsel %vm1200, %v1193, %v1195
    %v1202 = vsel %vm1200, %v1197, %v1199
    %v1205 = vadd.f32 %v1176, %v1201
    %v1206 = vadd.f32 %v1177, %v1202
    %s1207 = scalar_lea.vmem [#allocation2], 328
    %v1208 = vld [vmem:[%s1207] sm:$0xff]
    %1210 = vrot.lane.b32.xlu0 %v1208, 69
    %v1211 = vpop.permute.xlu0 %1210
    %v1213 = vmul.f32 %v38, %v1211
    %v1214 = vmul.f32 %v39, %v1211
    %v1215 = vmul.f32 %v41, %v1211
    %v1216 = vmul.f32 %v42, %v1211
    %1221 = vrot.lane.b32.xlu0 %v1213, 59
    %v1222 = vpop.permute.xlu0 %1221
    %1223 = vrot.lane.b32.xlu0 %v1214, 59
    %v1224 = vpop.permute.xlu0 %1223
    %1225 = vrot.lane.b32.xlu0 %v1215, 59
    %v1226 = vpop.permute.xlu0 %1225
    %1227 = vrot.lane.b32.xlu0 %v1216, 59
    %v1228 = vpop.permute.xlu0 %1227
    %vm1229 = vcmask 482304
    %v1230 = vsel %vm1229, %v1222, %v1224
    %v1231 = vsel %vm1229, %v1226, %v1228
    %v1234 = vadd.f32 %v1205, %v1230
    %v1235 = vadd.f32 %v1206, %v1231
    %s1236 = scalar_lea.vmem [#allocation2], 336
    %v1237 = vld [vmem:[%s1236] sm:$0xff]
    %1239 = vrot.lane.b32.xlu0 %v1237, 70
    %v1240 = vpop.permute.xlu0 %1239
    %v1242 = vmul.f32 %v38, %v1240
    %v1243 = vmul.f32 %v39, %v1240
    %v1244 = vmul.f32 %v41, %v1240
    %v1245 = vmul.f32 %v42, %v1240
    %1250 = vrot.lane.b32.xlu0 %v1242, 58
    %v1251 = vpop.permute.xlu0 %1250
    %1252 = vrot.lane.b32.xlu0 %v1243, 58
    %v1253 = vpop.permute.xlu0 %1252
    %1254 = vrot.lane.b32.xlu0 %v1244, 58
    %v1255 = vpop.permute.xlu0 %1254
    %1256 = vrot.lane.b32.xlu0 %v1245, 58
    %v1257 = vpop.permute.xlu0 %1256
    %vm1258 = vcmask 474112
    %v1259 = vsel %vm1258, %v1251, %v1253
    %v1260 = vsel %vm1258, %v1255, %v1257
    %v1263 = vadd.f32 %v1234, %v1259
    %v1264 = vadd.f32 %v1235, %v1260
    %s1265 = scalar_lea.vmem [#allocation2], 344
    %v1266 = vld [vmem:[%s1265] sm:$0xff]
    %1268 = vrot.lane.b32.xlu0 %v1266, 71
    %v1269 = vpop.permute.xlu0 %1268
    %v1271 = vmul.f32 %v38, %v1269
    %v1272 = vmul.f32 %v39, %v1269
    %v1273 = vmul.f32 %v41, %v1269
    %v1274 = vmul.f32 %v42, %v1269
    %1279 = vrot.lane.b32.xlu0 %v1271, 57
    %v1280 = vpop.permute.xlu0 %1279
    %1281 = vrot.lane.b32.xlu0 %v1272, 57
    %v1282 = vpop.permute.xlu0 %1281
    %1283 = vrot.lane.b32.xlu0 %v1273, 57
    %v1284 = vpop.permute.xlu0 %1283
    %1285 = vrot.lane.b32.xlu0 %v1274, 57
    %v1286 = vpop.permute.xlu0 %1285
    %vm1287 = vcmask 465920
    %v1288 = vsel %vm1287, %v1280, %v1282
    %v1289 = vsel %vm1287, %v1284, %v1286
    %v1292 = vadd.f32 %v1263, %v1288
    %v1293 = vadd.f32 %v1264, %v1289
    %s1294 = scalar_lea.vmem [#allocation2], 352
    %v1295 = vld [vmem:[%s1294] sm:$0xff]
    %1297 = vrot.lane.b32.xlu0 %v1295, 72
    %v1298 = vpop.permute.xlu0 %1297
    %v1300 = vmul.f32 %v38, %v1298
    %v1301 = vmul.f32 %v39, %v1298
    %v1302 = vmul.f32 %v41, %v1298
    %v1303 = vmul.f32 %v42, %v1298
    %1308 = vrot.lane.b32.xlu0 %v1300, 56
    %v1309 = vpop.permute.xlu0 %1308
    %1310 = vrot.lane.b32.xlu0 %v1301, 56
    %v1311 = vpop.permute.xlu0 %1310
    %1312 = vrot.lane.b32.xlu0 %v1302, 56
    %v1313 = vpop.permute.xlu0 %1312
    %1314 = vrot.lane.b32.xlu0 %v1303, 56
    %v1315 = vpop.permute.xlu0 %1314
    %vm1316 = vcmask 457728
    %v1317 = vsel %vm1316, %v1309, %v1311
    %v1318 = vsel %vm1316, %v1313, %v1315
    %v1321 = vadd.f32 %v1292, %v1317
    %v1322 = vadd.f32 %v1293, %v1318
    %s1323 = scalar_lea.vmem [#allocation2], 360
    %v1324 = vld [vmem:[%s1323] sm:$0xff]
    %1326 = vrot.lane.b32.xlu0 %v1324, 80
    %v1327 = vpop.permute.xlu0 %1326
    %v1329 = vmul.f32 %v38, %v1327
    %v1330 = vmul.f32 %v39, %v1327
    %v1331 = vmul.f32 %v41, %v1327
    %v1332 = vmul.f32 %v42, %v1327
    %1337 = vrot.lane.b32.xlu0 %v1329, 48
    %v1338 = vpop.permute.xlu0 %1337
    %1339 = vrot.lane.b32.xlu0 %v1330, 48
    %v1340 = vpop.permute.xlu0 %1339
    %1341 = vrot.lane.b32.xlu0 %v1331, 48
    %v1342 = vpop.permute.xlu0 %1341
    %1343 = vrot.lane.b32.xlu0 %v1332, 48
    %v1344 = vpop.permute.xlu0 %1343
    %vm1345 = vcmask 392192
    %v1346 = vsel %vm1345, %v1338, %v1340
    %v1347 = vsel %vm1345, %v1342, %v1344
    %v1350 = vadd.f32 %v1321, %v1346
    %v1351 = vadd.f32 %v1322, %v1347
    %s1352 = scalar_lea.vmem [#allocation2], 368
    %v1353 = vld [vmem:[%s1352] sm:$0xff]
    %1355 = vrot.lane.b32.xlu0 %v1353, 81
    %v1356 = vpop.permute.xlu0 %1355
    %v1358 = vmul.f32 %v38, %v1356
    %v1359 = vmul.f32 %v39, %v1356
    %v1360 = vmul.f32 %v41, %v1356
    %v1361 = vmul.f32 %v42, %v1356
    %1366 = vrot.lane.b32.xlu0 %v1358, 47
    %v1367 = vpop.permute.xlu0 %1366
    %1368 = vrot.lane.b32.xlu0 %v1359, 47
    %v1369 = vpop.permute.xlu0 %1368
    %1370 = vrot.lane.b32.xlu0 %v1360, 47
    %v1371 = vpop.permute.xlu0 %1370
    %1372 = vrot.lane.b32.xlu0 %v1361, 47
    %v1373 = vpop.permute.xlu0 %1372
    %vm1374 = vcmask 384000
    %v1375 = vsel %vm1374, %v1367, %v1369
    %v1376 = vsel %vm1374, %v1371, %v1373
    %v1379 = vadd.f32 %v1350, %v1375
    %v1380 = vadd.f32 %v1351, %v1376
    %s1381 = scalar_lea.vmem [#allocation2], 376
    %v1382 = vld [vmem:[%s1381] sm:$0xff]
    %1384 = vrot.lane.b32.xlu0 %v1382, 82
    %v1385 = vpop.permute.xlu0 %1384
    %v1387 = vmul.f32 %v38, %v1385
    %v1388 = vmul.f32 %v39, %v1385
    %v1389 = vmul.f32 %v41, %v1385
    %v1390 = vmul.f32 %v42, %v1385
    %1395 = vrot.lane.b32.xlu0 %v1387, 46
    %v1396 = vpop.permute.xlu0 %1395
    %1397 = vrot.lane.b32.xlu0 %v1388, 46
    %v1398 = vpop.permute.xlu0 %1397
    %1399 = vrot.lane.b32.xlu0 %v1389, 46
    %v1400 = vpop.permute.xlu0 %1399
    %1401 = vrot.lane.b32.xlu0 %v1390, 46
    %v1402 = vpop.permute.xlu0 %1401
    %vm1403 = vcmask 375808
    %v1404 = vsel %vm1403, %v1396, %v1398
    %v1405 = vsel %vm1403, %v1400, %v1402
    %v1408 = vadd.f32 %v1379, %v1404
    %v1409 = vadd.f32 %v1380, %v1405
    %s1410 = scalar_lea.vmem [#allocation2], 384
    %v1411 = vld [vmem:[%s1410] sm:$0xff]
    %1413 = vrot.lane.b32.xlu0 %v1411, 83
    %v1414 = vpop.permute.xlu0 %1413
    %v1416 = vmul.f32 %v38, %v1414
    %v1417 = vmul.f32 %v39, %v1414
    %v1418 = vmul.f32 %v41, %v1414
    %v1419 = vmul.f32 %v42, %v1414
    %1424 = vrot.lane.b32.xlu0 %v1416, 45
    %v1425 = vpop.permute.xlu0 %1424
    %1426 = vrot.lane.b32.xlu0 %v1417, 45
    %v1427 = vpop.permute.xlu0 %1426
    %1428 = vrot.lane.b32.xlu0 %v1418, 45
    %v1429 = vpop.permute.xlu0 %1428
    %1430 = vrot.lane.b32.xlu0 %v1419, 45
    %v1431 = vpop.permute.xlu0 %1430
    %vm1432 = vcmask 367616
    %v1433 = vsel %vm1432, %v1425, %v1427
    %v1434 = vsel %vm1432, %v1429, %v1431
    %v1437 = vadd.f32 %v1408, %v1433
    %v1438 = vadd.f32 %v1409, %v1434
    %s1439 = scalar_lea.vmem [#allocation2], 392
    %v1440 = vld [vmem:[%s1439] sm:$0xff]
    %1442 = vrot.lane.b32.xlu0 %v1440, 84
    %v1443 = vpop.permute.xlu0 %1442
    %v1445 = vmul.f32 %v38, %v1443
    %v1446 = vmul.f32 %v39, %v1443
    %v1447 = vmul.f32 %v41, %v1443
    %v1448 = vmul.f32 %v42, %v1443
    %1453 = vrot.lane.b32.xlu0 %v1445, 44
    %v1454 = vpop.permute.xlu0 %1453
    %1455 = vrot.lane.b32.xlu0 %v1446, 44
    %v1456 = vpop.permute.xlu0 %1455
    %1457 = vrot.lane.b32.xlu0 %v1447, 44
    %v1458 = vpop.permute.xlu0 %1457
    %1459 = vrot.lane.b32.xlu0 %v1448, 44
    %v1460 = vpop.permute.xlu0 %1459
    %vm1461 = vcmask 359424
    %v1462 = vsel %vm1461, %v1454, %v1456
    %v1463 = vsel %vm1461, %v1458, %v1460
    %v1466 = vadd.f32 %v1437, %v1462
    %v1467 = vadd.f32 %v1438, %v1463
    %s1468 = scalar_lea.vmem [#allocation2], 400
    %v1469 = vld [vmem:[%s1468] sm:$0xff]
    %1471 = vrot.lane.b32.xlu0 %v1469, 85
    %v1472 = vpop.permute.xlu0 %1471
    %v1474 = vmul.f32 %v38, %v1472
    %v1475 = vmul.f32 %v39, %v1472
    %v1476 = vmul.f32 %v41, %v1472
    %v1477 = vmul.f32 %v42, %v1472
    %1482 = vrot.lane.b32.xlu0 %v1474, 43
    %v1483 = vpop.permute.xlu0 %1482
    %1484 = vrot.lane.b32.xlu0 %v1475, 43
    %v1485 = vpop.permute.xlu0 %1484
    %1486 = vrot.lane.b32.xlu0 %v1476, 43
    %v1487 = vpop.permute.xlu0 %1486
    %1488 = vrot.lane.b32.xlu0 %v1477, 43
    %v1489 = vpop.permute.xlu0 %1488
    %vm1490 = vcmask 351232
    %v1491 = vsel %vm1490, %v1483, %v1485
    %v1492 = vsel %vm1490, %v1487, %v1489
    %v1495 = vadd.f32 %v1466, %v1491
    %v1496 = vadd.f32 %v1467, %v1492
    %s1497 = scalar_lea.vmem [#allocation2], 408
    %v1498 = vld [vmem:[%s1497] sm:$0xff]
    %1500 = vrot.lane.b32.xlu0 %v1498, 86
    %v1501 = vpop.permute.xlu0 %1500
    %v1503 = vmul.f32 %v38, %v1501
    %v1504 = vmul.f32 %v39, %v1501
    %v1505 = vmul.f32 %v41, %v1501
    %v1506 = vmul.f32 %v42, %v1501
    %1511 = vrot.lane.b32.xlu0 %v1503, 42
    %v1512 = vpop.permute.xlu0 %1511
    %1513 = vrot.lane.b32.xlu0 %v1504, 42
    %v1514 = vpop.permute.xlu0 %1513
    %1515 = vrot.lane.b32.xlu0 %v1505, 42
    %v1516 = vpop.permute.xlu0 %1515
    %1517 = vrot.lane.b32.xlu0 %v1506, 42
    %v1518 = vpop.permute.xlu0 %1517
    %vm1519 = vcmask 343040
    %v1520 = vsel %vm1519, %v1512, %v1514
    %v1521 = vsel %vm1519, %v1516, %v1518
    %v1524 = vadd.f32 %v1495, %v1520
    %v1525 = vadd.f32 %v1496, %v1521
    %s1526 = scalar_lea.vmem [#allocation2], 416
    %v1527 = vld [vmem:[%s1526] sm:$0xff]
    %1529 = vrot.lane.b32.xlu0 %v1527, 87
    %v1530 = vpop.permute.xlu0 %1529
    %v1532 = vmul.f32 %v38, %v1530
    %v1533 = vmul.f32 %v39, %v1530
    %v1534 = vmul.f32 %v41, %v1530
    %v1535 = vmul.f32 %v42, %v1530
    %1540 = vrot.lane.b32.xlu0 %v1532, 41
    %v1541 = vpop.permute.xlu0 %1540
    %1542 = vrot.lane.b32.xlu0 %v1533, 41
    %v1543 = vpop.permute.xlu0 %1542
    %1544 = vrot.lane.b32.xlu0 %v1534, 41
    %v1545 = vpop.permute.xlu0 %1544
    %1546 = vrot.lane.b32.xlu0 %v1535, 41
    %v1547 = vpop.permute.xlu0 %1546
    %vm1548 = vcmask 334848
    %v1549 = vsel %vm1548, %v1541, %v1543
    %v1550 = vsel %vm1548, %v1545, %v1547
    %v1553 = vadd.f32 %v1524, %v1549
    %v1554 = vadd.f32 %v1525, %v1550
    %s1555 = scalar_lea.vmem [#allocation2], 424
    %v1556 = vld [vmem:[%s1555] sm:$0xff]
    %1558 = vrot.lane.b32.xlu0 %v1556, 88
    %v1559 = vpop.permute.xlu0 %1558
    %v1561 = vmul.f32 %v38, %v1559
    %v1562 = vmul.f32 %v39, %v1559
    %v1563 = vmul.f32 %v41, %v1559
    %v1564 = vmul.f32 %v42, %v1559
    %1569 = vrot.lane.b32.xlu0 %v1561, 40
    %v1570 = vpop.permute.xlu0 %1569
    %1571 = vrot.lane.b32.xlu0 %v1562, 40
    %v1572 = vpop.permute.xlu0 %1571
    %1573 = vrot.lane.b32.xlu0 %v1563, 40
    %v1574 = vpop.permute.xlu0 %1573
    %1575 = vrot.lane.b32.xlu0 %v1564, 40
    %v1576 = vpop.permute.xlu0 %1575
    %vm1577 = vcmask 326656
    %v1578 = vsel %vm1577, %v1570, %v1572
    %v1579 = vsel %vm1577, %v1574, %v1576
    %v1582 = vadd.f32 %v1553, %v1578
    %v1583 = vadd.f32 %v1554, %v1579
    %s1584 = scalar_lea.vmem [#allocation2], 432
    %v1585 = vld [vmem:[%s1584] sm:$0xff]
    %1587 = vrot.lane.b32.xlu0 %v1585, 96
    %v1588 = vpop.permute.xlu0 %1587
    %v1590 = vmul.f32 %v38, %v1588
    %v1591 = vmul.f32 %v39, %v1588
    %v1592 = vmul.f32 %v41, %v1588
    %v1593 = vmul.f32 %v42, %v1588
    %1598 = vrot.lane.b32.xlu0 %v1590, 32
    %v1599 = vpop.permute.xlu0 %1598
    %1600 = vrot.lane.b32.xlu0 %v1591, 32
    %v1601 = vpop.permute.xlu0 %1600
    %1602 = vrot.lane.b32.xlu0 %v1592, 32
    %v1603 = vpop.permute.xlu0 %1602
    %1604 = vrot.lane.b32.xlu0 %v1593, 32
    %v1605 = vpop.permute.xlu0 %1604
    %vm1606 = vcmask 261120
    %v1607 = vsel %vm1606, %v1599, %v1601
    %v1608 = vsel %vm1606, %v1603, %v1605
    %v1611 = vadd.f32 %v1582, %v1607
    %v1612 = vadd.f32 %v1583, %v1608
    %s1613 = scalar_lea.vmem [#allocation2], 440
    %v1614 = vld [vmem:[%s1613] sm:$0xff]
    %1616 = vrot.lane.b32.xlu0 %v1614, 97
    %v1617 = vpop.permute.xlu0 %1616
    %v1619 = vmul.f32 %v38, %v1617
    %v1620 = vmul.f32 %v39, %v1617
    %v1621 = vmul.f32 %v41, %v1617
    %v1622 = vmul.f32 %v42, %v1617
    %1627 = vrot.lane.b32.xlu0 %v1619, 31
    %v1628 = vpop.permute.xlu0 %1627
    %1629 = vrot.lane.b32.xlu0 %v1620, 31
    %v1630 = vpop.permute.xlu0 %1629
    %1631 = vrot.lane.b32.xlu0 %v1621, 31
    %v1632 = vpop.permute.xlu0 %1631
    %1633 = vrot.lane.b32.xlu0 %v1622, 31
    %v1634 = vpop.permute.xlu0 %1633
    %vm1635 = vcmask 252928
    %v1636 = vsel %vm1635, %v1628, %v1630
    %v1637 = vsel %vm1635, %v1632, %v1634
    %v1640 = vadd.f32 %v1611, %v1636
    %v1641 = vadd.f32 %v1612, %v1637
    %s1642 = scalar_lea.vmem [#allocation2], 448
    %v1643 = vld [vmem:[%s1642] sm:$0xff]
    %1645 = vrot.lane.b32.xlu0 %v1643, 98
    %v1646 = vpop.permute.xlu0 %1645
    %v1648 = vmul.f32 %v38, %v1646
    %v1649 = vmul.f32 %v39, %v1646
    %v1650 = vmul.f32 %v41, %v1646
    %v1651 = vmul.f32 %v42, %v1646
    %1656 = vrot.lane.b32.xlu0 %v1648, 30
    %v1657 = vpop.permute.xlu0 %1656
    %1658 = vrot.lane.b32.xlu0 %v1649, 30
    %v1659 = vpop.permute.xlu0 %1658
    %1660 = vrot.lane.b32.xlu0 %v1650, 30
    %v1661 = vpop.permute.xlu0 %1660
    %1662 = vrot.lane.b32.xlu0 %v1651, 30
    %v1663 = vpop.permute.xlu0 %1662
    %vm1664 = vcmask 244736
    %v1665 = vsel %vm1664, %v1657, %v1659
    %v1666 = vsel %vm1664, %v1661, %v1663
    %v1669 = vadd.f32 %v1640, %v1665
    %v1670 = vadd.f32 %v1641, %v1666
    %s1671 = scalar_lea.vmem [#allocation2], 456
    %v1672 = vld [vmem:[%s1671] sm:$0xff]
    %1674 = vrot.lane.b32.xlu0 %v1672, 99
    %v1675 = vpop.permute.xlu0 %1674
    %v1677 = vmul.f32 %v38, %v1675
    %v1678 = vmul.f32 %v39, %v1675
    %v1679 = vmul.f32 %v41, %v1675
    %v1680 = vmul.f32 %v42, %v1675
    %1685 = vrot.lane.b32.xlu0 %v1677, 29
    %v1686 = vpop.permute.xlu0 %1685
    %1687 = vrot.lane.b32.xlu0 %v1678, 29
    %v1688 = vpop.permute.xlu0 %1687
    %1689 = vrot.lane.b32.xlu0 %v1679, 29
    %v1690 = vpop.permute.xlu0 %1689
    %1691 = vrot.lane.b32.xlu0 %v1680, 29
    %v1692 = vpop.permute.xlu0 %1691
    %vm1693 = vcmask 236544
    %v1694 = vsel %vm1693, %v1686, %v1688
    %v1695 = vsel %vm1693, %v1690, %v1692
    %v1698 = vadd.f32 %v1669, %v1694
    %v1699 = vadd.f32 %v1670, %v1695
    %s1700 = scalar_lea.vmem [#allocation2], 464
    %v1701 = vld [vmem:[%s1700] sm:$0xff]
    %1703 = vrot.lane.b32.xlu0 %v1701, 100
    %v1704 = vpop.permute.xlu0 %1703
    %v1706 = vmul.f32 %v38, %v1704
    %v1707 = vmul.f32 %v39, %v1704
    %v1708 = vmul.f32 %v41, %v1704
    %v1709 = vmul.f32 %v42, %v1704
    %1714 = vrot.lane.b32.xlu0 %v1706, 28
    %v1715 = vpop.permute.xlu0 %1714
    %1716 = vrot.lane.b32.xlu0 %v1707, 28
    %v1717 = vpop.permute.xlu0 %1716
    %1718 = vrot.lane.b32.xlu0 %v1708, 28
    %v1719 = vpop.permute.xlu0 %1718
    %1720 = vrot.lane.b32.xlu0 %v1709, 28
    %v1721 = vpop.permute.xlu0 %1720
    %vm1722 = vcmask 228352
    %v1723 = vsel %vm1722, %v1715, %v1717
    %v1724 = vsel %vm1722, %v1719, %v1721
    %v1727 = vadd.f32 %v1698, %v1723
    %v1728 = vadd.f32 %v1699, %v1724
    %s1729 = scalar_lea.vmem [#allocation2], 472
    %v1730 = vld [vmem:[%s1729] sm:$0xff]
    %1732 = vrot.lane.b32.xlu0 %v1730, 101
    %v1733 = vpop.permute.xlu0 %1732
    %v1735 = vmul.f32 %v38, %v1733
    %v1736 = vmul.f32 %v39, %v1733
    %v1737 = vmul.f32 %v41, %v1733
    %v1738 = vmul.f32 %v42, %v1733
    %1743 = vrot.lane.b32.xlu0 %v1735, 27
    %v1744 = vpop.permute.xlu0 %1743
    %1745 = vrot.lane.b32.xlu0 %v1736, 27
    %v1746 = vpop.permute.xlu0 %1745
    %1747 = vrot.lane.b32.xlu0 %v1737, 27
    %v1748 = vpop.permute.xlu0 %1747
    %1749 = vrot.lane.b32.xlu0 %v1738, 27
    %v1750 = vpop.permute.xlu0 %1749
    %vm1751 = vcmask 220160
    %v1752 = vsel %vm1751, %v1744, %v1746
    %v1753 = vsel %vm1751, %v1748, %v1750
    %v1756 = vadd.f32 %v1727, %v1752
    %v1757 = vadd.f32 %v1728, %v1753
    %s1758 = scalar_lea.vmem [#allocation2], 480
    %v1759 = vld [vmem:[%s1758] sm:$0xff]
    %1761 = vrot.lane.b32.xlu0 %v1759, 102
    %v1762 = vpop.permute.xlu0 %1761
    %v1764 = vmul.f32 %v38, %v1762
    %v1765 = vmul.f32 %v39, %v1762
    %v1766 = vmul.f32 %v41, %v1762
    %v1767 = vmul.f32 %v42, %v1762
    %1772 = vrot.lane.b32.xlu0 %v1764, 26
    %v1773 = vpop.permute.xlu0 %1772
    %1774 = vrot.lane.b32.xlu0 %v1765, 26
    %v1775 = vpop.permute.xlu0 %1774
    %1776 = vrot.lane.b32.xlu0 %v1766, 26
    %v1777 = vpop.permute.xlu0 %1776
    %1778 = vrot.lane.b32.xlu0 %v1767, 26
    %v1779 = vpop.permute.xlu0 %1778
    %vm1780 = vcmask 211968
    %v1781 = vsel %vm1780, %v1773, %v1775
    %v1782 = vsel %vm1780, %v1777, %v1779
    %v1785 = vadd.f32 %v1756, %v1781
    %v1786 = vadd.f32 %v1757, %v1782
    %s1787 = scalar_lea.vmem [#allocation2], 488
    %v1788 = vld [vmem:[%s1787] sm:$0xff]
    %1790 = vrot.lane.b32.xlu0 %v1788, 103
    %v1791 = vpop.permute.xlu0 %1790
    %v1793 = vmul.f32 %v38, %v1791
    %v1794 = vmul.f32 %v39, %v1791
    %v1795 = vmul.f32 %v41, %v1791
    %v1796 = vmul.f32 %v42, %v1791
    %1801 = vrot.lane.b32.xlu0 %v1793, 25
    %v1802 = vpop.permute.xlu0 %1801
    %1803 = vrot.lane.b32.xlu0 %v1794, 25
    %v1804 = vpop.permute.xlu0 %1803
    %1805 = vrot.lane.b32.xlu0 %v1795, 25
    %v1806 = vpop.permute.xlu0 %1805
    %1807 = vrot.lane.b32.xlu0 %v1796, 25
    %v1808 = vpop.permute.xlu0 %1807
    %vm1809 = vcmask 203776
    %v1810 = vsel %vm1809, %v1802, %v1804
    %v1811 = vsel %vm1809, %v1806, %v1808
    %v1814 = vadd.f32 %v1785, %v1810
    %v1815 = vadd.f32 %v1786, %v1811
    %s1816 = scalar_lea.vmem [#allocation2], 496
    %v1817 = vld [vmem:[%s1816] sm:$0xff]
    %1819 = vrot.lane.b32.xlu0 %v1817, 104
    %v1820 = vpop.permute.xlu0 %1819
    %v1822 = vmul.f32 %v38, %v1820
    %v1823 = vmul.f32 %v39, %v1820
    %v1824 = vmul.f32 %v41, %v1820
    %v1825 = vmul.f32 %v42, %v1820
    %1830 = vrot.lane.b32.xlu0 %v1822, 24
    %v1831 = vpop.permute.xlu0 %1830
    %1832 = vrot.lane.b32.xlu0 %v1823, 24
    %v1833 = vpop.permute.xlu0 %1832
    %1834 = vrot.lane.b32.xlu0 %v1824, 24
    %v1835 = vpop.permute.xlu0 %1834
    %1836 = vrot.lane.b32.xlu0 %v1825, 24
    %v1837 = vpop.permute.xlu0 %1836
    %vm1838 = vcmask 195584
    %v1839 = vsel %vm1838, %v1831, %v1833
    %v1840 = vsel %vm1838, %v1835, %v1837
    %v1843 = vadd.f32 %v1814, %v1839
    %v1844 = vadd.f32 %v1815, %v1840
    %s1845 = scalar_lea.vmem [#allocation2], 504
    %v1846 = vld [vmem:[%s1845] sm:$0xff]
    %1848 = vrot.lane.b32.xlu0 %v1846, 112
    %v1849 = vpop.permute.xlu0 %1848
    %v1851 = vmul.f32 %v38, %v1849
    %v1852 = vmul.f32 %v39, %v1849
    %v1853 = vmul.f32 %v41, %v1849
    %v1854 = vmul.f32 %v42, %v1849
    %1859 = vrot.lane.b32.xlu0 %v1851, 16
    %v1860 = vpop.permute.xlu0 %1859
    %1861 = vrot.lane.b32.xlu0 %v1852, 16
    %v1862 = vpop.permute.xlu0 %1861
    %1863 = vrot.lane.b32.xlu0 %v1853, 16
    %v1864 = vpop.permute.xlu0 %1863
    %1865 = vrot.lane.b32.xlu0 %v1854, 16
    %v1866 = vpop.permute.xlu0 %1865
    %vm1867 = vcmask 130048
    %v1868 = vsel %vm1867, %v1860, %v1862
    %v1869 = vsel %vm1867, %v1864, %v1866
    %v1872 = vadd.f32 %v1843, %v1868
    %v1873 = vadd.f32 %v1844, %v1869
    %s1874 = scalar_lea.vmem [#allocation2], 512
    %v1875 = vld [vmem:[%s1874] sm:$0xff]
    %1877 = vrot.lane.b32.xlu0 %v1875, 113
    %v1878 = vpop.permute.xlu0 %1877
    %v1880 = vmul.f32 %v38, %v1878
    %v1881 = vmul.f32 %v39, %v1878
    %v1882 = vmul.f32 %v41, %v1878
    %v1883 = vmul.f32 %v42, %v1878
    %1888 = vrot.lane.b32.xlu0 %v1880, 15
    %v1889 = vpop.permute.xlu0 %1888
    %1890 = vrot.lane.b32.xlu0 %v1881, 15
    %v1891 = vpop.permute.xlu0 %1890
    %1892 = vrot.lane.b32.xlu0 %v1882, 15
    %v1893 = vpop.permute.xlu0 %1892
    %1894 = vrot.lane.b32.xlu0 %v1883, 15
    %v1895 = vpop.permute.xlu0 %1894
    %vm1896 = vcmask 121856
    %v1897 = vsel %vm1896, %v1889, %v1891
    %v1898 = vsel %vm1896, %v1893, %v1895
    %v1901 = vadd.f32 %v1872, %v1897
    %v1902 = vadd.f32 %v1873, %v1898
    %s1903 = scalar_lea.vmem [#allocation2], 520
    %v1904 = vld [vmem:[%s1903] sm:$0xff]
    %1906 = vrot.lane.b32.xlu0 %v1904, 114
    %v1907 = vpop.permute.xlu0 %1906
    %v1909 = vmul.f32 %v38, %v1907
    %v1910 = vmul.f32 %v39, %v1907
    %v1911 = vmul.f32 %v41, %v1907
    %v1912 = vmul.f32 %v42, %v1907
    %1917 = vrot.lane.b32.xlu0 %v1909, 14
    %v1918 = vpop.permute.xlu0 %1917
    %1919 = vrot.lane.b32.xlu0 %v1910, 14
    %v1920 = vpop.permute.xlu0 %1919
    %1921 = vrot.lane.b32.xlu0 %v1911, 14
    %v1922 = vpop.permute.xlu0 %1921
    %1923 = vrot.lane.b32.xlu0 %v1912, 14
    %v1924 = vpop.permute.xlu0 %1923
    %vm1925 = vcmask 113664
    %v1926 = vsel %vm1925, %v1918, %v1920
    %v1927 = vsel %vm1925, %v1922, %v1924
    %v1930 = vadd.f32 %v1901, %v1926
    %v1931 = vadd.f32 %v1902, %v1927
    %s1932 = scalar_lea.vmem [#allocation2], 528
    %v1933 = vld [vmem:[%s1932] sm:$0xff]
    %1935 = vrot.lane.b32.xlu0 %v1933, 115
    %v1936 = vpop.permute.xlu0 %1935
    %v1938 = vmul.f32 %v38, %v1936
    %v1939 = vmul.f32 %v39, %v1936
    %v1940 = vmul.f32 %v41, %v1936
    %v1941 = vmul.f32 %v42, %v1936
    %1946 = vrot.lane.b32.xlu0 %v1938, 13
    %v1947 = vpop.permute.xlu0 %1946
    %1948 = vrot.lane.b32.xlu0 %v1939, 13
    %v1949 = vpop.permute.xlu0 %1948
    %1950 = vrot.lane.b32.xlu0 %v1940, 13
    %v1951 = vpop.permute.xlu0 %1950
    %1952 = vrot.lane.b32.xlu0 %v1941, 13
    %v1953 = vpop.permute.xlu0 %1952
    %vm1954 = vcmask 105472
    %v1955 = vsel %vm1954, %v1947, %v1949
    %v1956 = vsel %vm1954, %v1951, %v1953
    %v1959 = vadd.f32 %v1930, %v1955
    %v1960 = vadd.f32 %v1931, %v1956
    %s1961 = scalar_lea.vmem [#allocation2], 536
    %v1962 = vld [vmem:[%s1961] sm:$0xff]
    %1964 = vrot.lane.b32.xlu0 %v1962, 116
    %v1965 = vpop.permute.xlu0 %1964
    %v1967 = vmul.f32 %v38, %v1965
    %v1968 = vmul.f32 %v39, %v1965
    %v1969 = vmul.f32 %v41, %v1965
    %v1970 = vmul.f32 %v42, %v1965
    %1975 = vrot.lane.b32.xlu0 %v1967, 12
    %v1976 = vpop.permute.xlu0 %1975
    %1977 = vrot.lane.b32.xlu0 %v1968, 12
    %v1978 = vpop.permute.xlu0 %1977
    %1979 = vrot.lane.b32.xlu0 %v1969, 12
    %v1980 = vpop.permute.xlu0 %1979
    %1981 = vrot.lane.b32.xlu0 %v1970, 12
    %v1982 = vpop.permute.xlu0 %1981
    %vm1983 = vcmask 97280
    %v1984 = vsel %vm1983, %v1976, %v1978
    %v1985 = vsel %vm1983, %v1980, %v1982
    %v1988 = vadd.f32 %v1959, %v1984
    %v1989 = vadd.f32 %v1960, %v1985
    %s1990 = scalar_lea.vmem [#allocation2], 544
    %v1991 = vld [vmem:[%s1990] sm:$0xff]
    %1993 = vrot.lane.b32.xlu0 %v1991, 117
    %v1994 = vpop.permute.xlu0 %1993
    %v1996 = vmul.f32 %v38, %v1994
    %v1997 = vmul.f32 %v39, %v1994
    %v1998 = vmul.f32 %v41, %v1994
    %v1999 = vmul.f32 %v42, %v1994
    %2004 = vrot.lane.b32.xlu0 %v1996, 11
    %v2005 = vpop.permute.xlu0 %2004
    %2006 = vrot.lane.b32.xlu0 %v1997, 11
    %v2007 = vpop.permute.xlu0 %2006
    %2008 = vrot.lane.b32.xlu0 %v1998, 11
    %v2009 = vpop.permute.xlu0 %2008
    %2010 = vrot.lane.b32.xlu0 %v1999, 11
    %v2011 = vpop.permute.xlu0 %2010
    %vm2012 = vcmask 89088
    %v2013 = vsel %vm2012, %v2005, %v2007
    %v2014 = vsel %vm2012, %v2009, %v2011
    %v2017 = vadd.f32 %v1988, %v2013
    %v2018 = vadd.f32 %v1989, %v2014
    %s2019 = scalar_lea.vmem [#allocation2], 552
    %v2020 = vld [vmem:[%s2019] sm:$0xff]
    %2022 = vrot.lane.b32.xlu0 %v2020, 118
    %v2023 = vpop.permute.xlu0 %2022
    %v2025 = vmul.f32 %v38, %v2023
    %v2026 = vmul.f32 %v39, %v2023
    %v2027 = vmul.f32 %v41, %v2023
    %v2028 = vmul.f32 %v42, %v2023
    %2033 = vrot.lane.b32.xlu0 %v2025, 10
    %v2034 = vpop.permute.xlu0 %2033
    %2035 = vrot.lane.b32.xlu0 %v2026, 10
    %v2036 = vpop.permute.xlu0 %2035
    %2037 = vrot.lane.b32.xlu0 %v2027, 10
    %v2038 = vpop.permute.xlu0 %2037
    %2039 = vrot.lane.b32.xlu0 %v2028, 10
    %v2040 = vpop.permute.xlu0 %2039
    %vm2041 = vcmask 80896
    %v2042 = vsel %vm2041, %v2034, %v2036
    %v2043 = vsel %vm2041, %v2038, %v2040
    %v2046 = vadd.f32 %v2017, %v2042
    %v2047 = vadd.f32 %v2018, %v2043
    %s2048 = scalar_lea.vmem [#allocation2], 560
    %v2049 = vld [vmem:[%s2048] sm:$0xff]
    %2051 = vrot.lane.b32.xlu0 %v2049, 119
    %v2052 = vpop.permute.xlu0 %2051
    %v2054 = vmul.f32 %v38, %v2052
    %v2055 = vmul.f32 %v39, %v2052
    %v2056 = vmul.f32 %v41, %v2052
    %v2057 = vmul.f32 %v42, %v2052
    %2062 = vrot.lane.b32.xlu0 %v2054, 9
    %v2063 = vpop.permute.xlu0 %2062
    %2064 = vrot.lane.b32.xlu0 %v2055, 9
    %v2065 = vpop.permute.xlu0 %2064
    %2066 = vrot.lane.b32.xlu0 %v2056, 9
    %v2067 = vpop.permute.xlu0 %2066
    %2068 = vrot.lane.b32.xlu0 %v2057, 9
    %v2069 = vpop.permute.xlu0 %2068
    %vm2070 = vcmask 72704
    %v2071 = vsel %vm2070, %v2063, %v2065
    %v2072 = vsel %vm2070, %v2067, %v2069
    %v2075 = vadd.f32 %v2046, %v2071
    %v2076 = vadd.f32 %v2047, %v2072
    %s2077 = scalar_lea.vmem [#allocation2], 568
    %v2078 = vld [vmem:[%s2077] sm:$0xff]
    %2080 = vrot.lane.b32.xlu0 %v2078, 120
    %v2081 = vpop.permute.xlu0 %2080
    %v2083 = vmul.f32 %v38, %v2081
    %v2084 = vmul.f32 %v39, %v2081
    %v2085 = vmul.f32 %v41, %v2081
    %v2086 = vmul.f32 %v42, %v2081
    %2091 = vrot.lane.b32.xlu0 %v2083, 8
    %v2092 = vpop.permute.xlu0 %2091
    %2093 = vrot.lane.b32.xlu0 %v2084, 8
    %v2094 = vpop.permute.xlu0 %2093
    %2095 = vrot.lane.b32.xlu0 %v2085, 8
    %v2096 = vpop.permute.xlu0 %2095
    %2097 = vrot.lane.b32.xlu0 %v2086, 8
    %v2098 = vpop.permute.xlu0 %2097
    %vm2099 = vcmask 64512
    %v2100 = vsel %vm2099, %v2092, %v2094
    %v2101 = vsel %vm2099, %v2096, %v2098
    %v2104 = vadd.f32 %v2075, %v2100
    %v2105 = vadd.f32 %v2076, %v2101
    %s2106 = scalar_lea.vmem [#allocation2], 576
    %v2107 = vld [vmem:[%s2106] sm:$0xff]
    %v2108 = vmul.f32 %v39, %v2107
    %v2109 = vmul.f32 %v42, %v2107
    %v2110 = vadd.f32 %v2104, %v2108
    %v2111 = vadd.f32 %v2105, %v2109
    %s2112 = scalar_lea.vmem [#allocation2], 584
    %v2113 = vld [vmem:[%s2112] sm:$0xff]
    %2115 = vrot.lane.b32.xlu0 %v2113, 1
    %v2116 = vpop.permute.xlu0 %2115
    %v2118 = vmul.f32 %v39, %v2116
    %v2119 = vmul.f32 %v40, %v2116
    %v2120 = vmul.f32 %v42, %v2116
    %v2121 = vmul.f32 %v43, %v2116
    %2126 = vrot.lane.b32.xlu0 %v2118, 127
    %v2127 = vpop.permute.xlu0 %2126
    %2128 = vrot.lane.b32.xlu0 %v2119, 127
    %v2129 = vpop.permute.xlu0 %2128
    %2130 = vrot.lane.b32.xlu0 %v2120, 127
    %v2131 = vpop.permute.xlu0 %2130
    %2132 = vrot.lane.b32.xlu0 %v2121, 127
    %v2133 = vpop.permute.xlu0 %2132
    %v2134 = vsel %vm69, %v2127, %v2129
    %v2135 = vsel %vm69, %v2131, %v2133
    %v2138 = vadd.f32 %v2110, %v2134
    %v2139 = vadd.f32 %v2111, %v2135
    %s2140 = scalar_lea.vmem [#allocation2], 592
    %v2141 = vld [vmem:[%s2140] sm:$0xff]
    %2143 = vrot.lane.b32.xlu0 %v2141, 2
    %v2144 = vpop.permute.xlu0 %2143
    %v2146 = vmul.f32 %v39, %v2144
    %v2147 = vmul.f32 %v40, %v2144
    %v2148 = vmul.f32 %v42, %v2144
    %v2149 = vmul.f32 %v43, %v2144
    %2154 = vrot.lane.b32.xlu0 %v2146, 126
    %v2155 = vpop.permute.xlu0 %2154
    %2156 = vrot.lane.b32.xlu0 %v2147, 126
    %v2157 = vpop.permute.xlu0 %2156
    %2158 = vrot.lane.b32.xlu0 %v2148, 126
    %v2159 = vpop.permute.xlu0 %2158
    %2160 = vrot.lane.b32.xlu0 %v2149, 126
    %v2161 = vpop.permute.xlu0 %2160
    %v2162 = vsel %vm98, %v2155, %v2157
    %v2163 = vsel %vm98, %v2159, %v2161
    %v2166 = vadd.f32 %v2138, %v2162
    %v2167 = vadd.f32 %v2139, %v2163
    %s2168 = scalar_lea.vmem [#allocation2], 600
    %v2169 = vld [vmem:[%s2168] sm:$0xff]
    %2171 = vrot.lane.b32.xlu0 %v2169, 3
    %v2172 = vpop.permute.xlu0 %2171
    %v2174 = vmul.f32 %v39, %v2172
    %v2175 = vmul.f32 %v40, %v2172
    %v2176 = vmul.f32 %v42, %v2172
    %v2177 = vmul.f32 %v43, %v2172
    %2182 = vrot.lane.b32.xlu0 %v2174, 125
    %v2183 = vpop.permute.xlu0 %2182
    %2184 = vrot.lane.b32.xlu0 %v2175, 125
    %v2185 = vpop.permute.xlu0 %2184
    %2186 = vrot.lane.b32.xlu0 %v2176, 125
    %v2187 = vpop.permute.xlu0 %2186
    %2188 = vrot.lane.b32.xlu0 %v2177, 125
    %v2189 = vpop.permute.xlu0 %2188
    %v2190 = vsel %vm127, %v2183, %v2185
    %v2191 = vsel %vm127, %v2187, %v2189
    %v2194 = vadd.f32 %v2166, %v2190
    %v2195 = vadd.f32 %v2167, %v2191
    %s2196 = scalar_lea.vmem [#allocation2], 608
    %v2197 = vld [vmem:[%s2196] sm:$0xff]
    %2199 = vrot.lane.b32.xlu0 %v2197, 4
    %v2200 = vpop.permute.xlu0 %2199
    %v2202 = vmul.f32 %v39, %v2200
    %v2203 = vmul.f32 %v40, %v2200
    %v2204 = vmul.f32 %v42, %v2200
    %v2205 = vmul.f32 %v43, %v2200
    %2210 = vrot.lane.b32.xlu0 %v2202, 124
    %v2211 = vpop.permute.xlu0 %2210
    %2212 = vrot.lane.b32.xlu0 %v2203, 124
    %v2213 = vpop.permute.xlu0 %2212
    %2214 = vrot.lane.b32.xlu0 %v2204, 124
    %v2215 = vpop.permute.xlu0 %2214
    %2216 = vrot.lane.b32.xlu0 %v2205, 124
    %v2217 = vpop.permute.xlu0 %2216
    %v2218 = vsel %vm156, %v2211, %v2213
    %v2219 = vsel %vm156, %v2215, %v2217
    %v2222 = vadd.f32 %v2194, %v2218
    %v2223 = vadd.f32 %v2195, %v2219
    %s2224 = scalar_lea.vmem [#allocation2], 616
    %v2225 = vld [vmem:[%s2224] sm:$0xff]
    %2227 = vrot.lane.b32.xlu0 %v2225, 5
    %v2228 = vpop.permute.xlu0 %2227
    %v2230 = vmul.f32 %v39, %v2228
    %v2231 = vmul.f32 %v40, %v2228
    %v2232 = vmul.f32 %v42, %v2228
    %v2233 = vmul.f32 %v43, %v2228
    %2238 = vrot.lane.b32.xlu0 %v2230, 123
    %v2239 = vpop.permute.xlu0 %2238
    %2240 = vrot.lane.b32.xlu0 %v2231, 123
    %v2241 = vpop.permute.xlu0 %2240
    %2242 = vrot.lane.b32.xlu0 %v2232, 123
    %v2243 = vpop.permute.xlu0 %2242
    %2244 = vrot.lane.b32.xlu0 %v2233, 123
    %v2245 = vpop.permute.xlu0 %2244
    %v2246 = vsel %vm185, %v2239, %v2241
    %v2247 = vsel %vm185, %v2243, %v2245
    %v2250 = vadd.f32 %v2222, %v2246
    %v2251 = vadd.f32 %v2223, %v2247
    %s2252 = scalar_lea.vmem [#allocation2], 624
    %v2253 = vld [vmem:[%s2252] sm:$0xff]
    %2255 = vrot.lane.b32.xlu0 %v2253, 6
    %v2256 = vpop.permute.xlu0 %2255
    %v2258 = vmul.f32 %v39, %v2256
    %v2259 = vmul.f32 %v40, %v2256
    %v2260 = vmul.f32 %v42, %v2256
    %v2261 = vmul.f32 %v43, %v2256
    %2266 = vrot.lane.b32.xlu0 %v2258, 122
    %v2267 = vpop.permute.xlu0 %2266
    %2268 = vrot.lane.b32.xlu0 %v2259, 122
    %v2269 = vpop.permute.xlu0 %2268
    %2270 = vrot.lane.b32.xlu0 %v2260, 122
    %v2271 = vpop.permute.xlu0 %2270
    %2272 = vrot.lane.b32.xlu0 %v2261, 122
    %v2273 = vpop.permute.xlu0 %2272
    %v2274 = vsel %vm214, %v2267, %v2269
    %v2275 = vsel %vm214, %v2271, %v2273
    %v2278 = vadd.f32 %v2250, %v2274
    %v2279 = vadd.f32 %v2251, %v2275
    %s2280 = scalar_lea.vmem [#allocation2], 632
    %v2281 = vld [vmem:[%s2280] sm:$0xff]
    %2283 = vrot.lane.b32.xlu0 %v2281, 7
    %v2284 = vpop.permute.xlu0 %2283
    %v2286 = vmul.f32 %v39, %v2284
    %v2287 = vmul.f32 %v40, %v2284
    %v2288 = vmul.f32 %v42, %v2284
    %v2289 = vmul.f32 %v43, %v2284
    %2294 = vrot.lane.b32.xlu0 %v2286, 121
    %v2295 = vpop.permute.xlu0 %2294
    %2296 = vrot.lane.b32.xlu0 %v2287, 121
    %v2297 = vpop.permute.xlu0 %2296
    %2298 = vrot.lane.b32.xlu0 %v2288, 121
    %v2299 = vpop.permute.xlu0 %2298
    %2300 = vrot.lane.b32.xlu0 %v2289, 121
    %v2301 = vpop.permute.xlu0 %2300
    %v2302 = vsel %vm243, %v2295, %v2297
    %v2303 = vsel %vm243, %v2299, %v2301
    %v2306 = vadd.f32 %v2278, %v2302
    %v2307 = vadd.f32 %v2279, %v2303
    %s2308 = scalar_lea.vmem [#allocation2], 640
    %v2309 = vld [vmem:[%s2308] sm:$0xff]
    %2311 = vrot.lane.b32.xlu0 %v2309, 8
    %v2312 = vpop.permute.xlu0 %2311
    %v2314 = vmul.f32 %v39, %v2312
    %v2315 = vmul.f32 %v40, %v2312
    %v2316 = vmul.f32 %v42, %v2312
    %v2317 = vmul.f32 %v43, %v2312
    %2322 = vrot.lane.b32.xlu0 %v2314, 120
    %v2323 = vpop.permute.xlu0 %2322
    %2324 = vrot.lane.b32.xlu0 %v2315, 120
    %v2325 = vpop.permute.xlu0 %2324
    %2326 = vrot.lane.b32.xlu0 %v2316, 120
    %v2327 = vpop.permute.xlu0 %2326
    %2328 = vrot.lane.b32.xlu0 %v2317, 120
    %v2329 = vpop.permute.xlu0 %2328
    %v2330 = vsel %vm272, %v2323, %v2325
    %v2331 = vsel %vm272, %v2327, %v2329
    %v2334 = vadd.f32 %v2306, %v2330
    %v2335 = vadd.f32 %v2307, %v2331
    %v2336 = vld [vmem:[%s3] sm:$0xff]
    %v2337 = vld [vmem:[%s3 + $0x8] sm:$0xff]
    %v2338 = vld [vmem:[%s3 + $0x10] sm:$0xff]
    %v2339 = vld [vmem:[%s3 + $0x18] sm:$0xff]
    %v2340 = vld [vmem:[%s3 + $0x20] sm:$0xff]
    %v2341 = vld [vmem:[%s3 + $0x28] sm:$0xff]
    %v2342 = vld [vmem:[%s3 + $0x30] sm:$0xff]
    %v2343 = vld [vmem:[%s3 + $0x38] sm:$0xff]
    %v2344 = vld [vmem:[%s3 + $0x40] sm:$0xff]
    %v2345 = vld [vmem:[%s3 + $0x48] sm:$0xff]
    %v2346 = vld [vmem:[%s3 + $0x50] sm:$0xff]
    %v2347 = vld [vmem:[%s3 + $0x58] sm:$0xff]
    %v2348 = vld [vmem:[%s3 + $0x60] sm:$0xff]
    %v2349 = vld [vmem:[%s3 + $0x68] sm:$0xff]
    %v2350 = vld [vmem:[%s3 + $0x70] sm:$0xff]
    %v2351 = vld [vmem:[%s3 + $0x78] sm:$0xff]
    %v2352 = vld [vmem:[%s2] sm:$0xff]
    %v2353 = vld [vmem:[%s2 + $0x8] sm:$0xff]
    %2354 = vmatprep.subr.mxu0 0.0
    %2355 = vmatpush1.msra.mxu0 %v2336
    %2356 = vmatprep.subr.mxu0 0.0
    %2357 = vmatpush1.msra.mxu0 %v2337
    %2358 = vmatprep.subr.mxu0 0.0
    %2359 = vmatpush1.msra.mxu0 %v2338
    %2360 = vmatprep.subr.mxu0 0.0
    %2361 = vmatpush1.msra.mxu0 %v2339
    %2362 = vmatprep.subr.mxu0 0.0
    %2363 = vmatpush1.msra.mxu0 %v2340
    %2364 = vmatprep.subr.mxu0 0.0
    %2365 = vmatpush1.msra.mxu0 %v2341
    %2366 = vmatprep.subr.mxu0 0.0
    %2367 = vmatpush1.msra.mxu0 %v2342
    %2368 = vmatprep.subr.mxu0 0.0
    %2369 = vmatpush1.msra.mxu0 %v2343
    %2370 = vmatprep.subr.mxu0 0.0
    %2371 = vmatpush1.msra.mxu0 %v2344
    %2372 = vmatprep.subr.mxu0 0.0
    %2373 = vmatpush1.msra.mxu0 %v2345
    %2374 = vmatprep.subr.mxu0 0.0
    %2375 = vmatpush1.msra.mxu0 %v2346
    %2376 = vmatprep.subr.mxu0 0.0
    %2377 = vmatpush1.msra.mxu0 %v2347
    %2378 = vmatprep.subr.mxu0 0.0
    %2379 = vmatpush1.msra.mxu0 %v2348
    %2380 = vmatprep.subr.mxu0 0.0
    %2381 = vmatpush1.msra.mxu0 %v2349
    %2382 = vmatprep.subr.mxu0 0.0
    %2383 = vmatpush1.msra.mxu0 %v2350
    %2384 = vmatprep.subr.mxu0 0.0
    %2385 = vmatpush1.msra.mxu0 %v2351
    %2386 = vmatprep.subr.mxu0 0.0
    %2387 = vmatpush1.msra.mxu0 0.0
    %2388 = vmatprep.subr.mxu0 0.0
    %2389 = vmatpush1.msra.mxu0 0.0
    %2390 = vmatprep.subr.mxu0 0.0
    %2391 = vmatpush1.msra.mxu0 0.0
    %2392 = vmatprep.subr.mxu0 0.0
    %2393 = vmatpush1.msra.mxu0 0.0
    %2394 = vmatprep.subr.mxu0 0.0
    %2395 = vmatpush1.msra.mxu0 0.0
    %2396 = vmatprep.subr.mxu0 0.0
    %2397 = vmatpush1.msra.mxu0 0.0
    %2398 = vmatprep.subr.mxu0 0.0
    %2399 = vmatpush1.msra.mxu0 0.0
    %2400 = vmatprep.subr.mxu0 0.0
    %2401 = vmatpush1.msra.mxu0 0.0
    %2402 = vmatprep.subr.mxu0 0.0
    %2403 = vmatpush1.msra.mxu0 0.0
    %2404 = vmatprep.subr.mxu0 0.0
    %2405 = vmatpush1.msra.mxu0 0.0
    %2406 = vmatprep.subr.mxu0 0.0
    %2407 = vmatpush1.msra.mxu0 0.0
    %2408 = vmatprep.subr.mxu0 0.0
    %2409 = vmatpush1.msra.mxu0 0.0
    %2410 = vmatprep.subr.mxu0 0.0
    %2411 = vmatpush1.msra.mxu0 0.0
    %2412 = vmatprep.subr.mxu0 0.0
    %2413 = vmatpush1.msra.mxu0 0.0
    %2414 = vmatprep.subr.mxu0 0.0
    %2415 = vmatpush1.msra.mxu0 0.0
    %2416 = vmatprep.subr.mxu0 0.0
    %2417 = vmatpush1.msra.mxu0 0.0
    %2418 = vmatprep.mubr.f32.mxu0 0.0
    %2419 = vmatmul.mubr.f32.gmra.mrb[0].mxu0 %v2334
    %v2420 = vpop.f32.mrb[0].mxu0
    %v2421 = vadd.f32 %v2352, %v2420
    %v2422 = vpop.f32.mrb[0].mxu0
    %2423 = vmatprep.mubr.f32.mxu0 0.0
    %2424 = vmatmul.mubr.f32.gmra.mrb[0].mxu0 %v2335
    %v2425 = vpop.f32.mrb[0].mxu0
    %v2426 = vadd.f32 %v2353, %v2425
    %v2427 = vpop.f32.mrb[0].mxu0
    %2428 = vdwg.mxu0
    %v2429 = vmul.f32 %v2421, %v2421
    %v2430 = vmul.f32 %v2426, %v2426
    %v2431 = vld [vmem:[%s4] sm:$0xff]
    %v2432 = vld [vmem:[%s4 + $0x8] sm:$0xff]
    %v2433 = vld [vmem:[%s4 + $0x10] sm:$0xff]
    %v2434 = vld [vmem:[%s4 + $0x18] sm:$0xff]
    %v2435 = vld [vmem:[%s4 + $0x20] sm:$0xff]
    %v2436 = vld [vmem:[%s4 + $0x28] sm:$0xff]
    %v2437 = vld [vmem:[%s4 + $0x30] sm:$0xff]
    %v2438 = vld [vmem:[%s4 + $0x38] sm:$0xff]
    %v2440 = vsel %vm1084, %v2429, 0
    %v2443 = vsel %vm1084, %v2430, 0
    %2445 = vmatprep.subr.mxu0 0.0
    %2446 = vmatpush1.msra.mxu0 %v2431
    %2447 = vmatprep.subr.mxu0 0.0
    %2448 = vmatpush1.msra.mxu0 %v2432
    %2449 = vmatprep.subr.mxu0 0.0
    %2450 = vmatpush1.msra.mxu0 %v2433
    %2451 = vmatprep.subr.mxu0 0.0
    %2452 = vmatpush1.msra.mxu0 %v2434
    %2453 = vmatprep.subr.mxu0 0.0
    %2454 = vmatpush1.msra.mxu0 %v2435
    %2455 = vmatprep.subr.mxu0 0.0
    %2456 = vmatpush1.msra.mxu0 %v2436
    %2457 = vmatprep.subr.mxu0 0.0
    %2458 = vmatpush1.msra.mxu0 %v2437
    %2459 = vmatprep.subr.mxu0 0.0
    %2460 = vmatpush1.msra.mxu0 %v2438
    %2461 = vmatprep.subr.mxu0 0.0
    %2462 = vmatpush1.msra.mxu0 0.0
    %2463 = vmatprep.subr.mxu0 0.0
    %2464 = vmatpush1.msra.mxu0 0.0
    %2465 = vmatprep.subr.mxu0 0.0
    %2466 = vmatpush1.msra.mxu0 0.0
    %2467 = vmatprep.subr.mxu0 0.0
    %2468 = vmatpush1.msra.mxu0 0.0
    %2469 = vmatprep.subr.mxu0 0.0
    %2470 = vmatpush1.msra.mxu0 0.0
    %2471 = vmatprep.subr.mxu0 0.0
    %2472 = vmatpush1.msra.mxu0 0.0
    %2473 = vmatprep.subr.mxu0 0.0
    %2474 = vmatpush1.msra.mxu0 0.0
    %2475 = vmatprep.subr.mxu0 0.0
    %2476 = vmatpush1.msra.mxu0 0.0
    %2477 = vmatprep.subr.mxu0 0.0
    %2478 = vmatpush1.msra.mxu0 0.0
    %2479 = vmatprep.subr.mxu0 0.0
    %2480 = vmatpush1.msra.mxu0 0.0
    %2481 = vmatprep.subr.mxu0 0.0
    %2482 = vmatpush1.msra.mxu0 0.0
    %2483 = vmatprep.subr.mxu0 0.0
    %2484 = vmatpush1.msra.mxu0 0.0
    %2485 = vmatprep.subr.mxu0 0.0
    %2486 = vmatpush1.msra.mxu0 0.0
    %2487 = vmatprep.subr.mxu0 0.0
    %2488 = vmatpush1.msra.mxu0 0.0
    %2489 = vmatprep.subr.mxu0 0.0
    %2490 = vmatpush1.msra.mxu0 0.0
    %2491 = vmatprep.subr.mxu0 0.0
    %2492 = vmatpush1.msra.mxu0 0.0
    %2493 = vmatprep.subr.mxu0 0.0
    %2494 = vmatpush1.msra.mxu0 0.0
    %2495 = vmatprep.subr.mxu0 0.0
    %2496 = vmatpush1.msra.mxu0 0.0
    %2497 = vmatprep.subr.mxu0 0.0
    %2498 = vmatpush1.msra.mxu0 0.0
    %2499 = vmatprep.subr.mxu0 0.0
    %2500 = vmatpush1.msra.mxu0 0.0
    %2501 = vmatprep.subr.mxu0 0.0
    %2502 = vmatpush1.msra.mxu0 0.0
    %2503 = vmatprep.subr.mxu0 0.0
    %2504 = vmatpush1.msra.mxu0 0.0
    %2505 = vmatprep.subr.mxu0 0.0
    %2506 = vmatpush1.msra.mxu0 0.0
    %2507 = vmatprep.subr.mxu0 0.0
    %2508 = vmatpush1.msra.mxu0 0.0
    %2509 = vmatprep.mubr.f32.mxu0 0.0
    %2510 = vmatmul.mubr.f32.gmra.mrb[0].mxu0 %v2440
    %v2511 = vpop.f32.mrb[0].mxu0
    %v2512 = vadd.f32 0.0, %v2511
    %v2513 = vpop.f32.mrb[0].mxu0
    %2514 = vmatprep.mubr.f32.mxu0 0.0
    %2515 = vmatmul.mubr.f32.gmra.mrb[0].mxu0 %v2443
    %v2516 = vpop.f32.mrb[0].mxu0
    %v2517 = vadd.f32 0.0, %v2516
    %v2518 = vpop.f32.mrb[0].mxu0
    %2519 = vdwg.mxu0
    %v2520 = vrsqrt.pop %v2512
    %v2521 = vmul.f32 %v2512, %v2520
    %vm2522 = vcmp.eq.f32.partialorder %v2512, inf
    %v2523 = vsel %vm2522, %v2512, %v2521
    %vm2524 = vcmp.eq.f32.partialorder %v2512, 0.0
    %v2525 = vand.u32 %v2512, 2147483648
    %v2526 = vsel %vm2524, %v2525, %v2523
    %v2527 = vrsqrt.pop %v2517
    %v2528 = vmul.f32 %v2517, %v2527
    %vm2529 = vcmp.eq.f32.partialorder %v2517, inf
    %v2530 = vsel %vm2529, %v2517, %v2528
    %vm2531 = vcmp.eq.f32.partialorder %v2517, 0.0
    %v2532 = vand.u32 %v2517, 2147483648
    %v2533 = vsel %vm2531, %v2532, %v2530
    %v2534 = vmul.f32 %v2526, 1.442695
    %v2535 = vpow.pop %v2534
    %v2536 = vmul.f32 %v2533, 1.442695
    %v2537 = vpow.pop %v2536
    %v2538 = vrcp.pop %v2535
    %v2539 = vmul.f32 1.0, %v2538
    %v2540 = vrcp.pop %v2537
    %v2541 = vmul.f32 1.0, %v2540
    %v2542 = vsub.f32 1.0, %v2539
    %v2543 = vsub.f32 1.0, %v2541
    %v2544 = vadd.f32 %v2526, 1e-20
    %v2545 = vadd.f32 %v2533, 1e-20
    %v2546 = vrcp.pop %v2544
    %v2547 = vmul.f32 %v2542, %v2546
    %v2548 = vrcp.pop %v2545
    %v2549 = vmul.f32 %v2543, %v2548
    %v2550 = vld [vmem:[%s5] sm:$0xff]
    %v2552 = vsel %vm2099, %v2547, 0
    %v2555 = vsel %vm2099, %v2549, 0
    %2557 = vmatprep.subr.mxu0 0.0
    %2558 = vmatpush1.msra.mxu0 %v2550
    %2559 = vmatprep.subr.mxu0 0.0
    %2560 = vmatpush1.msra.mxu0 0.0
    %2561 = vmatprep.subr.mxu0 0.0
    %2562 = vmatpush1.msra.mxu0 0.0
    %2563 = vmatprep.subr.mxu0 0.0
    %2564 = vmatpush1.msra.mxu0 0.0
    %2565 = vmatprep.subr.mxu0 0.0
    %2566 = vmatpush1.msra.mxu0 0.0
    %2567 = vmatprep.subr.mxu0 0.0
    %2568 = vmatpush1.msra.mxu0 0.0
    %2569 = vmatprep.subr.mxu0 0.0
    %2570 = vmatpush1.msra.mxu0 0.0
    %2571 = vmatprep.subr.mxu0 0.0
    %2572 = vmatpush1.msra.mxu0 0.0
    %2573 = vmatprep.subr.mxu0 0.0
    %2574 = vmatpush1.msra.mxu0 0.0
    %2575 = vmatprep.subr.mxu0 0.0
    %2576 = vmatpush1.msra.mxu0 0.0
    %2577 = vmatprep.subr.mxu0 0.0
    %2578 = vmatpush1.msra.mxu0 0.0
    %2579 = vmatprep.subr.mxu0 0.0
    %2580 = vmatpush1.msra.mxu0 0.0
    %2581 = vmatprep.subr.mxu0 0.0
    %2582 = vmatpush1.msra.mxu0 0.0
    %2583 = vmatprep.subr.mxu0 0.0
    %2584 = vmatpush1.msra.mxu0 0.0
    %2585 = vmatprep.subr.mxu0 0.0
    %2586 = vmatpush1.msra.mxu0 0.0
    %2587 = vmatprep.subr.mxu0 0.0
    %2588 = vmatpush1.msra.mxu0 0.0
    %2589 = vmatprep.subr.mxu0 0.0
    %2590 = vmatpush1.msra.mxu0 0.0
    %2591 = vmatprep.subr.mxu0 0.0
    %2592 = vmatpush1.msra.mxu0 0.0
    %2593 = vmatprep.subr.mxu0 0.0
    %2594 = vmatpush1.msra.mxu0 0.0
    %2595 = vmatprep.subr.mxu0 0.0
    %2596 = vmatpush1.msra.mxu0 0.0
    %2597 = vmatprep.subr.mxu0 0.0
    %2598 = vmatpush1.msra.mxu0 0.0
    %2599 = vmatprep.subr.mxu0 0.0
    %2600 = vmatpush1.msra.mxu0 0.0
    %2601 = vmatprep.subr.mxu0 0.0
    %2602 = vmatpush1.msra.mxu0 0.0
    %2603 = vmatprep.subr.mxu0 0.0
    %2604 = vmatpush1.msra.mxu0 0.0
    %2605 = vmatprep.subr.mxu0 0.0
    %2606 = vmatpush1.msra.mxu0 0.0
    %2607 = vmatprep.subr.mxu0 0.0
    %2608 = vmatpush1.msra.mxu0 0.0
    %2609 = vmatprep.subr.mxu0 0.0
    %2610 = vmatpush1.msra.mxu0 0.0
    %2611 = vmatprep.subr.mxu0 0.0
    %2612 = vmatpush1.msra.mxu0 0.0
    %2613 = vmatprep.subr.mxu0 0.0
    %2614 = vmatpush1.msra.mxu0 0.0
    %2615 = vmatprep.subr.mxu0 0.0
    %2616 = vmatpush1.msra.mxu0 0.0
    %2617 = vmatprep.subr.mxu0 0.0
    %2618 = vmatpush1.msra.mxu0 0.0
    %2619 = vmatprep.subr.mxu0 0.0
    %2620 = vmatpush1.msra.mxu0 0.0
    %2621 = vmatprep.mubr.f32.mxu0 0.0
    %2622 = vmatmul.mubr.f32.gmra.mrb[0].mxu0 %v2552
    %v2623 = vpop.f32.mrb[0].mxu0
    %v2624 = vadd.f32 0.0, %v2623
    %v2625 = vpop.f32.mrb[0].mxu0
    %2626 = vmatprep.mubr.f32.mxu0 0.0
    %2627 = vmatmul.mubr.f32.gmra.mrb[0].mxu0 %v2555
    %v2628 = vpop.f32.mrb[0].mxu0
    %v2629 = vadd.f32 0.0, %v2628
    %v2630 = vpop.f32.mrb[0].mxu0
    %2631 = vdwg.mxu0
    %v2632 = vmul.f32 %v2421, %v2624
    %v2633 = vmul.f32 %v2426, %v2629
    %2634 = vst.msk [vmem:[#allocation5] sm:$0xff] %vm1084, %v2632
    %2635 = vst.msk [vmem:[#allocation5 + $0x8] sm:$0xff] %vm1084, %v2633
    // Predicated region
    $region30: #{tpu_custom_call.1} parent=1 // pred_check
      _
    $region31: #{tpu_custom_call.1} parent=1 // pred_check_branch
      %2637 = sbr.rel (0) target = $region33
    $region32: #{tpu_custom_call.1} parent=1 // pred_region
      %s2639 = ssub.s32 256, 256
      %2640 = vsyncadd [#allocation4], %s2639
      %s2641 = sshll.u32 [#allocation5], 4
      %s2642 = int_to_ptr.vmem [resolvable:$true] %s2641
      %2647 = dma.vmem_to_hbm [thread:$0]  %s2642, 256, %s6, [#allocation4], 128, 128, 8
    $region33: #{tpu_custom_call.1} parent=1 // pred_fallthru
      _
    // Predicated region
    $region34: #{tpu_custom_call.1} parent=1 // pred_check
      _
    $region35: #{tpu_custom_call.1} parent=1 // pred_check_branch
      %2649 = sbr.rel (0) target = $region37
    $region36: #{tpu_custom_call.1} parent=1 // pred_region
      %2650 = dma.done [#allocation4], 256
    $region37: #{tpu_custom_call.1} parent=1 // pred_fallthru
      _
    %2651 = vsyncpa [#allocation3], 1
    %2652 = vsyncpa [#allocation4], 1

</llo_original>
